<compile_context>
chip_gen: v6e
topology: v6e:2x2x1
jax: 0.10.0
libtpu: 0.0.40
codegen_flags: <defaults>
</compile_context>

<pallas_src>
import functools

import numpy as np

import jax
import jax.numpy as jnp
from jax.experimental import pallas as pl
from jax.experimental.pallas import tpu as pltpu


# ----------------------------------------------------------------------------
# Fused dual-path ResNetBlockDec kernel (dec + edge stacked along channels)
# ----------------------------------------------------------------------------
def _dual_block_kernel(x_ref, u_ref, m_ref, w1_ref, b1_ref, w2_ref, b2_ref, *rest,
                       Wp, L, P, c1, c_out, gated, has_skip, attention):
    # rest = outputs..., scratches...
    if attention:
        of_ref, oe_ref, im2a, im2b, hpe = rest
    else:
        o_ref, im2a, im2b, hpe = rest

    M = Wp + 1                      # margin so every 3x3 tap is a static in-bounds window
    Cin = x_ref.shape[1]            # P * c_in  (both paths stacked)
    Ch = P * c1                     # conv1 output channels (both paths)
    Co = P * c_out                  # block output channels (both paths)
    mask = m_ref[...]               # (1, L) f32, 1 on the interior of the padded grid

    # ---- zero-pad (+ 2x nearest upsample when subsampling) + margins: ONE matmul with a
    #      precomputed 0/1 scatter matrix (resident input, hoisted out of the kernel). ----
    xm = jnp.dot(x_ref[0], u_ref[...], preferred_element_type=jnp.float32)   # (Cin, L + 2M) f32

    # ---- conv1 (+ fused 1x1-skip rows): im2col stack in VMEM -> ONE MXU matmul ----
    for t in range(9):
        off = (t // 3 - 1) * Wp + (t % 3 - 1)
        im2a[t * Cin:(t + 1) * Cin, :] = xm[:, M + off:M + off + L]
    pre1 = jnp.dot(w1_ref[...], im2a[...], preferred_element_type=jnp.float32) + b1_ref[...]

    h = jnp.maximum(pre1[:Ch], 0.0)                      # conv1 + ReLU        (Ch, L)
    if has_skip:
        skip = pre1[Ch:Ch + Co]                          # fused 1x1 skip conv (+ bias)
    else:
        skip = xm[:, M:M + L]                            # identity skip (c_in == c_out)

    # ---- ring-mask the hidden (this IS conv2's zero padding); stage into margined scratch ----
    hpe[:, M:M + L] = h * mask
    # hpe margins are never read for interior outputs; ring outputs are masked / cropped below.

    # ---- conv2: im2col stack -> ONE MXU matmul ----
    for t in range(9):
        off = (t // 3 - 1) * Wp + (t % 3 - 1)
        im2b[t * Ch:(t + 1) * Ch, :] = hpe[:, M + off:M + off + L]
    pre2 = jnp.dot(w2_ref[...], im2b[...], preferred_element_type=jnp.float32) + b2_ref[...]

    # ---- gated residual + ReLU (computed on the whole padded grid; ring handled later) ----
    if gated:
        out = jnp.maximum(pre2[:Co] * jax.nn.sigmoid(pre2[Co:]) + skip, 0.0)
    else:
        out = jnp.maximum(pre2 + skip, 0.0)              # (Co, L) f32

    if attention:
        # fused EdgeAttentionModule epilogue; channel layout is [dec (c_out), edge (c_out)]
        feat = out[:c_out]
        edge = out[c_out:]
        of_ref[0] = (jax.nn.sigmoid(edge) * feat + feat).astype(of_ref.dtype)
        oe_ref[0] = edge.astype(oe_ref.dtype)
    else:
        # zero the ring (NaN-safe select) so the next block's pad/upsample matmul stays exact
        o_ref[0] = jnp.where(mask > 0.0, out, 0.0).astype(o_ref.dtype)


# ----------------------------------------------------------------------------
# Constant matrices (built once at trace time, resident kernel inputs)
# ----------------------------------------------------------------------------
def _pad_matrix(H, W):
    """(H*W) dense -> margined zero-ring padded (H+2)*(W+2) flat grid, as a 0/1 scatter matrix."""
    Hp, Wp = H + 2, W + 2
    L, M = Hp * Wp, Wp + 1
    u = np.zeros((H * W, L + 2 * M), np.float32)
    for y in range(H):
        for x in range(W):
            u[y * W + x, M + (y + 1) * Wp + (x + 1)] = 1.0
    return jnp.asarray(u, jnp.bfloat16)


def _upsample_pad_matrix(H, W):
    """padded (H+2)*(W+2) grid -> margined, padded, 2x nearest-upsampled (2H+2)*(2W+2) grid."""
    Wp1 = W + 2
    Ho, Wo = 2 * H, 2 * W
    Hp2, Wp2 = Ho + 2, Wo + 2
    L2, M2 = Hp2 * Wp2, Wp2 + 1
    u = np.zeros(((H + 2) * Wp1, L2 + 2 * M2), np.float32)
    for y in range(H):
        for x in range(W):
            src = (y + 1) * Wp1 + (x + 1)
            for dy in range(2):
                for dx in range(2):
                    u[src, M2 + (2 * y + 1 + dy) * Wp2 + (2 * x + 1 + dx)] = 1.0
    return jnp.asarray(u, jnp.bfloat16)


def _interior_mask(H2, W2):
    Hp, Wp = H2 + 2, W2 + 2
    m = np.zeros((1, Hp * Wp), np.float32)
    for y in range(H2):
        for x in range(W2):
            m[0, (y + 1) * Wp + (x + 1)] = 1.0
    return jnp.asarray(m, jnp.float32)


# ----------------------------------------------------------------------------
# Weight packing (two paths block-diagonal, tap-major im2col column order)
# ----------------------------------------------------------------------------
def _pack_dual_conv3x3(wd, we, bd, be):
    """Per-path (3,3,cin,cout)+(cout,) -> block-diagonal (2*cout, 9*2*cin), path-major rows."""
    _, _, cin, cout = wd.shape
    wdt = jnp.transpose(wd, (3, 0, 1, 2)).reshape(cout, 9, cin)
    wet = jnp.transpose(we, (3, 0, 1, 2)).reshape(cout, 9, cin)
    comb = jnp.zeros((2 * cout, 9, 2 * cin), jnp.float32)
    comb = comb.at[:cout, :, :cin].set(wdt.astype(jnp.float32))
    comb = comb.at[cout:, :, cin:].set(wet.astype(jnp.float32))
    w = comb.reshape(2 * cout, 18 * cin)
    b = jnp.concatenate([bd, be]).reshape(2 * cout, 1).astype(jnp.float32)
    return w, b


def _pack_dual_skip_rows(wsd, wse, bsd, bse, cin):
    """1x1 skip conv as extra conv1 rows hitting only the center tap (t=4)."""
    cout = wsd.shape[3]
    sk = jnp.zeros((2 * cout, 9, 2 * cin), jnp.float32)
    sk = sk.at[:cout, 4, :cin].set(jnp.transpose(wsd[0, 0]).astype(jnp.float32))
    sk = sk.at[cout:, 4, cin:].set(jnp.transpose(wse[0, 0]).astype(jnp.float32))
    w = sk.reshape(2 * cout, 18 * cin)
    b = jnp.concatenate([bsd, bse]).reshape(2 * cout, 1).astype(jnp.float32)
    return w, b


# ----------------------------------------------------------------------------
# pallas_call wrapper: one fused ResNetBlockDec over both paths
# ----------------------------------------------------------------------------
def _fused_dual_block(x, u, mask, pd, pe, *, H2, W2, gated, attention, out_dtype):
    """x: (N, 2*c_in, Lin) bf16 (dense H*W for block 1, padded layout for block 2).
       Returns padded-layout output(s) on the (H2+2)*(W2+2) grid."""
    N = x.shape[0]
    Hp, Wp = H2 + 2, W2 + 2
    L, M = Hp * Wp, Wp + 1
    c_in = pd["w1"].shape[2]
    c1 = pd["w1"].shape[3]
    c2 = pd["w2"].shape[3]
    c_out = c2 // 2 if gated else c2
    has_skip = "ws" in pd
    P = 2
    assert x.shape[1] == P * c_in
    if not has_skip:
        assert c_in == c_out, "identity skip requires c_in == c_out"
    assert u.shape == (x.shape[2], L + 2 * M)

    w1, b1 = _pack_dual_conv3x3(pd["w1"], pe["w1"], pd["b1"], pe["b1"])
    if has_skip:
        wsk, bsk = _pack_dual_skip_rows(pd["ws"], pe["ws"], pd["bs"], pe["bs"], c_in)
        w1 = jnp.concatenate([w1, wsk], axis=0)
        b1 = jnp.concatenate([b1, bsk], axis=0)
    w2, b2 = _pack_dual_conv3x3(pd["w2"], pe["w2"], pd["b2"], pe["b2"])
    if gated:
        # reorder rows to [dec_a, edge_a, dec_g, edge_g] so the gate split is a single slice
        perm = np.concatenate([np.arange(c_out), c2 + np.arange(c_out),
                               c_out + np.arange(c_out), c2 + c_out + np.arange(c_out)])
        w2, b2 = w2[perm], b2[perm]

    kernel = functools.partial(_dual_block_kernel, Wp=Wp, L=L, P=P, c1=c1, c_out=c_out,
                               gated=gated, has_skip=has_skip, attention=attention)

    in_specs = [
        pl.BlockSpec((1,) + x.shape[1:], lambda n: (n, 0, 0)),
        pl.BlockSpec(u.shape, lambda n: (0, 0)),
        pl.BlockSpec(mask.shape, lambda n: (0, 0)),
        pl.BlockSpec(w1.shape, lambda n: (0, 0)),
        pl.BlockSpec(b1.shape, lambda n: (0, 0)),
        pl.BlockSpec(w2.shape, lambda n: (0, 0)),
        pl.BlockSpec(b2.shape, lambda n: (0, 0)),
    ]
    if attention:
        out_shape = (jax.ShapeDtypeStruct((N, c_out, L), out_dtype),
                     jax.ShapeDtypeStruct((N, c_out, L), out_dtype))
        out_specs = (pl.BlockSpec((1, c_out, L), lambda n: (n, 0, 0)),
                     pl.BlockSpec((1, c_out, L), lambda n: (n, 0, 0)))
    else:
        out_shape = jax.ShapeDtypeStruct((N, P * c_out, L), out_dtype)
        out_specs = pl.BlockSpec((1, P * c_out, L), lambda n: (n, 0, 0))

    return pl.pallas_call(
        kernel,
        out_shape=out_shape,
        grid=(N,),
        in_specs=in_specs,
        out_specs=out_specs,
        scratch_shapes=[
            pltpu.VMEM((9 * P * c_in, L), jnp.float32),   # im2col for conv1 (+skip)
            pltpu.VMEM((9 * P * c1, L), jnp.float32),     # im2col for conv2
            pltpu.VMEM((P * c1, L + 2 * M), jnp.float32),  # margined hidden for conv2 taps
        ],
        compiler_params=pltpu.CompilerParams(
            dimension_semantics=("parallel",),
            vmem_limit_bytes=32 * 1024 * 1024),
    )(x, u, mask, w1, b1, w2, b2)


# ----------------------------------------------------------------------------
# Parameter init (inferred ResNetBlockDec) and EdgeAttentionModule forward
# ----------------------------------------------------------------------------
def init_resnet_block_dec(key, c_in, c_out, subsample, gated):
    k1, k2, k3 = jax.random.split(key, 3)
    p = {}
    p["w1"] = jax.random.normal(k1, (3, 3, c_in, c_out), jnp.float32) / jnp.sqrt(9.0 * c_in)
    p["b1"] = jnp.zeros((c_out,), jnp.float32)
    c2 = 2 * c_out if gated else c_out
    p["w2"] = jax.random.normal(k2, (3, 3, c_out, c2), jnp.float32) / jnp.sqrt(9.0 * c_out)
    p["b2"] = jnp.zeros((c2,), jnp.float32)
    if subsample or c_in != c_out:
        p["ws"] = jax.random.normal(k3, (1, 1, c_in, c_out), jnp.float32) / jnp.sqrt(1.0 * c_in)
        p["bs"] = jnp.zeros((c_out,), jnp.float32)
    return p


def init_edge_attention(key, c_in, c_out, gated):
    ks = jax.random.split(key, 4)
    return {
        "dec0": init_resnet_block_dec(ks[0], c_in, c_in, False, gated),
        "dec1": init_resnet_block_dec(ks[1], c_in, c_out, True, gated),
        "edge0": init_resnet_block_dec(ks[2], c_in, c_in, False, gated),
        "edge1": init_resnet_block_dec(ks[3], c_in, c_out, True, gated),
    }


def edge_attention_forward(params, feat, edges, *, c_in, c_out, gated):
    """feat, edges: NCHW (N, c_in, H, W) like the PyTorch module.  Returns NCHW outputs."""
    N, _, H, W = feat.shape
    Ho, Wo = 2 * H, 2 * W
    Hp2, Wp2 = Ho + 2, Wo + 2

    # dec and edge paths stacked along the channel/sublane axis: [dec, edge]
    x = jnp.concatenate([feat, edges], axis=1).reshape(N, 2 * c_in, H * W).astype(jnp.bfloat16)

    u1 = _pad_matrix(H, W)              # dense -> margined padded (H+2)*(W+2)
    m1 = _interior_mask(H, W)
    u2 = _upsample_pad_matrix(H, W)     # padded (H+2)*(W+2) -> margined padded 2x-upsampled grid
    m2 = _interior_mask(Ho, Wo)

    # block 1: dec0 + edge0 fused (c_in -> c_in, no subsample, identity skip); padded bf16 out
    h = _fused_dual_block(x, u1, m1, params["dec0"], params["edge0"],
                          H2=H, W2=W, gated=gated, attention=False, out_dtype=jnp.bfloat16)

    # block 2: dec1 + edge1 fused (c_in -> c_out, 2x upsample, 1x1 skip) + attention epilogue
    fpad, epad = _fused_dual_block(h, u2, m2, params["dec1"], params["edge1"],
                                   H2=Ho, W2=Wo, gated=gated, attention=True,
                                   out_dtype=jnp.float32)

    # crop the padded ring exactly once, at the very end
    feat_out = fpad.reshape(N, c_out, Hp2, Wp2)[:, :, 1:-1, 1:-1]
    edges_out = epad.reshape(N, c_out, Hp2, Wp2)[:, :, 1:-1, 1:-1]
    return feat_out, edges_out


# ----------------------------------------------------------------------------
if __name__ == "__main__":
    key = jax.random.PRNGKey(0)
    kp, kf, ke = jax.random.split(key, 3)

    N, C_IN, C_OUT, H, W = 2, 4, 4, 16, 16     # output spatial 32x32
    GATED = True

    params = init_edge_attention(kp, C_IN, C_OUT, GATED)
    feat = jax.random.normal(kf, (N, C_IN, H, W), jnp.float32)     # NCHW, like PyTorch
    edges = jax.random.normal(ke, (N, C_IN, H, W), jnp.float32)    # NCHW

    fwd = jax.jit(functools.partial(edge_attention_forward,
                                    c_in=C_IN, c_out=C_OUT, gated=GATED))
    feat_out, edges_out = fwd(params, feat, edges)
    jax.block_until_ready((feat_out, edges_out))

    assert feat_out.shape == (N, C_OUT, 2 * H, 2 * W)
    assert edges_out.shape == (N, C_OUT, 2 * H, 2 * W)
    assert bool(jnp.isfinite(feat_out).all()) and bool(jnp.isfinite(edges_out).all())
    print("KERNEL_OK")
</pallas_src>

<mosaic_0001>
module attributes {stable_mosaic.version = 11 : i64} {
  func.func @_dual_block_kernel(%arg0: i32, %arg1: memref<1x8x324xbf16, #tpu.memory_space<vmem>>, %arg2: memref<324x1226xbf16, #tpu.memory_space<vmem>>, %arg3: memref<1x1156xf32, #tpu.memory_space<vmem>>, %arg4: memref<16x72xf32, #tpu.memory_space<vmem>>, %arg5: memref<16x1xf32, #tpu.memory_space<vmem>>, %arg6: memref<16x72xf32, #tpu.memory_space<vmem>>, %arg7: memref<16x1xf32, #tpu.memory_space<vmem>>, %arg8: memref<1x4x1156xf32, #tpu.memory_space<vmem>>, %arg9: memref<1x4x1156xf32, #tpu.memory_space<vmem>>, %arg10: memref<72x1156xf32, #tpu.memory_space<vmem>>, %arg11: memref<72x1156xf32, #tpu.memory_space<vmem>>, %arg12: memref<8x1226xf32, #tpu.memory_space<vmem>>) attributes {dimension_semantics = [#tpu.dimension_semantics<parallel>], iteration_bounds = array<i64: 2>, scalar_prefetch = 0 : i64, scratch_operands = 3 : i64, tpu.core_type = #tpu.core_type<tc>, window_params = [{transform_indices = @transform_0, window_bounds = array<i64: 1, 8, 324>}, {pipeline_mode = #tpu.pipeline_mode<synchronous>, transform_indices = @transform_1, window_bounds = array<i64: 324, 1226>}, {pipeline_mode = #tpu.pipeline_mode<synchronous>, transform_indices = @transform_2, window_bounds = array<i64: 1, 1156>}, {pipeline_mode = #tpu.pipeline_mode<synchronous>, transform_indices = @transform_3, window_bounds = array<i64: 16, 72>}, {pipeline_mode = #tpu.pipeline_mode<synchronous>, transform_indices = @transform_4, window_bounds = array<i64: 16, 1>}, {pipeline_mode = #tpu.pipeline_mode<synchronous>, transform_indices = @transform_5, window_bounds = array<i64: 16, 72>}, {pipeline_mode = #tpu.pipeline_mode<synchronous>, transform_indices = @transform_6, window_bounds = array<i64: 16, 1>}, {transform_indices = @transform_7, window_bounds = array<i64: 1, 4, 1156>}, {transform_indices = @transform_8, window_bounds = array<i64: 1, 4, 1156>}]} {
    %c0 = arith.constant 0 : index
    %c0_0 = arith.constant 0 : index
    %0 = vector.load %arg3[%c0, %c0_0] : memref<1x1156xf32, #tpu.memory_space<vmem>>, vector<1x1156xf32>
    %c0_1 = arith.constant 0 : index
    %c0_2 = arith.constant 0 : index
    %c0_3 = arith.constant 0 : index
    %1 = vector.load %arg1[%c0_1, %c0_2, %c0_3] : memref<1x8x324xbf16, #tpu.memory_space<vmem>>, vector<1x8x324xbf16>
    %2 = vector.shape_cast %1 : vector<1x8x324xbf16> to vector<8x324xbf16>
    %c0_4 = arith.constant 0 : index
    %c0_5 = arith.constant 0 : index
    %3 = vector.load %arg2[%c0_4, %c0_5] : memref<324x1226xbf16, #tpu.memory_space<vmem>>, vector<324x1226xbf16>
    %cst = arith.constant dense<0.000000e+00> : vector<8x1226xf32>
    %4 = tpu.matmul %2, %3, %cst {dimension_numbers = #tpu.dot_dimension_numbers<[1], [0], [0], [1], [0, 0, 1, 1], [], []>} : vector<8x324xbf16>, vector<324x1226xbf16>, vector<8x1226xf32> -> vector<8x1226xf32>
    %5 = vector.extract_strided_slice %4 {offsets = [0, 0], sizes = [8, 1156], strides = [1, 1]} : vector<8x1226xf32> to vector<8x1156xf32>
    %c0_6 = arith.constant 0 : index
    %c0_7 = arith.constant 0 : index
    %6 = vector.load %arg10[%c0_6, %c0_7] : memref<72x1156xf32, #tpu.memory_space<vmem>>, vector<8x1156xf32>
    tpu.vector_store %arg10[%c0_6, %c0_7], %5 {strides = array<i32>} : memref<72x1156xf32, #tpu.memory_space<vmem>>, vector<8x1156xf32>,
    %7 = vector.extract_strided_slice %4 {offsets = [0, 1], sizes = [8, 1156], strides = [1, 1]} : vector<8x1226xf32> to vector<8x1156xf32>
    %c8 = arith.constant 8 : index
    %c0_8 = arith.constant 0 : index
    %8 = vector.load %arg10[%c8, %c0_8] : memref<72x1156xf32, #tpu.memory_space<vmem>>, vector<8x1156xf32>
    tpu.vector_store %arg10[%c8, %c0_8], %7 {strides = array<i32>} : memref<72x1156xf32, #tpu.memory_space<vmem>>, vector<8x1156xf32>,
    %9 = vector.extract_strided_slice %4 {offsets = [0, 2], sizes = [8, 1156], strides = [1, 1]} : vector<8x1226xf32> to vector<8x1156xf32>
    %c16 = arith.constant 16 : index
    %c0_9 = arith.constant 0 : index
    %10 = vector.load %arg10[%c16, %c0_9] : memref<72x1156xf32, #tpu.memory_space<vmem>>, vector<8x1156xf32>
    tpu.vector_store %arg10[%c16, %c0_9], %9 {strides = array<i32>} : memref<72x1156xf32, #tpu.memory_space<vmem>>, vector<8x1156xf32>,
    %11 = vector.extract_strided_slice %4 {offsets = [0, 34], sizes = [8, 1156], strides = [1, 1]} : vector<8x1226xf32> to vector<8x1156xf32>
    %c24 = arith.constant 24 : index
    %c0_10 = arith.constant 0 : index
    %12 = vector.load %arg10[%c24, %c0_10] : memref<72x1156xf32, #tpu.memory_space<vmem>>, vector<8x1156xf32>
    tpu.vector_store %arg10[%c24, %c0_10], %11 {strides = array<i32>} : memref<72x1156xf32, #tpu.memory_space<vmem>>, vector<8x1156xf32>,
    %13 = vector.extract_strided_slice %4 {offsets = [0, 35], sizes = [8, 1156], strides = [1, 1]} : vector<8x1226xf32> to vector<8x1156xf32>
    %c32 = arith.constant 32 : index
    %c0_11 = arith.constant 0 : index
    %14 = vector.load %arg10[%c32, %c0_11] : memref<72x1156xf32, #tpu.memory_space<vmem>>, vector<8x1156xf32>
    tpu.vector_store %arg10[%c32, %c0_11], %13 {strides = array<i32>} : memref<72x1156xf32, #tpu.memory_space<vmem>>, vector<8x1156xf32>,
    %15 = vector.extract_strided_slice %4 {offsets = [0, 36], sizes = [8, 1156], strides = [1, 1]} : vector<8x1226xf32> to vector<8x1156xf32>
    %c40 = arith.constant 40 : index
    %c0_12 = arith.constant 0 : index
    %16 = vector.load %arg10[%c40, %c0_12] : memref<72x1156xf32, #tpu.memory_space<vmem>>, vector<8x1156xf32>
    tpu.vector_store %arg10[%c40, %c0_12], %15 {strides = array<i32>} : memref<72x1156xf32, #tpu.memory_space<vmem>>, vector<8x1156xf32>,
    %17 = vector.extract_strided_slice %4 {offsets = [0, 68], sizes = [8, 1156], strides = [1, 1]} : vector<8x1226xf32> to vector<8x1156xf32>
    %c48 = arith.constant 48 : index
    %c0_13 = arith.constant 0 : index
    %18 = vector.load %arg10[%c48, %c0_13] : memref<72x1156xf32, #tpu.memory_space<vmem>>, vector<8x1156xf32>
    tpu.vector_store %arg10[%c48, %c0_13], %17 {strides = array<i32>} : memref<72x1156xf32, #tpu.memory_space<vmem>>, vector<8x1156xf32>,
    %19 = vector.extract_strided_slice %4 {offsets = [0, 69], sizes = [8, 1156], strides = [1, 1]} : vector<8x1226xf32> to vector<8x1156xf32>
    %c56 = arith.constant 56 : index
    %c0_14 = arith.constant 0 : index
    %20 = vector.load %arg10[%c56, %c0_14] : memref<72x1156xf32, #tpu.memory_space<vmem>>, vector<8x1156xf32>
    tpu.vector_store %arg10[%c56, %c0_14], %19 {strides = array<i32>} : memref<72x1156xf32, #tpu.memory_space<vmem>>, vector<8x1156xf32>,
    %21 = vector.extract_strided_slice %4 {offsets = [0, 70], sizes = [8, 1156], strides = [1, 1]} : vector<8x1226xf32> to vector<8x1156xf32>
    %c64 = arith.constant 64 : index
    %c0_15 = arith.constant 0 : index
    %22 = vector.load %arg10[%c64, %c0_15] : memref<72x1156xf32, #tpu.memory_space<vmem>>, vector<8x1156xf32>
    tpu.vector_store %arg10[%c64, %c0_15], %21 {strides = array<i32>} : memref<72x1156xf32, #tpu.memory_space<vmem>>, vector<8x1156xf32>,
    %c0_16 = arith.constant 0 : index
    %c0_17 = arith.constant 0 : index
    %23 = vector.load %arg4[%c0_16, %c0_17] : memref<16x72xf32, #tpu.memory_space<vmem>>, vector<16x72xf32>
    %c0_18 = arith.constant 0 : index
    %c0_19 = arith.constant 0 : index
    %24 = vector.load %arg10[%c0_18, %c0_19] : memref<72x1156xf32, #tpu.memory_space<vmem>>, vector<72x1156xf32>
    %cst_20 = arith.constant dense<0.000000e+00> : vector<16x1156xf32>
    %25 = tpu.matmul %23, %24, %cst_20 {dimension_numbers = #tpu.dot_dimension_numbers<[1], [0], [0], [1], [0, 0, 1, 1], [], []>} : vector<16x72xf32>, vector<72x1156xf32>, vector<16x1156xf32> -> vector<16x1156xf32>
    %c0_21 = arith.constant 0 : index
    %c0_22 = arith.constant 0 : index
    %26 = vector.load %arg5[%c0_21, %c0_22] : memref<16x1xf32, #tpu.memory_space<vmem>>, vector<16x1xf32>
    %27 = vector.broadcast %26 : vector<16x1xf32> to vector<16x1156xf32>
    %28 = arith.addf %25, %27 : vector<16x1156xf32>
    %29 = vector.extract_strided_slice %28 {offsets = [0, 0], sizes = [8, 1156], strides = [1, 1]} : vector<16x1156xf32> to vector<8x1156xf32>
    %cst_23 = arith.constant 0.000000e+00 : f32
    %30 = vector.broadcast %cst_23 : f32 to vector<8x1156xf32>
    %31 = arith.maximumf %29, %30 : vector<8x1156xf32>
    %32 = vector.extract_strided_slice %28 {offsets = [8, 0], sizes = [8, 1156], strides = [1, 1]} : vector<16x1156xf32> to vector<8x1156xf32>
    %33 = vector.broadcast %0 : vector<1x1156xf32> to vector<8x1156xf32>
    %34 = arith.mulf %31, %33 : vector<8x1156xf32>
    %c0_24 = arith.constant 0 : index
    %c35 = arith.constant 35 : index
    %35 = vector.load %arg12[%c0_24, %c35] : memref<8x1226xf32, #tpu.memory_space<vmem>>, vector<8x1156xf32>
    tpu.vector_store %arg12[%c0_24, %c35], %34 {strides = array<i32>} : memref<8x1226xf32, #tpu.memory_space<vmem>>, vector<8x1156xf32>,
    %c0_25 = arith.constant 0 : index
    %c0_26 = arith.constant 0 : index
    %36 = vector.load %arg12[%c0_25, %c0_26] : memref<8x1226xf32, #tpu.memory_space<vmem>>, vector<8x1156xf32>
    %c0_27 = arith.constant 0 : index
    %c0_28 = arith.constant 0 : index
    %37 = vector.load %arg11[%c0_27, %c0_28] : memref<72x1156xf32, #tpu.memory_space<vmem>>, vector<8x1156xf32>
    tpu.vector_store %arg11[%c0_27, %c0_28], %36 {strides = array<i32>} : memref<72x1156xf32, #tpu.memory_space<vmem>>, vector<8x1156xf32>,
    %c0_29 = arith.constant 0 : index
    %c1 = arith.constant 1 : index
    %38 = vector.load %arg12[%c0_29, %c1] : memref<8x1226xf32, #tpu.memory_space<vmem>>, vector<8x1156xf32>
    %c8_30 = arith.constant 8 : index
    %c0_31 = arith.constant 0 : index
    %39 = vector.load %arg11[%c8_30, %c0_31] : memref<72x1156xf32, #tpu.memory_space<vmem>>, vector<8x1156xf32>
    tpu.vector_store %arg11[%c8_30, %c0_31], %38 {strides = array<i32>} : memref<72x1156xf32, #tpu.memory_space<vmem>>, vector<8x1156xf32>,
    %c0_32 = arith.constant 0 : index
    %c2 = arith.constant 2 : index
    %40 = vector.load %arg12[%c0_32, %c2] : memref<8x1226xf32, #tpu.memory_space<vmem>>, vector<8x1156xf32>
    %c16_33 = arith.constant 16 : index
    %c0_34 = arith.constant 0 : index
    %41 = vector.load %arg11[%c16_33, %c0_34] : memref<72x1156xf32, #tpu.memory_space<vmem>>, vector<8x1156xf32>
    tpu.vector_store %arg11[%c16_33, %c0_34], %40 {strides = array<i32>} : memref<72x1156xf32, #tpu.memory_space<vmem>>, vector<8x1156xf32>,
    %c0_35 = arith.constant 0 : index
    %c34 = arith.constant 34 : index
    %42 = vector.load %arg12[%c0_35, %c34] : memref<8x1226xf32, #tpu.memory_space<vmem>>, vector<8x1156xf32>
    %c24_36 = arith.constant 24 : index
    %c0_37 = arith.constant 0 : index
    %43 = vector.load %arg11[%c24_36, %c0_37] : memref<72x1156xf32, #tpu.memory_space<vmem>>, vector<8x1156xf32>
    tpu.vector_store %arg11[%c24_36, %c0_37], %42 {strides = array<i32>} : memref<72x1156xf32, #tpu.memory_space<vmem>>, vector<8x1156xf32>,
    %c0_38 = arith.constant 0 : index
    %c35_39 = arith.constant 35 : index
    %44 = vector.load %arg12[%c0_38, %c35_39] : memref<8x1226xf32, #tpu.memory_space<vmem>>, vector<8x1156xf32>
    %c32_40 = arith.constant 32 : index
    %c0_41 = arith.constant 0 : index
    %45 = vector.load %arg11[%c32_40, %c0_41] : memref<72x1156xf32, #tpu.memory_space<vmem>>, vector<8x1156xf32>
    tpu.vector_store %arg11[%c32_40, %c0_41], %44 {strides = array<i32>} : memref<72x1156xf32, #tpu.memory_space<vmem>>, vector<8x1156xf32>,
    %c0_42 = arith.constant 0 : index
    %c36 = arith.constant 36 : index
    %46 = vector.load %arg12[%c0_42, %c36] : memref<8x1226xf32, #tpu.memory_space<vmem>>, vector<8x1156xf32>
    %c40_43 = arith.constant 40 : index
    %c0_44 = arith.constant 0 : index
    %47 = vector.load %arg11[%c40_43, %c0_44] : memref<72x1156xf32, #tpu.memory_space<vmem>>, vector<8x1156xf32>
    tpu.vector_store %arg11[%c40_43, %c0_44], %46 {strides = array<i32>} : memref<72x1156xf32, #tpu.memory_space<vmem>>, vector<8x1156xf32>,
    %c0_45 = arith.constant 0 : index
    %c68 = arith.constant 68 : index
    %48 = vector.load %arg12[%c0_45, %c68] : memref<8x1226xf32, #tpu.memory_space<vmem>>, vector<8x1156xf32>
    %c48_46 = arith.constant 48 : index
    %c0_47 = arith.constant 0 : index
    %49 = vector.load %arg11[%c48_46, %c0_47] : memref<72x1156xf32, #tpu.memory_space<vmem>>, vector<8x1156xf32>
    tpu.vector_store %arg11[%c48_46, %c0_47], %48 {strides = array<i32>} : memref<72x1156xf32, #tpu.memory_space<vmem>>, vector<8x1156xf32>,
    %c0_48 = arith.constant 0 : index
    %c69 = arith.constant 69 : index
    %50 = vector.load %arg12[%c0_48, %c69] : memref<8x1226xf32, #tpu.memory_space<vmem>>, vector<8x1156xf32>
    %c56_49 = arith.constant 56 : index
    %c0_50 = arith.constant 0 : index
    %51 = vector.load %arg11[%c56_49, %c0_50] : memref<72x1156xf32, #tpu.memory_space<vmem>>, vector<8x1156xf32>
    tpu.vector_store %arg11[%c56_49, %c0_50], %50 {strides = array<i32>} : memref<72x1156xf32, #tpu.memory_space<vmem>>, vector<8x1156xf32>,
    %c0_51 = arith.constant 0 : index
    %c70 = arith.constant 70 : index
    %52 = vector.load %arg12[%c0_51, %c70] : memref<8x1226xf32, #tpu.memory_space<vmem>>, vector<8x1156xf32>
    %c64_52 = arith.constant 64 : index
    %c0_53 = arith.constant 0 : index
    %53 = vector.load %arg11[%c64_52, %c0_53] : memref<72x1156xf32, #tpu.memory_space<vmem>>, vector<8x1156xf32>
    tpu.vector_store %arg11[%c64_52, %c0_53], %52 {strides = array<i32>} : memref<72x1156xf32, #tpu.memory_space<vmem>>, vector<8x1156xf32>,
    %c0_54 = arith.constant 0 : index
    %c0_55 = arith.constant 0 : index
    %54 = vector.load %arg6[%c0_54, %c0_55] : memref<16x72xf32, #tpu.memory_space<vmem>>, vector<16x72xf32>
    %c0_56 = arith.constant 0 : index
    %c0_57 = arith.constant 0 : index
    %55 = vector.load %arg11[%c0_56, %c0_57] : memref<72x1156xf32, #tpu.memory_space<vmem>>, vector<72x1156xf32>
    %cst_58 = arith.constant dense<0.000000e+00> : vector<16x1156xf32>
    %56 = tpu.matmul %54, %55, %cst_58 {dimension_numbers = #tpu.dot_dimension_numbers<[1], [0], [0], [1], [0, 0, 1, 1], [], []>} : vector<16x72xf32>, vector<72x1156xf32>, vector<16x1156xf32> -> vector<16x1156xf32>
    %c0_59 = arith.constant 0 : index
    %c0_60 = arith.constant 0 : index
    %57 = vector.load %arg7[%c0_59, %c0_60] : memref<16x1xf32, #tpu.memory_space<vmem>>, vector<16x1xf32>
    %58 = vector.broadcast %57 : vector<16x1xf32> to vector<16x1156xf32>
    %59 = arith.addf %56, %58 : vector<16x1156xf32>
    %60 = vector.extract_strided_slice %59 {offsets = [0, 0], sizes = [8, 1156], strides = [1, 1]} : vector<16x1156xf32> to vector<8x1156xf32>
    %61 = vector.extract_strided_slice %59 {offsets = [8, 0], sizes = [8, 1156], strides = [1, 1]} : vector<16x1156xf32> to vector<8x1156xf32>
    %62 = arith.negf %61 : vector<8x1156xf32>
    %63 = math.exp %62 : vector<8x1156xf32>
    %cst_61 = arith.constant 1.000000e+00 : f32
    %64 = vector.broadcast %cst_61 : f32 to vector<8x1156xf32>
    %65 = arith.addf %64, %63 : vector<8x1156xf32>
    %66 = arith.divf %64, %65 : vector<8x1156xf32>
    %67 = arith.mulf %60, %66 : vector<8x1156xf32>
    %68 = arith.addf %67, %32 : vector<8x1156xf32>
    %cst_62 = arith.constant 0.000000e+00 : f32
    %69 = vector.broadcast %cst_62 : f32 to vector<8x1156xf32>
    %70 = arith.maximumf %68, %69 : vector<8x1156xf32>
    %71 = vector.extract_strided_slice %70 {offsets = [0, 0], sizes = [4, 1156], strides = [1, 1]} : vector<8x1156xf32> to vector<4x1156xf32>
    %72 = vector.extract_strided_slice %70 {offsets = [4, 0], sizes = [4, 1156], strides = [1, 1]} : vector<8x1156xf32> to vector<4x1156xf32>
    %73 = arith.negf %72 : vector<4x1156xf32>
    %74 = math.exp %73 : vector<4x1156xf32>
    %cst_63 = arith.constant 1.000000e+00 : f32
    %75 = vector.broadcast %cst_63 : f32 to vector<4x1156xf32>
    %76 = arith.addf %75, %74 : vector<4x1156xf32>
    %77 = arith.divf %75, %76 : vector<4x1156xf32>
    %78 = arith.mulf %77, %71 : vector<4x1156xf32>
    %79 = arith.addf %78, %71 : vector<4x1156xf32>
    %c0_64 = arith.constant 0 : index
    %c0_65 = arith.constant 0 : index
    %c0_66 = arith.constant 0 : index
    %80 = vector.load %arg8[%c0_64, %c0_65, %c0_66] : memref<1x4x1156xf32, #tpu.memory_space<vmem>>, vector<1x4x1156xf32>
    %81 = vector.shape_cast %80 : vector<1x4x1156xf32> to vector<4x1156xf32>
    %82 = vector.shape_cast %79 : vector<4x1156xf32> to vector<1x4x1156xf32>
    tpu.vector_store %arg8[%c0_64, %c0_65, %c0_66], %82 {strides = array<i32>} : memref<1x4x1156xf32, #tpu.memory_space<vmem>>, vector<1x4x1156xf32>,
    %c0_67 = arith.constant 0 : index
    %c0_68 = arith.constant 0 : index
    %c0_69 = arith.constant 0 : index
    %83 = vector.load %arg9[%c0_67, %c0_68, %c0_69] : memref<1x4x1156xf32, #tpu.memory_space<vmem>>, vector<1x4x1156xf32>
    %84 = vector.shape_cast %83 : vector<1x4x1156xf32> to vector<4x1156xf32>
    %85 = vector.shape_cast %72 : vector<4x1156xf32> to vector<1x4x1156xf32>
    tpu.vector_store %arg9[%c0_67, %c0_68, %c0_69], %85 {strides = array<i32>} : memref<1x4x1156xf32, #tpu.memory_space<vmem>>, vector<1x4x1156xf32>,
    return
  }
  func.func @transform_0(%arg0: i32) -> (i32, i32, i32) {
    %c0_i32 = arith.constant 0 : i32
    %c0_i32_0 = arith.constant 0 : i32
    %c0_i32_1 = arith.constant 0 : i32
    return %arg0, %c0_i32, %c0_i32_0 : i32, i32, i32
  }
  func.func @transform_1(%arg0: i32) -> (i32, i32) {
    %c0_i32 = arith.constant 0 : i32
    %c0_i32_0 = arith.constant 0 : i32
    %c0_i32_1 = arith.constant 0 : i32
    return %c0_i32, %c0_i32_0 : i32, i32
  }
  func.func @transform_2(%arg0: i32) -> (i32, i32) {
    %c0_i32 = arith.constant 0 : i32
    %c0_i32_0 = arith.constant 0 : i32
    %c0_i32_1 = arith.constant 0 : i32
    return %c0_i32, %c0_i32_0 : i32, i32
  }
  func.func @transform_3(%arg0: i32) -> (i32, i32) {
    %c0_i32 = arith.constant 0 : i32
    %c0_i32_0 = arith.constant 0 : i32
    %c0_i32_1 = arith.constant 0 : i32
    return %c0_i32, %c0_i32_0 : i32, i32
  }
  func.func @transform_4(%arg0: i32) -> (i32, i32) {
    %c0_i32 = arith.constant 0 : i32
    %c0_i32_0 = arith.constant 0 : i32
    %c0_i32_1 = arith.constant 0 : i32
    return %c0_i32, %c0_i32_0 : i32, i32
  }
  func.func @transform_5(%arg0: i32) -> (i32, i32) {
    %c0_i32 = arith.constant 0 : i32
    %c0_i32_0 = arith.constant 0 : i32
    %c0_i32_1 = arith.constant 0 : i32
    return %c0_i32, %c0_i32_0 : i32, i32
  }
  func.func @transform_6(%arg0: i32) -> (i32, i32) {
    %c0_i32 = arith.constant 0 : i32
    %c0_i32_0 = arith.constant 0 : i32
    %c0_i32_1 = arith.constant 0 : i32
    return %c0_i32, %c0_i32_0 : i32, i32
  }
  func.func @transform_7(%arg0: i32) -> (i32, i32, i32) {
    %c0_i32 = arith.constant 0 : i32
    %c0_i32_0 = arith.constant 0 : i32
    %c0_i32_1 = arith.constant 0 : i32
    return %arg0, %c0_i32, %c0_i32_0 : i32, i32, i32
  }
  func.func @transform_8(%arg0: i32) -> (i32, i32, i32) {
    %c0_i32 = arith.constant 0 : i32
    %c0_i32_0 = arith.constant 0 : i32
    %c0_i32_1 = arith.constant 0 : i32
    return %arg0, %c0_i32, %c0_i32_0 : i32, i32, i32
  }
}

module attributes {stable_mosaic.version = 11 : i64} {
  func.func @_dual_block_kernel(%arg0: i32, %arg1: memref<1x8x256xbf16, #tpu.memory_space<vmem>>, %arg2: memref<256x362xbf16, #tpu.memory_space<vmem>>, %arg3: memref<1x324xf32, #tpu.memory_space<vmem>>, %arg4: memref<8x72xf32, #tpu.memory_space<vmem>>, %arg5: memref<8x1xf32, #tpu.memory_space<vmem>>, %arg6: memref<16x72xf32, #tpu.memory_space<vmem>>, %arg7: memref<16x1xf32, #tpu.memory_space<vmem>>, %arg8: memref<1x8x324xbf16, #tpu.memory_space<vmem>>, %arg9: memref<72x324xf32, #tpu.memory_space<vmem>>, %arg10: memref<72x324xf32, #tpu.memory_space<vmem>>, %arg11: memref<8x362xf32, #tpu.memory_space<vmem>>) attributes {dimension_semantics = [#tpu.dimension_semantics<parallel>], iteration_bounds = array<i64: 2>, scalar_prefetch = 0 : i64, scratch_operands = 3 : i64, tpu.core_type = #tpu.core_type<tc>, window_params = [{transform_indices = @transform_0, window_bounds = array<i64: 1, 8, 256>}, {pipeline_mode = #tpu.pipeline_mode<synchronous>, transform_indices = @transform_1, window_bounds = array<i64: 256, 362>}, {pipeline_mode = #tpu.pipeline_mode<synchronous>, transform_indices = @transform_2, window_bounds = array<i64: 1, 324>}, {pipeline_mode = #tpu.pipeline_mode<synchronous>, transform_indices = @transform_3, window_bounds = array<i64: 8, 72>}, {pipeline_mode = #tpu.pipeline_mode<synchronous>, transform_indices = @transform_4, window_bounds = array<i64: 8, 1>}, {pipeline_mode = #tpu.pipeline_mode<synchronous>, transform_indices = @transform_5, window_bounds = array<i64: 16, 72>}, {pipeline_mode = #tpu.pipeline_mode<synchronous>, transform_indices = @transform_6, window_bounds = array<i64: 16, 1>}, {transform_indices = @transform_7, window_bounds = array<i64: 1, 8, 324>}]} {
    %c0 = arith.constant 0 : index
    %c0_0 = arith.constant 0 : index
    %0 = vector.load %arg3[%c0, %c0_0] : memref<1x324xf32, #tpu.memory_space<vmem>>, vector<1x324xf32>
    %c0_1 = arith.constant 0 : index
    %c0_2 = arith.constant 0 : index
    %c0_3 = arith.constant 0 : index
    %1 = vector.load %arg1[%c0_1, %c0_2, %c0_3] : memref<1x8x256xbf16, #tpu.memory_space<vmem>>, vector<1x8x256xbf16>
    %2 = vector.shape_cast %1 : vector<1x8x256xbf16> to vector<8x256xbf16>
    %c0_4 = arith.constant 0 : index
    %c0_5 = arith.constant 0 : index
    %3 = vector.load %arg2[%c0_4, %c0_5] : memref<256x362xbf16, #tpu.memory_space<vmem>>, vector<256x362xbf16>
    %cst = arith.constant dense<0.000000e+00> : vector<8x362xf32>
    %4 = tpu.matmul %2, %3, %cst {dimension_numbers = #tpu.dot_dimension_numbers<[1], [0], [0], [1], [0, 0, 1, 1], [], []>} : vector<8x256xbf16>, vector<256x362xbf16>, vector<8x362xf32> -> vector<8x362xf32>
    %5 = vector.extract_strided_slice %4 {offsets = [0, 0], sizes = [8, 324], strides = [1, 1]} : vector<8x362xf32> to vector<8x324xf32>
    %c0_6 = arith.constant 0 : index
    %c0_7 = arith.constant 0 : index
    %6 = vector.load %arg9[%c0_6, %c0_7] : memref<72x324xf32, #tpu.memory_space<vmem>>, vector<8x324xf32>
    tpu.vector_store %arg9[%c0_6, %c0_7], %5 {strides = array<i32>} : memref<72x324xf32, #tpu.memory_space<vmem>>, vector<8x324xf32>,
    %7 = vector.extract_strided_slice %4 {offsets = [0, 1], sizes = [8, 324], strides = [1, 1]} : vector<8x362xf32> to vector<8x324xf32>
    %c8 = arith.constant 8 : index
    %c0_8 = arith.constant 0 : index
    %8 = vector.load %arg9[%c8, %c0_8] : memref<72x324xf32, #tpu.memory_space<vmem>>, vector<8x324xf32>
    tpu.vector_store %arg9[%c8, %c0_8], %7 {strides = array<i32>} : memref<72x324xf32, #tpu.memory_space<vmem>>, vector<8x324xf32>,
    %9 = vector.extract_strided_slice %4 {offsets = [0, 2], sizes = [8, 324], strides = [1, 1]} : vector<8x362xf32> to vector<8x324xf32>
    %c16 = arith.constant 16 : index
    %c0_9 = arith.constant 0 : index
    %10 = vector.load %arg9[%c16, %c0_9] : memref<72x324xf32, #tpu.memory_space<vmem>>, vector<8x324xf32>
    tpu.vector_store %arg9[%c16, %c0_9], %9 {strides = array<i32>} : memref<72x324xf32, #tpu.memory_space<vmem>>, vector<8x324xf32>,
    %11 = vector.extract_strided_slice %4 {offsets = [0, 18], sizes = [8, 324], strides = [1, 1]} : vector<8x362xf32> to vector<8x324xf32>
    %c24 = arith.constant 24 : index
    %c0_10 = arith.constant 0 : index
    %12 = vector.load %arg9[%c24, %c0_10] : memref<72x324xf32, #tpu.memory_space<vmem>>, vector<8x324xf32>
    tpu.vector_store %arg9[%c24, %c0_10], %11 {strides = array<i32>} : memref<72x324xf32, #tpu.memory_space<vmem>>, vector<8x324xf32>,
    %13 = vector.extract_strided_slice %4 {offsets = [0, 19], sizes = [8, 324], strides = [1, 1]} : vector<8x362xf32> to vector<8x324xf32>
    %c32 = arith.constant 32 : index
    %c0_11 = arith.constant 0 : index
    %14 = vector.load %arg9[%c32, %c0_11] : memref<72x324xf32, #tpu.memory_space<vmem>>, vector<8x324xf32>
    tpu.vector_store %arg9[%c32, %c0_11], %13 {strides = array<i32>} : memref<72x324xf32, #tpu.memory_space<vmem>>, vector<8x324xf32>,
    %15 = vector.extract_strided_slice %4 {offsets = [0, 20], sizes = [8, 324], strides = [1, 1]} : vector<8x362xf32> to vector<8x324xf32>
    %c40 = arith.constant 40 : index
    %c0_12 = arith.constant 0 : index
    %16 = vector.load %arg9[%c40, %c0_12] : memref<72x324xf32, #tpu.memory_space<vmem>>, vector<8x324xf32>
    tpu.vector_store %arg9[%c40, %c0_12], %15 {strides = array<i32>} : memref<72x324xf32, #tpu.memory_space<vmem>>, vector<8x324xf32>,
    %17 = vector.extract_strided_slice %4 {offsets = [0, 36], sizes = [8, 324], strides = [1, 1]} : vector<8x362xf32> to vector<8x324xf32>
    %c48 = arith.constant 48 : index
    %c0_13 = arith.constant 0 : index
    %18 = vector.load %arg9[%c48, %c0_13] : memref<72x324xf32, #tpu.memory_space<vmem>>, vector<8x324xf32>
    tpu.vector_store %arg9[%c48, %c0_13], %17 {strides = array<i32>} : memref<72x324xf32, #tpu.memory_space<vmem>>, vector<8x324xf32>,
    %19 = vector.extract_strided_slice %4 {offsets = [0, 37], sizes = [8, 324], strides = [1, 1]} : vector<8x362xf32> to vector<8x324xf32>
    %c56 = arith.constant 56 : index
    %c0_14 = arith.constant 0 : index
    %20 = vector.load %arg9[%c56, %c0_14] : memref<72x324xf32, #tpu.memory_space<vmem>>, vector<8x324xf32>
    tpu.vector_store %arg9[%c56, %c0_14], %19 {strides = array<i32>} : memref<72x324xf32, #tpu.memory_space<vmem>>, vector<8x324xf32>,
    %21 = vector.extract_strided_slice %4 {offsets = [0, 38], sizes = [8, 324], strides = [1, 1]} : vector<8x362xf32> to vector<8x324xf32>
    %c64 = arith.constant 64 : index
    %c0_15 = arith.constant 0 : index
    %22 = vector.load %arg9[%c64, %c0_15] : memref<72x324xf32, #tpu.memory_space<vmem>>, vector<8x324xf32>
    tpu.vector_store %arg9[%c64, %c0_15], %21 {strides = array<i32>} : memref<72x324xf32, #tpu.memory_space<vmem>>, vector<8x324xf32>,
    %c0_16 = arith.constant 0 : index
    %c0_17 = arith.constant 0 : index
    %23 = vector.load %arg4[%c0_16, %c0_17] : memref<8x72xf32, #tpu.memory_space<vmem>>, vector<8x72xf32>
    %c0_18 = arith.constant 0 : index
    %c0_19 = arith.constant 0 : index
    %24 = vector.load %arg9[%c0_18, %c0_19] : memref<72x324xf32, #tpu.memory_space<vmem>>, vector<72x324xf32>
    %cst_20 = arith.constant dense<0.000000e+00> : vector<8x324xf32>
    %25 = tpu.matmul %23, %24, %cst_20 {dimension_numbers = #tpu.dot_dimension_numbers<[1], [0], [0], [1], [0, 0, 1, 1], [], []>} : vector<8x72xf32>, vector<72x324xf32>, vector<8x324xf32> -> vector<8x324xf32>
    %c0_21 = arith.constant 0 : index
    %c0_22 = arith.constant 0 : index
    %26 = vector.load %arg5[%c0_21, %c0_22] : memref<8x1xf32, #tpu.memory_space<vmem>>, vector<8x1xf32>
    %27 = vector.broadcast %26 : vector<8x1xf32> to vector<8x324xf32>
    %28 = arith.addf %25, %27 : vector<8x324xf32>
    %cst_23 = arith.constant 0.000000e+00 : f32
    %29 = vector.broadcast %cst_23 : f32 to vector<8x324xf32>
    %30 = arith.maximumf %28, %29 : vector<8x324xf32>
    %31 = vector.extract_strided_slice %4 {offsets = [0, 19], sizes = [8, 324], strides = [1, 1]} : vector<8x362xf32> to vector<8x324xf32>
    %32 = vector.broadcast %0 : vector<1x324xf32> to vector<8x324xf32>
    %33 = arith.mulf %30, %32 : vector<8x324xf32>
    %c0_24 = arith.constant 0 : index
    %c19 = arith.constant 19 : index
    %34 = vector.load %arg11[%c0_24, %c19] : memref<8x362xf32, #tpu.memory_space<vmem>>, vector<8x324xf32>
    tpu.vector_store %arg11[%c0_24, %c19], %33 {strides = array<i32>} : memref<8x362xf32, #tpu.memory_space<vmem>>, vector<8x324xf32>,
    %c0_25 = arith.constant 0 : index
    %c0_26 = arith.constant 0 : index
    %35 = vector.load %arg11[%c0_25, %c0_26] : memref<8x362xf32, #tpu.memory_space<vmem>>, vector<8x324xf32>
    %c0_27 = arith.constant 0 : index
    %c0_28 = arith.constant 0 : index
    %36 = vector.load %arg10[%c0_27, %c0_28] : memref<72x324xf32, #tpu.memory_space<vmem>>, vector<8x324xf32>
    tpu.vector_store %arg10[%c0_27, %c0_28], %35 {strides = array<i32>} : memref<72x324xf32, #tpu.memory_space<vmem>>, vector<8x324xf32>,
    %c0_29 = arith.constant 0 : index
    %c1 = arith.constant 1 : index
    %37 = vector.load %arg11[%c0_29, %c1] : memref<8x362xf32, #tpu.memory_space<vmem>>, vector<8x324xf32>
    %c8_30 = arith.constant 8 : index
    %c0_31 = arith.constant 0 : index
    %38 = vector.load %arg10[%c8_30, %c0_31] : memref<72x324xf32, #tpu.memory_space<vmem>>, vector<8x324xf32>
    tpu.vector_store %arg10[%c8_30, %c0_31], %37 {strides = array<i32>} : memref<72x324xf32, #tpu.memory_space<vmem>>, vector<8x324xf32>,
    %c0_32 = arith.constant 0 : index
    %c2 = arith.constant 2 : index
    %39 = vector.load %arg11[%c0_32, %c2] : memref<8x362xf32, #tpu.memory_space<vmem>>, vector<8x324xf32>
    %c16_33 = arith.constant 16 : index
    %c0_34 = arith.constant 0 : index
    %40 = vector.load %arg10[%c16_33, %c0_34] : memref<72x324xf32, #tpu.memory_space<vmem>>, vector<8x324xf32>
    tpu.vector_store %arg10[%c16_33, %c0_34], %39 {strides = array<i32>} : memref<72x324xf32, #tpu.memory_space<vmem>>, vector<8x324xf32>,
    %c0_35 = arith.constant 0 : index
    %c18 = arith.constant 18 : index
    %41 = vector.load %arg11[%c0_35, %c18] : memref<8x362xf32, #tpu.memory_space<vmem>>, vector<8x324xf32>
    %c24_36 = arith.constant 24 : index
    %c0_37 = arith.constant 0 : index
    %42 = vector.load %arg10[%c24_36, %c0_37] : memref<72x324xf32, #tpu.memory_space<vmem>>, vector<8x324xf32>
    tpu.vector_store %arg10[%c24_36, %c0_37], %41 {strides = array<i32>} : memref<72x324xf32, #tpu.memory_space<vmem>>, vector<8x324xf32>,
    %c0_38 = arith.constant 0 : index
    %c19_39 = arith.constant 19 : index
    %43 = vector.load %arg11[%c0_38, %c19_39] : memref<8x362xf32, #tpu.memory_space<vmem>>, vector<8x324xf32>
    %c32_40 = arith.constant 32 : index
    %c0_41 = arith.constant 0 : index
    %44 = vector.load %arg10[%c32_40, %c0_41] : memref<72x324xf32, #tpu.memory_space<vmem>>, vector<8x324xf32>
    tpu.vector_store %arg10[%c32_40, %c0_41], %43 {strides = array<i32>} : memref<72x324xf32, #tpu.memory_space<vmem>>, vector<8x324xf32>,
    %c0_42 = arith.constant 0 : index
    %c20 = arith.constant 20 : index
    %45 = vector.load %arg11[%c0_42, %c20] : memref<8x362xf32, #tpu.memory_space<vmem>>, vector<8x324xf32>
    %c40_43 = arith.constant 40 : index
    %c0_44 = arith.constant 0 : index
    %46 = vector.load %arg10[%c40_43, %c0_44] : memref<72x324xf32, #tpu.memory_space<vmem>>, vector<8x324xf32>
    tpu.vector_store %arg10[%c40_43, %c0_44], %45 {strides = array<i32>} : memref<72x324xf32, #tpu.memory_space<vmem>>, vector<8x324xf32>,
    %c0_45 = arith.constant 0 : index
    %c36 = arith.constant 36 : index
    %47 = vector.load %arg11[%c0_45, %c36] : memref<8x362xf32, #tpu.memory_space<vmem>>, vector<8x324xf32>
    %c48_46 = arith.constant 48 : index
    %c0_47 = arith.constant 0 : index
    %48 = vector.load %arg10[%c48_46, %c0_47] : memref<72x324xf32, #tpu.memory_space<vmem>>, vector<8x324xf32>
    tpu.vector_store %arg10[%c48_46, %c0_47], %47 {strides = array<i32>} : memref<72x324xf32, #tpu.memory_space<vmem>>, vector<8x324xf32>,
    %c0_48 = arith.constant 0 : index
    %c37 = arith.constant 37 : index
    %49 = vector.load %arg11[%c0_48, %c37] : memref<8x362xf32, #tpu.memory_space<vmem>>, vector<8x324xf32>
    %c56_49 = arith.constant 56 : index
    %c0_50 = arith.constant 0 : index
    %50 = vector.load %arg10[%c56_49, %c0_50] : memref<72x324xf32, #tpu.memory_space<vmem>>, vector<8x324xf32>
    tpu.vector_store %arg10[%c56_49, %c0_50], %49 {strides = array<i32>} : memref<72x324xf32, #tpu.memory_space<vmem>>, vector<8x324xf32>,
    %c0_51 = arith.constant 0 : index
    %c38 = arith.constant 38 : index
    %51 = vector.load %arg11[%c0_51, %c38] : memref<8x362xf32, #tpu.memory_space<vmem>>, vector<8x324xf32>
    %c64_52 = arith.constant 64 : index
    %c0_53 = arith.constant 0 : index
    %52 = vector.load %arg10[%c64_52, %c0_53] : memref<72x324xf32, #tpu.memory_space<vmem>>, vector<8x324xf32>
    tpu.vector_store %arg10[%c64_52, %c0_53], %51 {strides = array<i32>} : memref<72x324xf32, #tpu.memory_space<vmem>>, vector<8x324xf32>,
    %c0_54 = arith.constant 0 : index
    %c0_55 = arith.constant 0 : index
    %53 = vector.load %arg6[%c0_54, %c0_55] : memref<16x72xf32, #tpu.memory_space<vmem>>, vector<16x72xf32>
    %c0_56 = arith.constant 0 : index
    %c0_57 = arith.constant 0 : index
    %54 = vector.load %arg10[%c0_56, %c0_57] : memref<72x324xf32, #tpu.memory_space<vmem>>, vector<72x324xf32>
    %cst_58 = arith.constant dense<0.000000e+00> : vector<16x324xf32>
    %55 = tpu.matmul %53, %54, %cst_58 {dimension_numbers = #tpu.dot_dimension_numbers<[1], [0], [0], [1], [0, 0, 1, 1], [], []>} : vector<16x72xf32>, vector<72x324xf32>, vector<16x324xf32> -> vector<16x324xf32>
    %c0_59 = arith.constant 0 : index
    %c0_60 = arith.constant 0 : index
    %56 = vector.load %arg7[%c0_59, %c0_60] : memref<16x1xf32, #tpu.memory_space<vmem>>, vector<16x1xf32>
    %57 = vector.broadcast %56 : vector<16x1xf32> to vector<16x324xf32>
    %58 = arith.addf %55, %57 : vector<16x324xf32>
    %59 = vector.extract_strided_slice %58 {offsets = [0, 0], sizes = [8, 324], strides = [1, 1]} : vector<16x324xf32> to vector<8x324xf32>
    %60 = vector.extract_strided_slice %58 {offsets = [8, 0], sizes = [8, 324], strides = [1, 1]} : vector<16x324xf32> to vector<8x324xf32>
    %61 = arith.negf %60 : vector<8x324xf32>
    %62 = math.exp %61 : vector<8x324xf32>
    %cst_61 = arith.constant 1.000000e+00 : f32
    %63 = vector.broadcast %cst_61 : f32 to vector<8x324xf32>
    %64 = arith.addf %63, %62 : vector<8x324xf32>
    %65 = arith.divf %63, %64 : vector<8x324xf32>
    %66 = arith.mulf %59, %65 : vector<8x324xf32>
    %67 = arith.addf %66, %31 : vector<8x324xf32>
    %cst_62 = arith.constant 0.000000e+00 : f32
    %68 = vector.broadcast %cst_62 : f32 to vector<8x324xf32>
    %69 = arith.maximumf %67, %68 : vector<8x324xf32>
    %cst_63 = arith.constant 0.000000e+00 : f32
    %70 = vector.broadcast %cst_63 : f32 to vector<1x324xf32>
    %71 = arith.cmpf ogt, %0, %70 : vector<1x324xf32>
    %cst_64 = arith.constant 0.000000e+00 : f32
    %72 = vector.shape_cast %71 : vector<1x324xi1> to vector<1x324xi1>
    %73 = vector.broadcast %72 : vector<1x324xi1> to vector<8x324xi1>
    %74 = vector.broadcast %cst_64 : f32 to vector<8x324xf32>
    %75 = arith.select %73, %69, %74 : vector<8x324xi1>, vector<8x324xf32>
    %76 = arith.truncf %75 : vector<8x324xf32> to vector<8x324xbf16>
    %c0_65 = arith.constant 0 : index
    %c0_66 = arith.constant 0 : index
    %c0_67 = arith.constant 0 : index
    %77 = vector.load %arg8[%c0_65, %c0_66, %c0_67] : memref<1x8x324xbf16, #tpu.memory_space<vmem>>, vector<1x8x324xbf16>
    %78 = vector.shape_cast %77 : vector<1x8x324xbf16> to vector<8x324xbf16>
    %79 = vector.shape_cast %76 : vector<8x324xbf16> to vector<1x8x324xbf16>
    tpu.vector_store %arg8[%c0_65, %c0_66, %c0_67], %79 {strides = array<i32>} : memref<1x8x324xbf16, #tpu.memory_space<vmem>>, vector<1x8x324xbf16>,
    return
  }
  func.func @transform_0(%arg0: i32) -> (i32, i32, i32) {
    %c0_i32 = arith.constant 0 : i32
    %c0_i32_0 = arith.constant 0 : i32
    %c0_i32_1 = arith.constant 0 : i32
    return %arg0, %c0_i32, %c0_i32_0 : i32, i32, i32
  }
  func.func @transform_1(%arg0: i32) -> (i32, i32) {
    %c0_i32 = arith.constant 0 : i32
    %c0_i32_0 = arith.constant 0 : i32
    %c0_i32_1 = arith.constant 0 : i32
    return %c0_i32, %c0_i32_0 : i32, i32
  }
  func.func @transform_2(%arg0: i32) -> (i32, i32) {
    %c0_i32 = arith.constant 0 : i32
    %c0_i32_0 = arith.constant 0 : i32
    %c0_i32_1 = arith.constant 0 : i32
    return %c0_i32, %c0_i32_0 : i32, i32
  }
  func.func @transform_3(%arg0: i32) -> (i32, i32) {
    %c0_i32 = arith.constant 0 : i32
    %c0_i32_0 = arith.constant 0 : i32
    %c0_i32_1 = arith.constant 0 : i32
    return %c0_i32, %c0_i32_0 : i32, i32
  }
  func.func @transform_4(%arg0: i32) -> (i32, i32) {
    %c0_i32 = arith.constant 0 : i32
    %c0_i32_0 = arith.constant 0 : i32
    %c0_i32_1 = arith.constant 0 : i32
    return %c0_i32, %c0_i32_0 : i32, i32
  }
  func.func @transform_5(%arg0: i32) -> (i32, i32) {
    %c0_i32 = arith.constant 0 : i32
    %c0_i32_0 = arith.constant 0 : i32
    %c0_i32_1 = arith.constant 0 : i32
    return %c0_i32, %c0_i32_0 : i32, i32
  }
  func.func @transform_6(%arg0: i32) -> (i32, i32) {
    %c0_i32 = arith.constant 0 : i32
    %c0_i32_0 = arith.constant 0 : i32
    %c0_i32_1 = arith.constant 0 : i32
    return %c0_i32, %c0_i32_0 : i32, i32
  }
  func.func @transform_7(%arg0: i32) -> (i32, i32, i32) {
    %c0_i32 = arith.constant 0 : i32
    %c0_i32_0 = arith.constant 0 : i32
    %c0_i32_1 = arith.constant 0 : i32
    return %arg0, %c0_i32, %c0_i32_0 : i32, i32, i32
  }
}

</mosaic_0001>

<llo_original>
// kernel: edge_attention_forward.2
$region0: #{edge_attention_forward.2}
  #allocation0 [shape = 'u32[]', space=smem, size = 0x4, offset = 0x4, fixed_abs, tag = 'smem constant byte address 0x4 - core index']
  #allocation1 [shape = 'u32[144,128]{1,0:T(1,128)}', space=vmem, size = 0x12000, scoped, tag = 'internal scratch']
  #allocation2 [shape = 'f32[72,324]{1,0:T(8,128)}', space=vmem, size = 0x1b000, scoped, tag = 'scratch operand']
  #allocation3 [shape = 'f32[72,324]{1,0:T(8,128)}', space=vmem, size = 0x1b000, scoped, tag = 'scratch operand']
  #allocation4 [shape = 'f32[8,362]{1,0:T(8,128)}', space=vmem, size = 0x3000, scoped, tag = 'scratch operand']
  %s0 = inlined_call_operand.vmem [shape: bf16[2,8,256], index: 0, kind: input, shape index: {}]
  %s1 = inlined_call_operand.vmem [shape: bf16[256,362], index: 1, kind: input, shape index: {}]
  %s2 = inlined_call_operand.vmem [shape: f32[1,324], index: 2, kind: input, shape index: {}]
  %s3 = inlined_call_operand.vmem [shape: f32[8,72], index: 3, kind: input, shape index: {}]
  %s4 = inlined_call_operand.vmem [shape: f32[8,1], index: 4, kind: input, shape index: {}]
  %s5 = inlined_call_operand.vmem [shape: f32[16,72], index: 5, kind: input, shape index: {}]
  %s6 = inlined_call_operand.vmem [shape: f32[16,1], index: 6, kind: input, shape index: {}]
  %s7 = inlined_call_operand.vmem [shape: bf16[2,8,324], index: 7, kind: output, shape index: {}]
  %s8 = sld [smem:[#allocation0]]
  $region61: #{edge_attention_forward.2} parent=0
    _
  %s10 = ssub.s32 1, %s8
  %s11 = scalar_select 0, %s10, %s8
  loop: start=0, step=1, limit=4
  $region2: #{edge_attention_forward.2} parent=0 // loop_pre_header
    _
  $region3: #{edge_attention_forward.2} parent=0 // loop_header
    %s13 = sphi 0, %s17
    %p14 = scmp.ge.s32.totalorder %s13, 4
    %s23 = sphi 0, %s25
    %s26 = sphi 0, %s23
    %s27 = sphi 0, %s26
    %s43 = sphi 0, %s27
    %s47 = sphi 0, %s47
    %s49 = sphi 0, %s47
    %s50 = sphi 0, %s49
    %s64 = sphi 0, %s50
    %s68 = sphi 0, %s68
    %s70 = sphi 0, %s68
    %s71 = sphi 0, %s70
    %s85 = sphi 0, %s71
    %s89 = sphi 0, %s89
    %s91 = sphi 0, %s89
    %s92 = sphi 0, %s91
    %s106 = sphi 0, %s92
    %s110 = sphi 0, %s110
    %s112 = sphi 0, %s110
    %s113 = sphi 0, %s112
    %s127 = sphi 0, %s113
    %s131 = sphi 0, %s131
    %s133 = sphi 0, %s131
    %s134 = sphi 0, %s133
    %s148 = sphi 0, %s134
    %s152 = sphi 0, %s152
    %s154 = sphi 0, %s152
    %s155 = sphi 0, %s154
    %s169 = sphi 0, %s155
    %s175 = sphi 0, %s177
    %s178 = sphi 0, %s175
    %s179 = sphi 0, %s178
    %s195 = sphi 0, %s179
  $region4: #{edge_attention_forward.2} parent=0 // loop_header_branch
    %16 = sbr.rel (%p14) target = $region8
  $region5: #{edge_attention_forward.2} parent=0 // loop_body
    %s18 = ssub.s32 %s13, 1
    %s19 = ssub.s32 %s13, 2
    %s20 = sadd.s32 %s13, 1
    %s21 = ssub.s32 %s13, %s20
    %p22 = scmp.eq.s32.totalorder %s21, 0
    %s24 = sadd.s32 %s23, 1
    %s25 = scalar_select %p22, %s23, %s24
    %p28 = pneg %p22
    %p29 = scmp.eq.s32.totalorder %s13, 1
    %p30 = por %p28, %p29
    %p31 = scmp.ne.s32.totalorder %s23, %s26
    %p32 = scmp.eq.s32.totalorder %s13, 0
    %p33 = por %p31, %p32
    %p34 = scmp.ne.s32.totalorder %s23, %s26
    %p35 = scmp.eq.s32.totalorder %s18, 1
    %p36 = por %p34, %p35
    %p37 = scmp.ne.s32.totalorder %s26, %s27
    %p38 = scmp.eq.s32.totalorder %s18, 0
    %p39 = por %p37, %p38
    %p40 = scmp.ne.s32.totalorder %s26, %s27
    %p41 = scmp.eq.s32.totalorder %s19, 1
    %p42 = por %p40, %p41
    %p44 = scmp.ne.s32.totalorder %s27, %s43
    %p45 = scmp.eq.s32.totalorder %s19, 0
    %p46 = por %p44, %p45
    %s48 = sadd.s32 %s47, 1
    %p51 = scmp.eq.s32.totalorder %s13, 1
    %p52 = scmp.ne.s32.totalorder %s47, %s49
    %p53 = scmp.eq.s32.totalorder %s13, 0
    %p54 = por %p52, %p53
    %p55 = scmp.ne.s32.totalorder %s47, %s49
    %p56 = scmp.eq.s32.totalorder %s18, 1
    %p57 = por %p55, %p56
    %p58 = scmp.ne.s32.totalorder %s49, %s50
    %p59 = scmp.eq.s32.totalorder %s18, 0
    %p60 = por %p58, %p59
    %p61 = scmp.ne.s32.totalorder %s49, %s50
    %p62 = scmp.eq.s32.totalorder %s19, 1
    %p63 = por %p61, %p62
    %p65 = scmp.ne.s32.totalorder %s50, %s64
    %p66 = scmp.eq.s32.totalorder %s19, 0
    %p67 = por %p65, %p66
    %s69 = sadd.s32 %s68, 1
    %p72 = scmp.eq.s32.totalorder %s13, 1
    %p73 = scmp.ne.s32.totalorder %s68, %s70
    %p74 = scmp.eq.s32.totalorder %s13, 0
    %p75 = por %p73, %p74
    %p76 = scmp.ne.s32.totalorder %s68, %s70
    %p77 = scmp.eq.s32.totalorder %s18, 1
    %p78 = por %p76, %p77
    %p79 = scmp.ne.s32.totalorder %s70, %s71
    %p80 = scmp.eq.s32.totalorder %s18, 0
    %p81 = por %p79, %p80
    %p82 = scmp.ne.s32.totalorder %s70, %s71
    %p83 = scmp.eq.s32.totalorder %s19, 1
    %p84 = por %p82, %p83
    %p86 = scmp.ne.s32.totalorder %s71, %s85
    %p87 = scmp.eq.s32.totalorder %s19, 0
    %p88 = por %p86, %p87
    %s90 = sadd.s32 %s89, 1
    %p93 = scmp.eq.s32.totalorder %s13, 1
    %p94 = scmp.ne.s32.totalorder %s89, %s91
    %p95 = scmp.eq.s32.totalorder %s13, 0
    %p96 = por %p94, %p95
    %p97 = scmp.ne.s32.totalorder %s89, %s91
    %p98 = scmp.eq.s32.totalorder %s18, 1
    %p99 = por %p97, %p98
    %p100 = scmp.ne.s32.totalorder %s91, %s92
    %p101 = scmp.eq.s32.totalorder %s18, 0
    %p102 = por %p100, %p101
    %p103 = scmp.ne.s32.totalorder %s91, %s92
    %p104 = scmp.eq.s32.totalorder %s19, 1
    %p105 = por %p103, %p104
    %p107 = scmp.ne.s32.totalorder %s92, %s106
    %p108 = scmp.eq.s32.totalorder %s19, 0
    %p109 = por %p107, %p108
    %s111 = sadd.s32 %s110, 1
    %p114 = scmp.eq.s32.totalorder %s13, 1
    %p115 = scmp.ne.s32.totalorder %s110, %s112
    %p116 = scmp.eq.s32.totalorder %s13, 0
    %p117 = por %p115, %p116
    %p118 = scmp.ne.s32.totalorder %s110, %s112
    %p119 = scmp.eq.s32.totalorder %s18, 1
    %p120 = por %p118, %p119
    %p121 = scmp.ne.s32.totalorder %s112, %s113
    %p122 = scmp.eq.s32.totalorder %s18, 0
    %p123 = por %p121, %p122
    %p124 = scmp.ne.s32.totalorder %s112, %s113
    %p125 = scmp.eq.s32.totalorder %s19, 1
    %p126 = por %p124, %p125
    %p128 = scmp.ne.s32.totalorder %s113, %s127
    %p129 = scmp.eq.s32.totalorder %s19, 0
    %p130 = por %p128, %p129
    %s132 = sadd.s32 %s131, 1
    %p135 = scmp.eq.s32.totalorder %s13, 1
    %p136 = scmp.ne.s32.totalorder %s131, %s133
    %p137 = scmp.eq.s32.totalorder %s13, 0
    %p138 = por %p136, %p137
    %p139 = scmp.ne.s32.totalorder %s131, %s133
    %p140 = scmp.eq.s32.totalorder %s18, 1
    %p141 = por %p139, %p140
    %p142 = scmp.ne.s32.totalorder %s133, %s134
    %p143 = scmp.eq.s32.totalorder %s18, 0
    %p144 = por %p142, %p143
    %p145 = scmp.ne.s32.totalorder %s133, %s134
    %p146 = scmp.eq.s32.totalorder %s19, 1
    %p147 = por %p145, %p146
    %p149 = scmp.ne.s32.totalorder %s134, %s148
    %p150 = scmp.eq.s32.totalorder %s19, 0
    %p151 = por %p149, %p150
    %s153 = sadd.s32 %s152, 1
    %p156 = scmp.eq.s32.totalorder %s13, 1
    %p157 = scmp.ne.s32.totalorder %s152, %s154
    %p158 = scmp.eq.s32.totalorder %s13, 0
    %p159 = por %p157, %p158
    %p160 = scmp.ne.s32.totalorder %s152, %s154
    %p161 = scmp.eq.s32.totalorder %s18, 1
    %p162 = por %p160, %p161
    %p163 = scmp.ne.s32.totalorder %s154, %s155
    %p164 = scmp.eq.s32.totalorder %s18, 0
    %p165 = por %p163, %p164
    %p166 = scmp.ne.s32.totalorder %s154, %s155
    %p167 = scmp.eq.s32.totalorder %s19, 1
    %p168 = por %p166, %p167
    %p170 = scmp.ne.s32.totalorder %s155, %s169
    %p171 = scmp.eq.s32.totalorder %s19, 0
    %p172 = por %p170, %p171
    %s173 = ssub.s32 %s13, %s20
    %p174 = scmp.eq.s32.totalorder %s173, 0
    %s176 = sadd.s32 %s175, 1
    %s177 = scalar_select %p174, %s175, %s176
    %p180 = pneg %p174
    %p181 = scmp.eq.s32.totalorder %s13, 1
    %p182 = por %p180, %p181
    %p183 = scmp.ne.s32.totalorder %s175, %s178
    %p184 = scmp.eq.s32.totalorder %s13, 0
    %p185 = por %p183, %p184
    %p186 = scmp.ne.s32.totalorder %s175, %s178
    %p187 = scmp.eq.s32.totalorder %s18, 1
    %p188 = por %p186, %p187
    %p189 = scmp.ne.s32.totalorder %s178, %s179
    %p190 = scmp.eq.s32.totalorder %s18, 0
    %p191 = por %p189, %p190
    %p192 = scmp.ne.s32.totalorder %s178, %s179
    %p193 = scmp.eq.s32.totalorder %s19, 1
    %p194 = por %p192, %p193
    %p196 = scmp.ne.s32.totalorder %s179, %s195
    %p197 = scmp.eq.s32.totalorder %s19, 0
    %p198 = por %p196, %p197
    %p199 = scmp.le.s32.totalorder 1, %s13
    %p200 = scmp.lt.s32.totalorder %s13, 3
    %p201 = pnand %p199, %p200
    %p202 = pneg %p201
    // Predicated region
    $region9: #{edge_attention_forward.2} parent=5 // pred_check
      _
    $region10: #{edge_attention_forward.2} parent=5 // pred_check_branch
      %204 = sbr.rel (%p201) target = $region12
    $region11: #{edge_attention_forward.2} parent=5 // pred_region
      %s205 = ssub.s32 %s13, 1
      // Predicated region
      $region13: #{edge_attention_forward.2} parent=11 // pred_check
        %p206 = pneg %p60
      $region14: #{edge_attention_forward.2} parent=11 // pred_check_branch
        %208 = sbr.rel (%p206) target = $region16
      $region15: #{edge_attention_forward.2} parent=11 // pred_region
        _
      $region16: #{edge_attention_forward.2} parent=11 // pred_fallthru
        _
      // Predicated region
      $region17: #{edge_attention_forward.2} parent=11 // pred_check
        %p209 = pneg %p81
      $region18: #{edge_attention_forward.2} parent=11 // pred_check_branch
        %211 = sbr.rel (%p209) target = $region20
      $region19: #{edge_attention_forward.2} parent=11 // pred_region
        _
      $region20: #{edge_attention_forward.2} parent=11 // pred_fallthru
        _
      // Predicated region
      $region21: #{edge_attention_forward.2} parent=11 // pred_check
        %p212 = pneg %p102
      $region22: #{edge_attention_forward.2} parent=11 // pred_check_branch
        %214 = sbr.rel (%p212) target = $region24
      $region23: #{edge_attention_forward.2} parent=11 // pred_region
        _
      $region24: #{edge_attention_forward.2} parent=11 // pred_fallthru
        _
      // Predicated region
      $region25: #{edge_attention_forward.2} parent=11 // pred_check
        %p215 = pneg %p123
      $region26: #{edge_attention_forward.2} parent=11 // pred_check_branch
        %217 = sbr.rel (%p215) target = $region28
      $region27: #{edge_attention_forward.2} parent=11 // pred_region
        _
      $region28: #{edge_attention_forward.2} parent=11 // pred_fallthru
        _
      // Predicated region
      $region29: #{edge_attention_forward.2} parent=11 // pred_check
        %p218 = pneg %p144
      $region30: #{edge_attention_forward.2} parent=11 // pred_check_branch
        %220 = sbr.rel (%p218) target = $region32
      $region31: #{edge_attention_forward.2} parent=11 // pred_region
        _
      $region32: #{edge_attention_forward.2} parent=11 // pred_fallthru
        _
      // Predicated region
      $region33: #{edge_attention_forward.2} parent=11 // pred_check
        %p221 = pneg %p165
      $region34: #{edge_attention_forward.2} parent=11 // pred_check_branch
        %223 = sbr.rel (%p221) target = $region36
      $region35: #{edge_attention_forward.2} parent=11 // pred_region
        _
      $region36: #{edge_attention_forward.2} parent=11 // pred_fallthru
        _
    $region12: #{edge_attention_forward.2} parent=5 // pred_fallthru
      _
    %p224 = scmp.lt.s32.totalorder %s13, 2
    // Predicated region
    $region37: #{edge_attention_forward.2} parent=5 // pred_check
      %p225 = pneg %p224
    $region38: #{edge_attention_forward.2} parent=5 // pred_check_branch
      %227 = sbr.rel (%p225) target = $region40
    $region39: #{edge_attention_forward.2} parent=5 // pred_region
      // Predicated region
      $region41: #{edge_attention_forward.2} parent=39 // pred_check
        %p228 = pneg %p33
      $region42: #{edge_attention_forward.2} parent=39 // pred_check_branch
        %230 = sbr.rel (%p228) target = $region44
      $region43: #{edge_attention_forward.2} parent=39 // pred_region
        %p231 = scmp.lt.s32.totalorder %s13, 1
        %s232 = scalar_select %p231, %s13, 1
        %s233 = smul.addr %s232, 2
        %s234 = smul.addr %s233, 4
        %s235 = scalar_lea.vmem %s0, %s234
      $region44: #{edge_attention_forward.2} parent=39 // pred_fallthru
        _
    $region40: #{edge_attention_forward.2} parent=5 // pred_fallthru
      _
    %p236 = scmp.le.s32.totalorder 1, %s13
    %p237 = scmp.lt.s32.totalorder %s13, 3
    %p238 = pnand %p236, %p237
    %p239 = pneg %p238
    // Predicated region
    $region45: #{edge_attention_forward.2} parent=5 // pred_check
      _
    $region46: #{edge_attention_forward.2} parent=5 // pred_check_branch
      %241 = sbr.rel (%p238) target = $region48
    $region47: #{edge_attention_forward.2} parent=5 // pred_region
      %s242 = ssub.s32 %s13, 1
      %p243 = scmp.lt.s32.totalorder %s18, 1
      %s244 = scalar_select %p243, %s18, 1
      %s245 = smul.addr %s244, 2
      %s246 = smul.addr %s245, 4
      %s247 = scalar_lea.vmem %s0, %s246
      %p248 = pneg %p39
      %p249 = pneg %p36
      %p250 = pneg %p60
      %p251 = pneg %p57
      %p252 = pneg %p81
      %p253 = pneg %p78
      %p254 = pneg %p102
      %p255 = pneg %p99
      %p256 = pneg %p123
      %p257 = pneg %p120
      %p258 = pneg %p144
      %p259 = pneg %p141
      %p260 = pneg %p165
      %p261 = pneg %p162
      %p262 = pneg %p191
      %p263 = pneg %p188
      %p264 = scmp.lt.s32.totalorder %s18, 1
      %s265 = scalar_select %p264, %s18, 1
      %s266 = smul.addr %s265, 3
      %s267 = smul.addr %s266, 4
      %s268 = scalar_lea.vmem %s7, %s267
      %p269 = scmp.lt.s32.totalorder %s18, 1
      %s270 = scalar_select %p269, %s18, 1
      %s271 = smul.addr %s270, 2
      %s272 = smul.addr %s271, 4
      %s273 = scalar_lea.vmem %s0, %s272
      %p274 = scmp.lt.s32.totalorder %s18, 1
      %s275 = scalar_select %p274, %s18, 1
      %s276 = smul.addr %s275, 3
      %s277 = smul.addr %s276, 4
      %s278 = scalar_lea.vmem %s7, %s277
      %v280 = vld [vmem:[%s2] sm:$0x7]
      %v281 = vld [vmem:[%s273] sm:$0xff]
      %v282 = vld [vmem:[%s1] sm:$0xff]
      %v283 = vld [vmem:[%s1 + $0x8] sm:$0xf]
      %v284 = vld [vmem:[%s1 + $0xc] sm:$0xff]
      %v285 = vld [vmem:[%s1 + $0x14] sm:$0xf]
      %v286 = vld [vmem:[%s1 + $0x18] sm:$0xff]
      %v287 = vld [vmem:[%s1 + $0x20] sm:$0xf]
      %v288 = vld [vmem:[%s1 + $0x24] sm:$0xff]
      %v289 = vld [vmem:[%s1 + $0x2c] sm:$0xf]
      %v290 = vld [vmem:[%s1 + $0x30] sm:$0xff]
      %v291 = vld [vmem:[%s1 + $0x38] sm:$0xf]
      %v292 = vld [vmem:[%s1 + $0x3c] sm:$0xff]
      %v293 = vld [vmem:[%s1 + $0x44] sm:$0xf]
      %v294 = vld [vmem:[%s1 + $0x48] sm:$0xff]
      %v295 = vld [vmem:[%s1 + $0x50] sm:$0xf]
      %v296 = vld [vmem:[%s1 + $0x54] sm:$0xff]
      %v297 = vld [vmem:[%s1 + $0x5c] sm:$0xf]
      %v298 = vld [vmem:[%s1 + $0x60] sm:$0xff]
      %v299 = vld [vmem:[%s1 + $0x68] sm:$0xf]
      %v300 = vld [vmem:[%s1 + $0x6c] sm:$0xff]
      %v301 = vld [vmem:[%s1 + $0x74] sm:$0xf]
      %v302 = vld [vmem:[%s1 + $0x78] sm:$0xff]
      %v303 = vld [vmem:[%s1 + $0x80] sm:$0xf]
      %v304 = vld [vmem:[%s1 + $0x84] sm:$0xff]
      %v305 = vld [vmem:[%s1 + $0x8c] sm:$0xf]
      %v306 = vld [vmem:[%s1 + $0x90] sm:$0xff]
      %v307 = vld [vmem:[%s1 + $0x98] sm:$0xf]
      %v308 = vld [vmem:[%s1 + $0x9c] sm:$0xff]
      %v309 = vld [vmem:[%s1 + $0xa4] sm:$0xf]
      %v310 = vld [vmem:[%s1 + $0xa8] sm:$0xff]
      %v311 = vld [vmem:[%s1 + $0xb0] sm:$0xf]
      %v312 = vld [vmem:[%s1 + $0xb4] sm:$0xff]
      %v313 = vld [vmem:[%s1 + $0xbc] sm:$0xf]
      %v314 = vld [vmem:[%s1 + $0xc0] sm:$0xff]
      %v315 = vld [vmem:[%s1 + $0xc8] sm:$0xf]
      %v316 = vld [vmem:[%s1 + $0xcc] sm:$0xff]
      %v317 = vld [vmem:[%s1 + $0xd4] sm:$0xf]
      %v318 = vld [vmem:[%s1 + $0xd8] sm:$0xff]
      %v319 = vld [vmem:[%s1 + $0xe0] sm:$0xf]
      %v320 = vld [vmem:[%s1 + $0xe4] sm:$0xff]
      %v321 = vld [vmem:[%s1 + $0xec] sm:$0xf]
      %v322 = vld [vmem:[%s1 + $0xf0] sm:$0xff]
      %v323 = vld [vmem:[%s1 + $0xf8] sm:$0xf]
      %v324 = vld [vmem:[%s1 + $0xfc] sm:$0xff]
      %v325 = vld [vmem:[%s1 + $0x104] sm:$0xf]
      %v326 = vld [vmem:[%s1 + $0x108] sm:$0xff]
      %v327 = vld [vmem:[%s1 + $0x110] sm:$0xf]
      %v328 = vld [vmem:[%s1 + $0x114] sm:$0xff]
      %v329 = vld [vmem:[%s1 + $0x11c] sm:$0xf]
      %v330 = vld [vmem:[%s1 + $0x120] sm:$0xff]
      %v331 = vld [vmem:[%s1 + $0x128] sm:$0xf]
      %v332 = vld [vmem:[%s1 + $0x12c] sm:$0xff]
      %v333 = vld [vmem:[%s1 + $0x134] sm:$0xf]
      %v334 = vld [vmem:[%s1 + $0x138] sm:$0xff]
      %v335 = vld [vmem:[%s1 + $0x140] sm:$0xf]
      %v336 = vld [vmem:[%s1 + $0x144] sm:$0xff]
      %v337 = vld [vmem:[%s1 + $0x14c] sm:$0xf]
      %v338 = vld [vmem:[%s1 + $0x150] sm:$0xff]
      %v339 = vld [vmem:[%s1 + $0x158] sm:$0xf]
      %v340 = vld [vmem:[%s1 + $0x15c] sm:$0xff]
      %v341 = vld [vmem:[%s1 + $0x164] sm:$0xf]
      %v342 = vld [vmem:[%s1 + $0x168] sm:$0xff]
      %v343 = vld [vmem:[%s1 + $0x170] sm:$0xf]
      %v344 = vld [vmem:[%s1 + $0x174] sm:$0xff]
      %v345 = vld [vmem:[%s1 + $0x17c] sm:$0xf]
      %v347 = vunpack.c.l.b16 %v281
      %v348 = vunpack.c.h.b16 %v281
      %v349 = vpack.c.b16 %v347, %v347
      %v350 = vpack.c.b16 %v348, %v348
      %v417 = vunpack.c.l.b16 %v282
      %v418 = vunpack.c.h.b16 %v282
      %v419 = vunpack.c.l.b16 %v283
      %v420 = vunpack.c.l.b16 %v284
      %v421 = vunpack.c.h.b16 %v284
      %v422 = vunpack.c.l.b16 %v285
      %v423 = vunpack.c.l.b16 %v286
      %v424 = vunpack.c.h.b16 %v286
      %v425 = vunpack.c.l.b16 %v287
      %v426 = vunpack.c.l.b16 %v288
      %v427 = vunpack.c.h.b16 %v288
      %v428 = vunpack.c.l.b16 %v289
      %v429 = vunpack.c.l.b16 %v290
      %v430 = vunpack.c.h.b16 %v290
      %v431 = vunpack.c.l.b16 %v291
      %v432 = vunpack.c.l.b16 %v292
      %v433 = vunpack.c.h.b16 %v292
      %v434 = vunpack.c.l.b16 %v293
      %v435 = vunpack.c.l.b16 %v294
      %v436 = vunpack.c.h.b16 %v294
      %v437 = vunpack.c.l.b16 %v295
      %v438 = vunpack.c.l.b16 %v296
      %v439 = vunpack.c.h.b16 %v296
      %v440 = vunpack.c.l.b16 %v297
      %v441 = vunpack.c.l.b16 %v298
      %v442 = vunpack.c.h.b16 %v298
      %v443 = vunpack.c.l.b16 %v299
      %v444 = vunpack.c.l.b16 %v300
      %v445 = vunpack.c.h.b16 %v300
      %v446 = vunpack.c.l.b16 %v301
      %v447 = vunpack.c.l.b16 %v302
      %v448 = vunpack.c.h.b16 %v302
      %v449 = vunpack.c.l.b16 %v303
      %v450 = vunpack.c.l.b16 %v304
      %v451 = vunpack.c.h.b16 %v304
      %v452 = vunpack.c.l.b16 %v305
      %v453 = vunpack.c.l.b16 %v306
      %v454 = vunpack.c.h.b16 %v306
      %v455 = vunpack.c.l.b16 %v307
      %v456 = vunpack.c.l.b16 %v308
      %v457 = vunpack.c.h.b16 %v308
      %v458 = vunpack.c.l.b16 %v309
      %v459 = vunpack.c.l.b16 %v310
      %v460 = vunpack.c.h.b16 %v310
      %v461 = vunpack.c.l.b16 %v311
      %v462 = vunpack.c.l.b16 %v312
      %v463 = vunpack.c.h.b16 %v312
      %v464 = vunpack.c.l.b16 %v313
      %v465 = vunpack.c.l.b16 %v314
      %v466 = vunpack.c.h.b16 %v314
      %v467 = vunpack.c.l.b16 %v315
      %v468 = vunpack.c.l.b16 %v316
      %v469 = vunpack.c.h.b16 %v316
      %v470 = vunpack.c.l.b16 %v317
      %v471 = vunpack.c.l.b16 %v318
      %v472 = vunpack.c.h.b16 %v318
      %v473 = vunpack.c.l.b16 %v319
      %v474 = vunpack.c.l.b16 %v320
      %v475 = vunpack.c.h.b16 %v320
      %v476 = vunpack.c.l.b16 %v321
      %v477 = vunpack.c.l.b16 %v322
      %v478 = vunpack.c.h.b16 %v322
      %v479 = vunpack.c.l.b16 %v323
      %v480 = vunpack.c.l.b16 %v324
      %v481 = vunpack.c.h.b16 %v324
      %v482 = vunpack.c.l.b16 %v325
      %v483 = vunpack.c.l.b16 %v326
      %v484 = vunpack.c.h.b16 %v326
      %v485 = vunpack.c.l.b16 %v327
      %v486 = vunpack.c.l.b16 %v328
      %v487 = vunpack.c.h.b16 %v328
      %v488 = vunpack.c.l.b16 %v329
      %v489 = vunpack.c.l.b16 %v330
      %v490 = vunpack.c.h.b16 %v330
      %v491 = vunpack.c.l.b16 %v331
      %v492 = vunpack.c.l.b16 %v332
      %v493 = vunpack.c.h.b16 %v332
      %v494 = vunpack.c.l.b16 %v333
      %v495 = vunpack.c.l.b16 %v334
      %v496 = vunpack.c.h.b16 %v334
      %v497 = vunpack.c.l.b16 %v335
      %v498 = vunpack.c.l.b16 %v336
      %v499 = vunpack.c.h.b16 %v336
      %v500 = vunpack.c.l.b16 %v337
      %v501 = vunpack.c.l.b16 %v338
      %v502 = vunpack.c.h.b16 %v338
      %v503 = vunpack.c.l.b16 %v339
      %v504 = vunpack.c.l.b16 %v340
      %v505 = vunpack.c.h.b16 %v340
      %v506 = vunpack.c.l.b16 %v341
      %v507 = vunpack.c.l.b16 %v342
      %v508 = vunpack.c.h.b16 %v342
      %v509 = vunpack.c.l.b16 %v343
      %v510 = vunpack.c.l.b16 %v344
      %v511 = vunpack.c.h.b16 %v344
      %v512 = vunpack.c.l.b16 %v345
      %v513 = vpack.c.b16 %v420, %v417
      %v514 = vpack.c.b16 %v421, %v418
      %v515 = vpack.c.b16 %v422, %v419
      %v516 = vpack.c.b16 %v426, %v423
      %v517 = vpack.c.b16 %v427, %v424
      %v518 = vpack.c.b16 %v428, %v425
      %v519 = vpack.c.b16 %v432, %v429
      %v520 = vpack.c.b16 %v433, %v430
      %v521 = vpack.c.b16 %v434, %v431
      %v522 = vpack.c.b16 %v438, %v435
      %v523 = vpack.c.b16 %v439, %v436
      %v524 = vpack.c.b16 %v440, %v437
      %v525 = vpack.c.b16 %v444, %v441
      %v526 = vpack.c.b16 %v445, %v442
      %v527 = vpack.c.b16 %v446, %v443
      %v528 = vpack.c.b16 %v450, %v447
      %v529 = vpack.c.b16 %v451, %v448
      %v530 = vpack.c.b16 %v452, %v449
      %v531 = vpack.c.b16 %v456, %v453
      %v532 = vpack.c.b16 %v457, %v454
      %v533 = vpack.c.b16 %v458, %v455
      %v534 = vpack.c.b16 %v462, %v459
      %v535 = vpack.c.b16 %v463, %v460
      %v536 = vpack.c.b16 %v464, %v461
      %v537 = vpack.c.b16 %v468, %v465
      %v538 = vpack.c.b16 %v469, %v466
      %v539 = vpack.c.b16 %v470, %v467
      %v540 = vpack.c.b16 %v474, %v471
      %v541 = vpack.c.b16 %v475, %v472
      %v542 = vpack.c.b16 %v476, %v473
      %v543 = vpack.c.b16 %v480, %v477
      %v544 = vpack.c.b16 %v481, %v478
      %v545 = vpack.c.b16 %v482, %v479
      %v546 = vpack.c.b16 %v486, %v483
      %v547 = vpack.c.b16 %v487, %v484
      %v548 = vpack.c.b16 %v488, %v485
      %v549 = vpack.c.b16 %v492, %v489
      %v550 = vpack.c.b16 %v493, %v490
      %v551 = vpack.c.b16 %v494, %v491
      %v552 = vpack.c.b16 %v498, %v495
      %v553 = vpack.c.b16 %v499, %v496
      %v554 = vpack.c.b16 %v500, %v497
      %v555 = vpack.c.b16 %v504, %v501
      %v556 = vpack.c.b16 %v505, %v502
      %v557 = vpack.c.b16 %v506, %v503
      %v558 = vpack.c.b16 %v510, %v507
      %v559 = vpack.c.b16 %v511, %v508
      %v560 = vpack.c.b16 %v512, %v509
      %609 = vmatprep.subr.bf16.mxu0 %v535
      %610 = vmatpush1.bf16.msra.mxu0 %v534
      %611 = vmatprep.subr.bf16.mxu0 %v532
      %612 = vmatpush1.bf16.msra.mxu0 %v531
      %613 = vmatprep.subr.bf16.mxu0 %v529
      %614 = vmatpush1.bf16.msra.mxu0 %v528
      %615 = vmatprep.subr.bf16.mxu0 %v526
      %616 = vmatpush1.bf16.msra.mxu0 %v525
      %617 = vmatprep.subr.bf16.mxu0 %v523
      %618 = vmatpush1.bf16.msra.mxu0 %v522
      %619 = vmatprep.subr.bf16.mxu0 %v520
      %620 = vmatpush1.bf16.msra.mxu0 %v519
      %621 = vmatprep.subr.bf16.mxu0 %v517
      %622 = vmatpush1.bf16.msra.mxu0 %v516
      %623 = vmatprep.subr.bf16.mxu0 %v514
      %624 = vmatpush1.bf16.msra.mxu0 %v513
      %625 = vmatprep.subr.bf16.mxu0 %v559
      %626 = vmatpush2.bf16.msra.mxu0 %v558
      %627 = vmatprep.subr.bf16.mxu0 %v556
      %628 = vmatpush2.bf16.msra.mxu0 %v555
      %629 = vmatprep.subr.bf16.mxu0 %v553
      %630 = vmatpush2.bf16.msra.mxu0 %v552
      %631 = vmatprep.subr.bf16.mxu0 %v550
      %632 = vmatpush2.bf16.msra.mxu0 %v549
      %633 = vmatprep.subr.bf16.mxu0 %v547
      %634 = vmatpush2.bf16.msra.mxu0 %v546
      %635 = vmatprep.subr.bf16.mxu0 %v544
      %636 = vmatpush2.bf16.msra.mxu0 %v543
      %637 = vmatprep.subr.bf16.mxu0 %v541
      %638 = vmatpush2.bf16.msra.mxu0 %v540
      %639 = vmatprep.subr.bf16.mxu0 %v538
      %640 = vmatpush2.bf16.msra.mxu0 %v537
      %641 = vmatprep.mubr.bf16.mxu0 %v350
      %642 = vmatmul.mubr.bf16.gmra.mxu0 %v349
      %v643 = vpop.f32.mrf.mxu0
      %v644 = vadd.f32 0.0, %v643
      %v645 = vpop.f32.mrf.mxu0
      %v646 = vadd.f32 0.0, %v645
      %v647 = vpop.f32.mrf.mxu0
      %v648 = vpop.f32.mrf.mxu0
      %649 = vdwg.mxu0
      %650 = vmatprep.subr.bf16.mxu0 0
      %651 = vmatpush1.bf16.msra.mxu0 %v536
      %652 = vmatprep.subr.bf16.mxu0 0
      %653 = vmatpush1.bf16.msra.mxu0 %v533
      %654 = vmatprep.subr.bf16.mxu0 0
      %655 = vmatpush1.bf16.msra.mxu0 %v530
      %656 = vmatprep.subr.bf16.mxu0 0
      %657 = vmatpush1.bf16.msra.mxu0 %v527
      %658 = vmatprep.subr.bf16.mxu0 0
      %659 = vmatpush1.bf16.msra.mxu0 %v524
      %660 = vmatprep.subr.bf16.mxu0 0
      %661 = vmatpush1.bf16.msra.mxu0 %v521
      %662 = vmatprep.subr.bf16.mxu0 0
      %663 = vmatpush1.bf16.msra.mxu0 %v518
      %664 = vmatprep.subr.bf16.mxu0 0
      %665 = vmatpush1.bf16.msra.mxu0 %v515
      %666 = vmatprep.subr.bf16.mxu0 0
      %667 = vmatpush2.bf16.msra.mxu0 %v560
      %668 = vmatprep.subr.bf16.mxu0 0
      %669 = vmatpush2.bf16.msra.mxu0 %v557
      %670 = vmatprep.subr.bf16.mxu0 0
      %671 = vmatpush2.bf16.msra.mxu0 %v554
      %672 = vmatprep.subr.bf16.mxu0 0
      %673 = vmatpush2.bf16.msra.mxu0 %v551
      %674 = vmatprep.subr.bf16.mxu0 0
      %675 = vmatpush2.bf16.msra.mxu0 %v548
      %676 = vmatprep.subr.bf16.mxu0 0
      %677 = vmatpush2.bf16.msra.mxu0 %v545
      %678 = vmatprep.subr.bf16.mxu0 0
      %679 = vmatpush2.bf16.msra.mxu0 %v542
      %680 = vmatprep.subr.bf16.mxu0 0
      %681 = vmatpush2.bf16.msra.mxu0 %v539
      %682 = vmatprep.mubr.bf16.mxu0 %v350
      %683 = vmatmul.mubr.bf16.gmra.mxu0 %v349
      %v684 = vpop.f32.mrf.mxu0
      %v685 = vadd.f32 0.0, %v684
      %v686 = vpop.f32.mrf.mxu0
      %v687 = vpop.f32.mrf.mxu0
      %v688 = vpop.f32.mrf.mxu0
      %689 = vdwg.mxu0
      %690 = vst [vmem:[#allocation2] sm:$0xff] %v644
      %691 = vst [vmem:[#allocation2 + $0x8] sm:$0xff] %v646
      %vm692 = vcmask 556032
      %693 = vst.msk [vmem:[#allocation2 + $0x10] sm:$0xff] %vm692, %v685
      %697 = vrot.lane.b32.xlu0 %v644, 127
      %v698 = vpop.permute.xlu0 %697
      %699 = vrot.lane.b32.xlu0 %v646, 127
      %v700 = vpop.permute.xlu0 %699
      %701 = vrot.lane.b32.xlu0 %v685, 127
      %v702 = vpop.permute.xlu0 %701
      %vm703 = vcmask 1039360
      %v704 = vsel %vm703, %v698, %v700
      %v705 = vsel %vm703, %v700, %v702
      %709 = vst [vmem:[#allocation2 + $0x18] sm:$0xff] %v704
      %710 = vst [vmem:[#allocation2 + $0x20] sm:$0xff] %v705
      %711 = vst.msk [vmem:[#allocation2 + $0x28] sm:$0xff] %vm692, %v702
      %712 = vrot.lane.b32.xlu0 %v644, 126
      %v713 = vpop.permute.xlu0 %712
      %714 = vrot.lane.b32.xlu0 %v646, 126
      %v715 = vpop.permute.xlu0 %714
      %716 = vrot.lane.b32.xlu0 %v685, 126
      %v717 = vpop.permute.xlu0 %716
      %vm718 = vcmask 1031168
      %v719 = vsel %vm718, %v713, %v715
      %v720 = vsel %vm718, %v715, %v717
      %724 = vst [vmem:[#allocation2 + $0x30] sm:$0xff] %v719
      %725 = vst [vmem:[#allocation2 + $0x38] sm:$0xff] %v720
      %726 = vst.msk [vmem:[#allocation2 + $0x40] sm:$0xff] %vm692, %v717
      %727 = vrot.lane.b32.xlu0 %v644, 110
      %v728 = vpop.permute.xlu0 %727
      %729 = vrot.lane.b32.xlu0 %v646, 110
      %v730 = vpop.permute.xlu0 %729
      %731 = vrot.lane.b32.xlu0 %v685, 110
      %v732 = vpop.permute.xlu0 %731
      %vm733 = vcmask 900096
      %v734 = vsel %vm733, %v728, %v730
      %v735 = vsel %vm733, %v730, %v732
      %739 = vst [vmem:[#allocation2 + $0x48] sm:$0xff] %v734
      %740 = vst [vmem:[#allocation2 + $0x50] sm:$0xff] %v735
      %741 = vst.msk [vmem:[#allocation2 + $0x58] sm:$0xff] %vm692, %v732
      %742 = vrot.lane.b32.xlu0 %v644, 109
      %v743 = vpop.permute.xlu0 %742
      %744 = vrot.lane.b32.xlu0 %v646, 109
      %v745 = vpop.permute.xlu0 %744
      %746 = vrot.lane.b32.xlu0 %v685, 109
      %v747 = vpop.permute.xlu0 %746
      %vm748 = vcmask 891904
      %v749 = vsel %vm748, %v743, %v745
      %v750 = vsel %vm748, %v745, %v747
      %754 = vst [vmem:[#allocation2 + $0x60] sm:$0xff] %v749
      %755 = vst [vmem:[#allocation2 + $0x68] sm:$0xff] %v750
      %756 = vst.msk [vmem:[#allocation2 + $0x70] sm:$0xff] %vm692, %v747
      %757 = vrot.lane.b32.xlu0 %v644, 108
      %v758 = vpop.permute.xlu0 %757
      %759 = vrot.lane.b32.xlu0 %v646, 108
      %v760 = vpop.permute.xlu0 %759
      %761 = vrot.lane.b32.xlu0 %v685, 108
      %v762 = vpop.permute.xlu0 %761
      %vm763 = vcmask 883712
      %v764 = vsel %vm763, %v758, %v760
      %v765 = vsel %vm763, %v760, %v762
      %769 = vst [vmem:[#allocation2 + $0x78] sm:$0xff] %v764
      %770 = vst [vmem:[#allocation2 + $0x80] sm:$0xff] %v765
      %771 = vst.msk [vmem:[#allocation2 + $0x88] sm:$0xff] %vm692, %v762
      %772 = vrot.lane.b32.xlu0 %v644, 92
      %v773 = vpop.permute.xlu0 %772
      %774 = vrot.lane.b32.xlu0 %v646, 92
      %v775 = vpop.permute.xlu0 %774
      %776 = vrot.lane.b32.xlu0 %v685, 92
      %v777 = vpop.permute.xlu0 %776
      %vm778 = vcmask 752640
      %v779 = vsel %vm778, %v773, %v775
      %v780 = vsel %vm778, %v775, %v777
      %784 = vst [vmem:[#allocation2 + $0x90] sm:$0xff] %v779
      %785 = vst [vmem:[#allocation2 + $0x98] sm:$0xff] %v780
      %786 = vst.msk [vmem:[#allocation2 + $0xa0] sm:$0xff] %vm692, %v777
      %787 = vrot.lane.b32.xlu0 %v644, 91
      %v788 = vpop.permute.xlu0 %787
      %789 = vrot.lane.b32.xlu0 %v646, 91
      %v790 = vpop.permute.xlu0 %789
      %791 = vrot.lane.b32.xlu0 %v685, 91
      %v792 = vpop.permute.xlu0 %791
      %vm793 = vcmask 744448
      %v794 = vsel %vm793, %v788, %v790
      %v795 = vsel %vm793, %v790, %v792
      %799 = vst [vmem:[#allocation2 + $0xa8] sm:$0xff] %v794
      %800 = vst [vmem:[#allocation2 + $0xb0] sm:$0xff] %v795
      %801 = vst.msk [vmem:[#allocation2 + $0xb8] sm:$0xff] %vm692, %v792
      %802 = vrot.lane.b32.xlu0 %v644, 90
      %v803 = vpop.permute.xlu0 %802
      %804 = vrot.lane.b32.xlu0 %v646, 90
      %v805 = vpop.permute.xlu0 %804
      %806 = vrot.lane.b32.xlu0 %v685, 90
      %v807 = vpop.permute.xlu0 %806
      %vm808 = vcmask 736256
      %v809 = vsel %vm808, %v803, %v805
      %v810 = vsel %vm808, %v805, %v807
      %814 = vst [vmem:[#allocation2 + $0xc0] sm:$0xff] %v809
      %815 = vst [vmem:[#allocation2 + $0xc8] sm:$0xff] %v810
      %816 = vst.msk [vmem:[#allocation2 + $0xd0] sm:$0xff] %vm692, %v807
      %v817 = vld [vmem:[%s3] sm:$0xff]
      %v818 = vld [vmem:[#allocation2] sm:$0xff]
      %v819 = vld [vmem:[#allocation2 + $0x8] sm:$0xff]
      %v820 = vld [vmem:[#allocation2 + $0x10] sm:$0xff]
      %v821 = vld [vmem:[#allocation2 + $0x18] sm:$0xff]
      %v822 = vld [vmem:[#allocation2 + $0x20] sm:$0xff]
      %v823 = vld [vmem:[#allocation2 + $0x28] sm:$0xff]
      %v824 = vld [vmem:[#allocation2 + $0x30] sm:$0xff]
      %v825 = vld [vmem:[#allocation2 + $0x38] sm:$0xff]
      %v826 = vld [vmem:[#allocation2 + $0x40] sm:$0xff]
      %v827 = vld [vmem:[#allocation2 + $0x48] sm:$0xff]
      %v828 = vld [vmem:[#allocation2 + $0x50] sm:$0xff]
      %v829 = vld [vmem:[#allocation2 + $0x58] sm:$0xff]
      %v830 = vld [vmem:[#allocation2 + $0x60] sm:$0xff]
      %v831 = vld [vmem:[#allocation2 + $0x68] sm:$0xff]
      %v832 = vld [vmem:[#allocation2 + $0x70] sm:$0xff]
      %v833 = vld [vmem:[#allocation2 + $0x78] sm:$0xff]
      %v834 = vld [vmem:[#allocation2 + $0x80] sm:$0xff]
      %v835 = vld [vmem:[#allocation2 + $0x88] sm:$0xff]
      %v836 = vld [vmem:[#allocation2 + $0x90] sm:$0xff]
      %v837 = vld [vmem:[#allocation2 + $0x98] sm:$0xff]
      %v838 = vld [vmem:[#allocation2 + $0xa0] sm:$0xff]
      %v839 = vld [vmem:[#allocation2 + $0xa8] sm:$0xff]
      %v840 = vld [vmem:[#allocation2 + $0xb0] sm:$0xff]
      %v841 = vld [vmem:[#allocation2 + $0xb8] sm:$0xff]
      %v842 = vld [vmem:[#allocation2 + $0xc0] sm:$0xff]
      %v843 = vld [vmem:[#allocation2 + $0xc8] sm:$0xff]
      %v844 = vld [vmem:[#allocation2 + $0xd0] sm:$0xff]
      %v845 = vld [vmem:[%s4] sm:$0xff]
      %847 = vset.pattern.permute.xlu0 0
      %848 = vperm.xlu0 %847, %v845
      %v849 = vpop.permute.xlu0 %848
      %vm851 = vcmask 588800
      %v853 = vsel %vm851, %v817, 0
      %855 = vmatprep.subr.mxu0 0.0
      %856 = vmatpush1.msra.mxu0 0.0
      %857 = vmatprep.subr.mxu0 0.0
      %858 = vmatpush1.msra.mxu0 0.0
      %859 = vmatprep.subr.mxu0 0.0
      %860 = vmatpush1.msra.mxu0 0.0
      %861 = vmatprep.subr.mxu0 0.0
      %862 = vmatpush1.msra.mxu0 0.0
      %863 = vmatprep.subr.mxu0 0.0
      %864 = vmatpush1.msra.mxu0 0.0
      %865 = vmatprep.subr.mxu0 0.0
      %866 = vmatpush1.msra.mxu0 0.0
      %867 = vmatprep.subr.mxu0 0.0
      %868 = vmatpush1.msra.mxu0 0.0
      %869 = vmatprep.subr.mxu0 %v843
      %870 = vmatpush1.msra.mxu0 %v842
      %871 = vmatprep.subr.mxu0 %v840
      %872 = vmatpush1.msra.mxu0 %v839
      %873 = vmatprep.subr.mxu0 %v837
      %874 = vmatpush1.msra.mxu0 %v836
      %875 = vmatprep.subr.mxu0 %v834
      %876 = vmatpush1.msra.mxu0 %v833
      %877 = vmatprep.subr.mxu0 %v831
      %878 = vmatpush1.msra.mxu0 %v830
      %879 = vmatprep.subr.mxu0 %v828
      %880 = vmatpush1.msra.mxu0 %v827
      %881 = vmatprep.subr.mxu0 %v825
      %882 = vmatpush1.msra.mxu0 %v824
      %883 = vmatprep.subr.mxu0 %v822
      %884 = vmatpush1.msra.mxu0 %v821
      %885 = vmatprep.subr.mxu0 %v819
      %886 = vmatpush1.msra.mxu0 %v818
      %887 = vmatprep.subr.mxu0 0.0
      %888 = vmatpush2.msra.mxu0 0.0
      %889 = vmatprep.subr.mxu0 0.0
      %890 = vmatpush2.msra.mxu0 0.0
      %891 = vmatprep.subr.mxu0 0.0
      %892 = vmatpush2.msra.mxu0 0.0
      %893 = vmatprep.subr.mxu0 0.0
      %894 = vmatpush2.msra.mxu0 0.0
      %895 = vmatprep.subr.mxu0 0.0
      %896 = vmatpush2.msra.mxu0 0.0
      %897 = vmatprep.subr.mxu0 0.0
      %898 = vmatpush2.msra.mxu0 0.0
      %899 = vmatprep.subr.mxu0 0.0
      %900 = vmatpush2.msra.mxu0 0.0
      %901 = vmatprep.subr.mxu0 0.0
      %902 = vmatpush2.msra.mxu0 0.0
      %903 = vmatprep.subr.mxu0 0.0
      %904 = vmatpush2.msra.mxu0 0.0
      %905 = vmatprep.subr.mxu0 0.0
      %906 = vmatpush2.msra.mxu0 0.0
      %907 = vmatprep.subr.mxu0 0.0
      %908 = vmatpush2.msra.mxu0 0.0
      %909 = vmatprep.subr.mxu0 0.0
      %910 = vmatpush2.msra.mxu0 0.0
      %911 = vmatprep.subr.mxu0 0.0
      %912 = vmatpush2.msra.mxu0 0.0
      %913 = vmatprep.subr.mxu0 0.0
      %914 = vmatpush2.msra.mxu0 0.0
      %915 = vmatprep.subr.mxu0 0.0
      %916 = vmatpush2.msra.mxu0 0.0
      %917 = vmatprep.subr.mxu0 0.0
      %918 = vmatpush2.msra.mxu0 0.0
      %919 = vmatprep.mubr.f32.mxu0 0.0
      %920 = vmatmul.mubr.f32.gmra.mxu0 %v853
      %v921 = vpop.f32.mrf.mxu0
      %v922 = vadd.f32 %v849, %v921
      %v923 = vpop.f32.mrf.mxu0
      %v924 = vadd.f32 %v849, %v923
      %925 = vdwg.mxu0
      %926 = vmatprep.subr.mxu0 0.0
      %927 = vmatpush1.msra.mxu0 0.0
      %928 = vmatprep.subr.mxu0 0.0
      %929 = vmatpush1.msra.mxu0 0.0
      %930 = vmatprep.subr.mxu0 0.0
      %931 = vmatpush1.msra.mxu0 0.0
      %932 = vmatprep.subr.mxu0 0.0
      %933 = vmatpush1.msra.mxu0 0.0
      %934 = vmatprep.subr.mxu0 0.0
      %935 = vmatpush1.msra.mxu0 0.0
      %936 = vmatprep.subr.mxu0 0.0
      %937 = vmatpush1.msra.mxu0 0.0
      %938 = vmatprep.subr.mxu0 0.0
      %939 = vmatpush1.msra.mxu0 0.0
      %940 = vmatprep.subr.mxu0 0.0
      %941 = vmatpush1.msra.mxu0 %v844
      %942 = vmatprep.subr.mxu0 0.0
      %943 = vmatpush1.msra.mxu0 %v841
      %944 = vmatprep.subr.mxu0 0.0
      %945 = vmatpush1.msra.mxu0 %v838
      %946 = vmatprep.subr.mxu0 0.0
      %947 = vmatpush1.msra.mxu0 %v835
      %948 = vmatprep.subr.mxu0 0.0
      %949 = vmatpush1.msra.mxu0 %v832
      %950 = vmatprep.subr.mxu0 0.0
      %951 = vmatpush1.msra.mxu0 %v829
      %952 = vmatprep.subr.mxu0 0.0
      %953 = vmatpush1.msra.mxu0 %v826
      %954 = vmatprep.subr.mxu0 0.0
      %955 = vmatpush1.msra.mxu0 %v823
      %956 = vmatprep.subr.mxu0 0.0
      %957 = vmatpush1.msra.mxu0 %v820
      %958 = vmatprep.subr.mxu0 0.0
      %959 = vmatpush2.msra.mxu0 0.0
      %960 = vmatprep.subr.mxu0 0.0
      %961 = vmatpush2.msra.mxu0 0.0
      %962 = vmatprep.subr.mxu0 0.0
      %963 = vmatpush2.msra.mxu0 0.0
      %964 = vmatprep.subr.mxu0 0.0
      %965 = vmatpush2.msra.mxu0 0.0
      %966 = vmatprep.subr.mxu0 0.0
      %967 = vmatpush2.msra.mxu0 0.0
      %968 = vmatprep.subr.mxu0 0.0
      %969 = vmatpush2.msra.mxu0 0.0
      %970 = vmatprep.subr.mxu0 0.0
      %971 = vmatpush2.msra.mxu0 0.0
      %972 = vmatprep.subr.mxu0 0.0
      %973 = vmatpush2.msra.mxu0 0.0
      %974 = vmatprep.subr.mxu0 0.0
      %975 = vmatpush2.msra.mxu0 0.0
      %976 = vmatprep.subr.mxu0 0.0
      %977 = vmatpush2.msra.mxu0 0.0
      %978 = vmatprep.subr.mxu0 0.0
      %979 = vmatpush2.msra.mxu0 0.0
      %980 = vmatprep.subr.mxu0 0.0
      %981 = vmatpush2.msra.mxu0 0.0
      %982 = vmatprep.subr.mxu0 0.0
      %983 = vmatpush2.msra.mxu0 0.0
      %984 = vmatprep.subr.mxu0 0.0
      %985 = vmatpush2.msra.mxu0 0.0
      %986 = vmatprep.subr.mxu0 0.0
      %987 = vmatpush2.msra.mxu0 0.0
      %988 = vmatprep.subr.mxu0 0.0
      %989 = vmatpush2.msra.mxu0 0.0
      %990 = vmatprep.mubr.f32.mxu0 0.0
      %991 = vmatmul.mubr.f32.gmra.mxu0 %v853
      %v992 = vpop.f32.mrf.mxu0
      %v993 = vadd.f32 %v849, %v992
      %v994 = vpop.f32.mrf.mxu0
      %995 = vdwg.mxu0
      %v996 = vmax.f32 %v922, 0.0
      %v997 = vmax.f32 %v924, 0.0
      %v998 = vmax.f32 %v993, 0.0
      %v1000 = vlaneseq
      %v1001 = vshrl.u32 %v1000, 7
      %v1002 = vsub.s32 0, %v1001
      %v1003 = vrot.slane %v280, %v1002
      %v1004 = vlaneseq
      %v1005 = vshrl.u32 %v1004, 7
      %v1006 = vsub.s32 1, %v1005
      %v1007 = vrot.slane %v280, %v1006
      %v1008 = vlaneseq
      %v1009 = vshrl.u32 %v1008, 7
      %v1010 = vsub.s32 2, %v1009
      %v1011 = vrot.slane %v280, %v1010
      %v1015 = vmul.f32 %v996, %v1003
      %v1016 = vmul.f32 %v997, %v1007
      %v1017 = vmul.f32 %v998, %v1011
      %1021 = vrot.lane.b32.xlu0 %v1015, 19
      %v1022 = vpop.permute.xlu0 %1021
      %1023 = vrot.lane.b32.xlu0 %v1016, 19
      %v1024 = vpop.permute.xlu0 %1023
      %1025 = vrot.lane.b32.xlu0 %v1017, 19
      %v1026 = vpop.permute.xlu0 %1025
      %vm1027 = vcmask 154624
      %v1028 = vsel %vm1027, %v1022, %v1024
      %v1029 = vsel %vm1027, %v1024, %v1026
      %vm1033 = vcmask 1047704
      %1034 = vst.msk [vmem:[#allocation4] sm:$0xff] %vm1033, %v1022
      %1035 = vst [vmem:[#allocation4 + $0x8] sm:$0xff] %v1028
      %vm1036 = vcmask 711680
      %1037 = vst.msk [vmem:[#allocation4 + $0x10] sm:$0xff] %vm1036, %v1029
      %v1038 = vld [vmem:[#allocation4] sm:$0xff]
      %v1039 = vld [vmem:[#allocation4 + $0x8] sm:$0xff]
      %v1040 = vld [vmem:[#allocation4 + $0x10] sm:$0xff]
      %1041 = vst [vmem:[#allocation3] sm:$0xff] %v1038
      %1042 = vst [vmem:[#allocation3 + $0x8] sm:$0xff] %v1039
      %1043 = vst.msk [vmem:[#allocation3 + $0x10] sm:$0xff] %vm692, %v1040
      %v1044 = vld [vmem:[#allocation4] sm:$0xff]
      %v1045 = vld [vmem:[#allocation4 + $0x8] sm:$0xff]
      %v1046 = vld [vmem:[#allocation4 + $0x10] sm:$0xff]
      %1050 = vrot.lane.b32.xlu0 %v1044, 127
      %v1051 = vpop.permute.xlu0 %1050
      %1052 = vrot.lane.b32.xlu0 %v1045, 127
      %v1053 = vpop.permute.xlu0 %1052
      %1054 = vrot.lane.b32.xlu0 %v1046, 127
      %v1055 = vpop.permute.xlu0 %1054
      %v1056 = vsel %vm703, %v1051, %v1053
      %v1057 = vsel %vm703, %v1053, %v1055
      %1061 = vst [vmem:[#allocation3 + $0x18] sm:$0xff] %v1056
      %1062 = vst [vmem:[#allocation3 + $0x20] sm:$0xff] %v1057
      %1063 = vst.msk [vmem:[#allocation3 + $0x28] sm:$0xff] %vm692, %v1055
      %v1064 = vld [vmem:[#allocation4] sm:$0xff]
      %v1065 = vld [vmem:[#allocation4 + $0x8] sm:$0xff]
      %v1066 = vld [vmem:[#allocation4 + $0x10] sm:$0xff]
      %1070 = vrot.lane.b32.xlu0 %v1064, 126
      %v1071 = vpop.permute.xlu0 %1070
      %1072 = vrot.lane.b32.xlu0 %v1065, 126
      %v1073 = vpop.permute.xlu0 %1072
      %1074 = vrot.lane.b32.xlu0 %v1066, 126
      %v1075 = vpop.permute.xlu0 %1074
      %v1076 = vsel %vm718, %v1071, %v1073
      %v1077 = vsel %vm718, %v1073, %v1075
      %1081 = vst [vmem:[#allocation3 + $0x30] sm:$0xff] %v1076
      %1082 = vst [vmem:[#allocation3 + $0x38] sm:$0xff] %v1077
      %1083 = vst.msk [vmem:[#allocation3 + $0x40] sm:$0xff] %vm692, %v1075
      %v1084 = vld [vmem:[#allocation4] sm:$0xff]
      %v1085 = vld [vmem:[#allocation4 + $0x8] sm:$0xff]
      %v1086 = vld [vmem:[#allocation4 + $0x10] sm:$0xff]
      %1090 = vrot.lane.b32.xlu0 %v1084, 110
      %v1091 = vpop.permute.xlu0 %1090
      %1092 = vrot.lane.b32.xlu0 %v1085, 110
      %v1093 = vpop.permute.xlu0 %1092
      %1094 = vrot.lane.b32.xlu0 %v1086, 110
      %v1095 = vpop.permute.xlu0 %1094
      %v1096 = vsel %vm733, %v1091, %v1093
      %v1097 = vsel %vm733, %v1093, %v1095
      %1101 = vst [vmem:[#allocation3 + $0x48] sm:$0xff] %v1096
      %1102 = vst [vmem:[#allocation3 + $0x50] sm:$0xff] %v1097
      %1103 = vst.msk [vmem:[#allocation3 + $0x58] sm:$0xff] %vm692, %v1095
      %v1104 = vld [vmem:[#allocation4] sm:$0xff]
      %v1105 = vld [vmem:[#allocation4 + $0x8] sm:$0xff]
      %v1106 = vld [vmem:[#allocation4 + $0x10] sm:$0xff]
      %1110 = vrot.lane.b32.xlu0 %v1104, 109
      %v1111 = vpop.permute.xlu0 %1110
      %1112 = vrot.lane.b32.xlu0 %v1105, 109
      %v1113 = vpop.permute.xlu0 %1112
      %1114 = vrot.lane.b32.xlu0 %v1106, 109
      %v1115 = vpop.permute.xlu0 %1114
      %v1116 = vsel %vm748, %v1111, %v1113
      %v1117 = vsel %vm748, %v1113, %v1115
      %1121 = vst [vmem:[#allocation3 + $0x60] sm:$0xff] %v1116
      %1122 = vst [vmem:[#allocation3 + $0x68] sm:$0xff] %v1117
      %1123 = vst.msk [vmem:[#allocation3 + $0x70] sm:$0xff] %vm692, %v1115
      %v1124 = vld [vmem:[#allocation4] sm:$0xff]
      %v1125 = vld [vmem:[#allocation4 + $0x8] sm:$0xff]
      %v1126 = vld [vmem:[#allocation4 + $0x10] sm:$0xff]
      %1130 = vrot.lane.b32.xlu0 %v1124, 108
      %v1131 = vpop.permute.xlu0 %1130
      %1132 = vrot.lane.b32.xlu0 %v1125, 108
      %v1133 = vpop.permute.xlu0 %1132
      %1134 = vrot.lane.b32.xlu0 %v1126, 108
      %v1135 = vpop.permute.xlu0 %1134
      %v1136 = vsel %vm763, %v1131, %v1133
      %v1137 = vsel %vm763, %v1133, %v1135
      %1141 = vst [vmem:[#allocation3 + $0x78] sm:$0xff] %v1136
      %1142 = vst [vmem:[#allocation3 + $0x80] sm:$0xff] %v1137
      %1143 = vst.msk [vmem:[#allocation3 + $0x88] sm:$0xff] %vm692, %v1135
      %v1144 = vld [vmem:[#allocation4] sm:$0xff]
      %v1145 = vld [vmem:[#allocation4 + $0x8] sm:$0xff]
      %v1146 = vld [vmem:[#allocation4 + $0x10] sm:$0xff]
      %1150 = vrot.lane.b32.xlu0 %v1144, 92
      %v1151 = vpop.permute.xlu0 %1150
      %1152 = vrot.lane.b32.xlu0 %v1145, 92
      %v1153 = vpop.permute.xlu0 %1152
      %1154 = vrot.lane.b32.xlu0 %v1146, 92
      %v1155 = vpop.permute.xlu0 %1154
      %v1156 = vsel %vm778, %v1151, %v1153
      %v1157 = vsel %vm778, %v1153, %v1155
      %1161 = vst [vmem:[#allocation3 + $0x90] sm:$0xff] %v1156
      %1162 = vst [vmem:[#allocation3 + $0x98] sm:$0xff] %v1157
      %1163 = vst.msk [vmem:[#allocation3 + $0xa0] sm:$0xff] %vm692, %v1155
      %v1164 = vld [vmem:[#allocation4] sm:$0xff]
      %v1165 = vld [vmem:[#allocation4 + $0x8] sm:$0xff]
      %v1166 = vld [vmem:[#allocation4 + $0x10] sm:$0xff]
      %1170 = vrot.lane.b32.xlu0 %v1164, 91
      %v1171 = vpop.permute.xlu0 %1170
      %1172 = vrot.lane.b32.xlu0 %v1165, 91
      %v1173 = vpop.permute.xlu0 %1172
      %1174 = vrot.lane.b32.xlu0 %v1166, 91
      %v1175 = vpop.permute.xlu0 %1174
      %v1176 = vsel %vm793, %v1171, %v1173
      %v1177 = vsel %vm793, %v1173, %v1175
      %1181 = vst [vmem:[#allocation3 + $0xa8] sm:$0xff] %v1176
      %1182 = vst [vmem:[#allocation3 + $0xb0] sm:$0xff] %v1177
      %1183 = vst.msk [vmem:[#allocation3 + $0xb8] sm:$0xff] %vm692, %v1175
      %v1184 = vld [vmem:[#allocation4] sm:$0xff]
      %v1185 = vld [vmem:[#allocation4 + $0x8] sm:$0xff]
      %v1186 = vld [vmem:[#allocation4 + $0x10] sm:$0xff]
      %1190 = vrot.lane.b32.xlu0 %v1184, 90
      %v1191 = vpop.permute.xlu0 %1190
      %1192 = vrot.lane.b32.xlu0 %v1185, 90
      %v1193 = vpop.permute.xlu0 %1192
      %1194 = vrot.lane.b32.xlu0 %v1186, 90
      %v1195 = vpop.permute.xlu0 %1194
      %v1196 = vsel %vm808, %v1191, %v1193
      %v1197 = vsel %vm808, %v1193, %v1195
      %1201 = vst [vmem:[#allocation3 + $0xc0] sm:$0xff] %v1196
      %1202 = vst [vmem:[#allocation3 + $0xc8] sm:$0xff] %v1197
      %1203 = vst.msk [vmem:[#allocation3 + $0xd0] sm:$0xff] %vm692, %v1195
      %v1204 = vld [vmem:[%s5] sm:$0xff]
      %v1205 = vld [vmem:[%s5 + $0x8] sm:$0xff]
      %v1206 = vld [vmem:[#allocation3] sm:$0xff]
      %v1207 = vld [vmem:[#allocation3 + $0x8] sm:$0xff]
      %v1208 = vld [vmem:[#allocation3 + $0x10] sm:$0xff]
      %v1209 = vld [vmem:[#allocation3 + $0x18] sm:$0xff]
      %v1210 = vld [vmem:[#allocation3 + $0x20] sm:$0xff]
      %v1211 = vld [vmem:[#allocation3 + $0x28] sm:$0xff]
      %v1212 = vld [vmem:[#allocation3 + $0x30] sm:$0xff]
      %v1213 = vld [vmem:[#allocation3 + $0x38] sm:$0xff]
      %v1214 = vld [vmem:[#allocation3 + $0x40] sm:$0xff]
      %v1215 = vld [vmem:[#allocation3 + $0x48] sm:$0xff]
      %v1216 = vld [vmem:[#allocation3 + $0x50] sm:$0xff]
      %v1217 = vld [vmem:[#allocation3 + $0x58] sm:$0xff]
      %v1218 = vld [vmem:[#allocation3 + $0x60] sm:$0xff]
      %v1219 = vld [vmem:[#allocation3 + $0x68] sm:$0xff]
      %v1220 = vld [vmem:[#allocation3 + $0x70] sm:$0xff]
      %v1221 = vld [vmem:[#allocation3 + $0x78] sm:$0xff]
      %v1222 = vld [vmem:[#allocation3 + $0x80] sm:$0xff]
      %v1223 = vld [vmem:[#allocation3 + $0x88] sm:$0xff]
      %v1224 = vld [vmem:[#allocation3 + $0x90] sm:$0xff]
      %v1225 = vld [vmem:[#allocation3 + $0x98] sm:$0xff]
      %v1226 = vld [vmem:[#allocation3 + $0xa0] sm:$0xff]
      %v1227 = vld [vmem:[#allocation3 + $0xa8] sm:$0xff]
      %v1228 = vld [vmem:[#allocation3 + $0xb0] sm:$0xff]
      %v1229 = vld [vmem:[#allocation3 + $0xb8] sm:$0xff]
      %v1230 = vld [vmem:[#allocation3 + $0xc0] sm:$0xff]
      %v1231 = vld [vmem:[#allocation3 + $0xc8] sm:$0xff]
      %v1232 = vld [vmem:[#allocation3 + $0xd0] sm:$0xff]
      %v1233 = vld [vmem:[%s6] sm:$0xff]
      %v1234 = vld [vmem:[%s6 + $0x8] sm:$0xff]
      %1236 = vset.pattern.permute.xlu0 0
      %1237 = vperm.xlu0 %1236, %v1233
      %v1238 = vpop.permute.xlu0 %1237
      %1241 = vset.pattern.permute.xlu0 0
      %1242 = vperm.xlu0 %1241, %v1234
      %v1243 = vpop.permute.xlu0 %1242
      %v1246 = vsel %vm851, %v1204, 0
      %v1249 = vsel %vm851, %v1205, 0
      %1251 = vmatprep.subr.mxu0 0.0
      %1252 = vmatpush1.msra.mxu0 0.0
      %1253 = vmatprep.subr.mxu0 0.0
      %1254 = vmatpush1.msra.mxu0 0.0
      %1255 = vmatprep.subr.mxu0 0.0
      %1256 = vmatpush1.msra.mxu0 0.0
      %1257 = vmatprep.subr.mxu0 0.0
      %1258 = vmatpush1.msra.mxu0 0.0
      %1259 = vmatprep.subr.mxu0 0.0
      %1260 = vmatpush1.msra.mxu0 0.0
      %1261 = vmatprep.subr.mxu0 0.0
      %1262 = vmatpush1.msra.mxu0 0.0
      %1263 = vmatprep.subr.mxu0 0.0
      %1264 = vmatpush1.msra.mxu0 0.0
      %1265 = vmatprep.subr.mxu0 %v1231
      %1266 = vmatpush1.msra.mxu0 %v1230
      %1267 = vmatprep.subr.mxu0 %v1228
      %1268 = vmatpush1.msra.mxu0 %v1227
      %1269 = vmatprep.subr.mxu0 %v1225
      %1270 = vmatpush1.msra.mxu0 %v1224
      %1271 = vmatprep.subr.mxu0 %v1222
      %1272 = vmatpush1.msra.mxu0 %v1221
      %1273 = vmatprep.subr.mxu0 %v1219
      %1274 = vmatpush1.msra.mxu0 %v1218
      %1275 = vmatprep.subr.mxu0 %v1216
      %1276 = vmatpush1.msra.mxu0 %v1215
      %1277 = vmatprep.subr.mxu0 %v1213
      %1278 = vmatpush1.msra.mxu0 %v1212
      %1279 = vmatprep.subr.mxu0 %v1210
      %1280 = vmatpush1.msra.mxu0 %v1209
      %1281 = vmatprep.subr.mxu0 %v1207
      %1282 = vmatpush1.msra.mxu0 %v1206
      %1283 = vmatprep.subr.mxu0 0.0
      %1284 = vmatpush2.msra.mxu0 0.0
      %1285 = vmatprep.subr.mxu0 0.0
      %1286 = vmatpush2.msra.mxu0 0.0
      %1287 = vmatprep.subr.mxu0 0.0
      %1288 = vmatpush2.msra.mxu0 0.0
      %1289 = vmatprep.subr.mxu0 0.0
      %1290 = vmatpush2.msra.mxu0 0.0
      %1291 = vmatprep.subr.mxu0 0.0
      %1292 = vmatpush2.msra.mxu0 0.0
      %1293 = vmatprep.subr.mxu0 0.0
      %1294 = vmatpush2.msra.mxu0 0.0
      %1295 = vmatprep.subr.mxu0 0.0
      %1296 = vmatpush2.msra.mxu0 0.0
      %1297 = vmatprep.subr.mxu0 0.0
      %1298 = vmatpush2.msra.mxu0 0.0
      %1299 = vmatprep.subr.mxu0 0.0
      %1300 = vmatpush2.msra.mxu0 0.0
      %1301 = vmatprep.subr.mxu0 0.0
      %1302 = vmatpush2.msra.mxu0 0.0
      %1303 = vmatprep.subr.mxu0 0.0
      %1304 = vmatpush2.msra.mxu0 0.0
      %1305 = vmatprep.subr.mxu0 0.0
      %1306 = vmatpush2.msra.mxu0 0.0
      %1307 = vmatprep.subr.mxu0 0.0
      %1308 = vmatpush2.msra.mxu0 0.0
      %1309 = vmatprep.subr.mxu0 0.0
      %1310 = vmatpush2.msra.mxu0 0.0
      %1311 = vmatprep.subr.mxu0 0.0
      %1312 = vmatpush2.msra.mxu0 0.0
      %1313 = vmatprep.subr.mxu0 0.0
      %1314 = vmatpush2.msra.mxu0 0.0
      %1315 = vmatprep.mubr.f32.mxu0 0.0
      %1316 = vmatmul.mubr.f32.gmra.mxu0 %v1246
      %v1317 = vpop.f32.mrf.mxu0
      %v1318 = vadd.f32 %v1238, %v1317
      %v1319 = vpop.f32.mrf.mxu0
      %v1320 = vadd.f32 %v1238, %v1319
      %1321 = vmatprep.mubr.f32.mxu0 0.0
      %1322 = vmatmul.mubr.f32.gmra.mxu0 %v1249
      %v1323 = vpop.f32.mrf.mxu0
      %v1324 = vadd.f32 %v1243, %v1323
      %v1325 = vpop.f32.mrf.mxu0
      %v1326 = vadd.f32 %v1243, %v1325
      %1327 = vdwg.mxu0
      %1328 = vmatprep.subr.mxu0 0.0
      %1329 = vmatpush1.msra.mxu0 0.0
      %1330 = vmatprep.subr.mxu0 0.0
      %1331 = vmatpush1.msra.mxu0 0.0
      %1332 = vmatprep.subr.mxu0 0.0
      %1333 = vmatpush1.msra.mxu0 0.0
      %1334 = vmatprep.subr.mxu0 0.0
      %1335 = vmatpush1.msra.mxu0 0.0
      %1336 = vmatprep.subr.mxu0 0.0
      %1337 = vmatpush1.msra.mxu0 0.0
      %1338 = vmatprep.subr.mxu0 0.0
      %1339 = vmatpush1.msra.mxu0 0.0
      %1340 = vmatprep.subr.mxu0 0.0
      %1341 = vmatpush1.msra.mxu0 0.0
      %1342 = vmatprep.subr.mxu0 0.0
      %1343 = vmatpush1.msra.mxu0 %v1232
      %1344 = vmatprep.subr.mxu0 0.0
      %1345 = vmatpush1.msra.mxu0 %v1229
      %1346 = vmatprep.subr.mxu0 0.0
      %1347 = vmatpush1.msra.mxu0 %v1226
      %1348 = vmatprep.subr.mxu0 0.0
      %1349 = vmatpush1.msra.mxu0 %v1223
      %1350 = vmatprep.subr.mxu0 0.0
      %1351 = vmatpush1.msra.mxu0 %v1220
      %1352 = vmatprep.subr.mxu0 0.0
      %1353 = vmatpush1.msra.mxu0 %v1217
      %1354 = vmatprep.subr.mxu0 0.0
      %1355 = vmatpush1.msra.mxu0 %v1214
      %1356 = vmatprep.subr.mxu0 0.0
      %1357 = vmatpush1.msra.mxu0 %v1211
      %1358 = vmatprep.subr.mxu0 0.0
      %1359 = vmatpush1.msra.mxu0 %v1208
      %1360 = vmatprep.subr.mxu0 0.0
      %1361 = vmatpush2.msra.mxu0 0.0
      %1362 = vmatprep.subr.mxu0 0.0
      %1363 = vmatpush2.msra.mxu0 0.0
      %1364 = vmatprep.subr.mxu0 0.0
      %1365 = vmatpush2.msra.mxu0 0.0
      %1366 = vmatprep.subr.mxu0 0.0
      %1367 = vmatpush2.msra.mxu0 0.0
      %1368 = vmatprep.subr.mxu0 0.0
      %1369 = vmatpush2.msra.mxu0 0.0
      %1370 = vmatprep.subr.mxu0 0.0
      %1371 = vmatpush2.msra.mxu0 0.0
      %1372 = vmatprep.subr.mxu0 0.0
      %1373 = vmatpush2.msra.mxu0 0.0
      %1374 = vmatprep.subr.mxu0 0.0
      %1375 = vmatpush2.msra.mxu0 0.0
      %1376 = vmatprep.subr.mxu0 0.0
      %1377 = vmatpush2.msra.mxu0 0.0
      %1378 = vmatprep.subr.mxu0 0.0
      %1379 = vmatpush2.msra.mxu0 0.0
      %1380 = vmatprep.subr.mxu0 0.0
      %1381 = vmatpush2.msra.mxu0 0.0
      %1382 = vmatprep.subr.mxu0 0.0
      %1383 = vmatpush2.msra.mxu0 0.0
      %1384 = vmatprep.subr.mxu0 0.0
      %1385 = vmatpush2.msra.mxu0 0.0
      %1386 = vmatprep.subr.mxu0 0.0
      %1387 = vmatpush2.msra.mxu0 0.0
      %1388 = vmatprep.subr.mxu0 0.0
      %1389 = vmatpush2.msra.mxu0 0.0
      %1390 = vmatprep.subr.mxu0 0.0
      %1391 = vmatpush2.msra.mxu0 0.0
      %1392 = vmatprep.mubr.f32.mxu0 0.0
      %1393 = vmatmul.mubr.f32.gmra.mxu0 %v1246
      %v1394 = vpop.f32.mrf.mxu0
      %v1395 = vadd.f32 %v1238, %v1394
      %v1396 = vpop.f32.mrf.mxu0
      %1397 = vmatprep.mubr.f32.mxu0 0.0
      %1398 = vmatmul.mubr.f32.gmra.mxu0 %v1249
      %v1399 = vpop.f32.mrf.mxu0
      %v1400 = vadd.f32 %v1243, %v1399
      %v1401 = vpop.f32.mrf.mxu0
      %1402 = vdwg.mxu0
      %v1403 = vxor.u32 %v1324, 2147483648
      %v1404 = vxor.u32 %v1326, 2147483648
      %v1405 = vxor.u32 %v1400, 2147483648
      %v1406 = vmul.f32 %v1403, 1.442695
      %v1407 = vpow.pop %v1406
      %v1408 = vmul.f32 %v1404, 1.442695
      %v1409 = vpow.pop %v1408
      %v1410 = vmul.f32 %v1405, 1.442695
      %v1411 = vpow.pop %v1410
      %v1412 = vadd.f32 %v1407, 1.0
      %v1413 = vadd.f32 %v1409, 1.0
      %v1414 = vadd.f32 %v1411, 1.0
      %v1415 = vrcp.pop %v1412
      %v1416 = vmul.f32 1.0, %v1415
      %v1417 = vrcp.pop %v1413
      %v1418 = vmul.f32 1.0, %v1417
      %v1419 = vrcp.pop %v1414
      %v1420 = vmul.f32 1.0, %v1419
      %v1421 = vmul.f32 %v1318, %v1416
      %v1422 = vmul.f32 %v1320, %v1418
      %v1423 = vmul.f32 %v1395, %v1420
      %v1424 = vadd.f32 %v1421, %v749
      %v1425 = vadd.f32 %v1422, %v750
      %v1426 = vadd.f32 %v1423, %v747
      %v1427 = vmax.f32 %v1424, 0.0
      %v1428 = vmax.f32 %v1425, 0.0
      %v1429 = vmax.f32 %v1426, 0.0
      %vm1430 = vcmp.gt.f32.partialorder %v280, 0.0
      %v1431 = vsel %vm1430, 1, 0
      %v1432 = vlaneseq
      %v1433 = vshrl.u32 %v1432, 7
      %v1434 = vsub.s32 0, %v1433
      %v1435 = vrot.slane %v1431, %v1434
      %v1436 = vlaneseq
      %v1437 = vshrl.u32 %v1436, 7
      %v1438 = vsub.s32 1, %v1437
      %v1439 = vrot.slane %v1431, %v1438
      %v1440 = vlaneseq
      %v1441 = vshrl.u32 %v1440, 7
      %v1442 = vsub.s32 2, %v1441
      %v1443 = vrot.slane %v1431, %v1442
      %vm1444 = vcmp.eq.s32.totalorder %v1435, 1
      %vm1445 = vcmp.eq.s32.totalorder %v1439, 1
      %vm1446 = vcmp.eq.s32.totalorder %v1443, 1
      %v1447 = vsel %vm1444, %v1427, 0.0
      %v1448 = vsel %vm1445, %v1428, 0.0
      %v1449 = vsel %vm1446, %v1429, 0.0
      %v1450 = vpack.c.bf16 %v1447, %v1447
      %v1451 = vpack.c.bf16 %v1448, %v1448
      %v1452 = vpack.c.bf16 %v1449, %v1449
      %v1456 = vunpack.c.l.b16 %v1450
      %v1457 = vunpack.c.l.b16 %v1451
      %v1458 = vunpack.c.l.b16 %v1452
      %v1459 = vpack.c.b16 %v1457, %v1456
      %v1460 = vpack.c.b16 %v1458, %v1458
      %1463 = vst [vmem:[%s278] sm:$0xff] %v1459
      %vm1464 = vcmask 551936
      %1465 = vst.msk [vmem:[%s278 + $0x8] sm:$0xf] %vm1464, %v1460
      %p1466 = scmp.lt.s32.totalorder %s18, 1
      %s1467 = scalar_select %p1466, %s18, 1
      %s1468 = smul.addr %s1467, 3
      %s1469 = smul.addr %s1468, 4
      %s1470 = scalar_lea.vmem %s7, %s1469
      // Predicated region
      $region49: #{edge_attention_forward.2} parent=47 // pred_check
        %p1471 = pneg %p188
      $region50: #{edge_attention_forward.2} parent=47 // pred_check_branch
        %1473 = sbr.rel (%p1471) target = $region52
      $region51: #{edge_attention_forward.2} parent=47 // pred_region
        _
      $region52: #{edge_attention_forward.2} parent=47 // pred_fallthru
        _
    $region48: #{edge_attention_forward.2} parent=5 // pred_fallthru
      _
    %p1474 = scmp.le.s32.totalorder 2, %s13
    // Predicated region
    $region53: #{edge_attention_forward.2} parent=5 // pred_check
      %p1475 = pneg %p1474
    $region54: #{edge_attention_forward.2} parent=5 // pred_check_branch
      %1477 = sbr.rel (%p1475) target = $region56
    $region55: #{edge_attention_forward.2} parent=5 // pred_region
      %s1478 = ssub.s32 %s13, 2
      // Predicated region
      $region57: #{edge_attention_forward.2} parent=55 // pred_check
        %p1479 = pneg %p194
      $region58: #{edge_attention_forward.2} parent=55 // pred_check_branch
        %1481 = sbr.rel (%p1479) target = $region60
      $region59: #{edge_attention_forward.2} parent=55 // pred_region
        %p1482 = scmp.lt.s32.totalorder %s19, 1
        %s1483 = scalar_select %p1482, %s19, 1
        %s1484 = smul.addr %s1483, 3
        %s1485 = smul.addr %s1484, 4
        %s1486 = scalar_lea.vmem %s7, %s1485
      $region60: #{edge_attention_forward.2} parent=55 // pred_fallthru
        _
    $region56: #{edge_attention_forward.2} parent=5 // pred_fallthru
      _
  $region6: #{edge_attention_forward.2} parent=0 // loop_footer
    %s17 = sadd.s32 1, %s13
  $region7: #{edge_attention_forward.2} parent=0 // loop_footer_branch
    %12 = sbr.rel target = $region3
  $region8: #{edge_attention_forward.2} parent=0 // loop_exit
    _

// kernel: edge_attention_forward.3
$region0: #{edge_attention_forward.3}
  #allocation0 [shape = 'u32[]', space=smem, size = 0x4, offset = 0x4, fixed_abs, tag = 'smem constant byte address 0x4 - core index']
  #allocation1 [shape = 'u32[144,128]{1,0:T(1,128)}', space=vmem, size = 0x12000, scoped, tag = 'internal scratch']
  #allocation2 [shape = 'f32[72,1156]{1,0:T(8,128)}', space=vmem, size = 0x5a000, scoped, tag = 'scratch operand']
  #allocation3 [shape = 'f32[72,1156]{1,0:T(8,128)}', space=vmem, size = 0x5a000, scoped, tag = 'scratch operand']
  #allocation4 [shape = 'f32[8,1226]{1,0:T(8,128)}', space=vmem, size = 0xa000, scoped, tag = 'scratch operand']
  %s0 = inlined_call_operand.vmem [shape: bf16[2,8,324], index: 0, kind: input, shape index: {}]
  %s1 = inlined_call_operand.vmem [shape: bf16[324,1226], index: 1, kind: input, shape index: {}]
  %s2 = inlined_call_operand.vmem [shape: f32[1,1156], index: 2, kind: input, shape index: {}]
  %s3 = inlined_call_operand.vmem [shape: f32[16,72], index: 3, kind: input, shape index: {}]
  %s4 = inlined_call_operand.vmem [shape: f32[16,1], index: 4, kind: input, shape index: {}]
  %s5 = inlined_call_operand.vmem [shape: f32[16,72], index: 5, kind: input, shape index: {}]
  %s6 = inlined_call_operand.vmem [shape: f32[16,1], index: 6, kind: input, shape index: {}]
  %s7 = inlined_call_operand.vmem [shape: f32[2,4,1156], index: 7, kind: output, shape index: {0}]
  %s8 = inlined_call_operand.vmem [shape: f32[2,4,1156], index: 8, kind: output, shape index: {1}]
  %9 = xla_tuple %s7, %s8
  %s10 = sld [smem:[#allocation0]]
  $region69: #{edge_attention_forward.3} parent=0
    _
  %s12 = ssub.s32 1, %s10
  %s13 = scalar_select 0, %s12, %s10
  loop: start=0, step=1, limit=4
  $region2: #{edge_attention_forward.3} parent=0 // loop_pre_header
    _
  $region3: #{edge_attention_forward.3} parent=0 // loop_header
    %s15 = sphi 0, %s19
    %p16 = scmp.ge.s32.totalorder %s15, 4
    %s25 = sphi 0, %s27
    %s28 = sphi 0, %s25
    %s29 = sphi 0, %s28
    %s45 = sphi 0, %s29
    %s49 = sphi 0, %s49
    %s51 = sphi 0, %s49
    %s52 = sphi 0, %s51
    %s66 = sphi 0, %s52
    %s70 = sphi 0, %s70
    %s72 = sphi 0, %s70
    %s73 = sphi 0, %s72
    %s87 = sphi 0, %s73
    %s91 = sphi 0, %s91
    %s93 = sphi 0, %s91
    %s94 = sphi 0, %s93
    %s108 = sphi 0, %s94
    %s112 = sphi 0, %s112
    %s114 = sphi 0, %s112
    %s115 = sphi 0, %s114
    %s129 = sphi 0, %s115
    %s133 = sphi 0, %s133
    %s135 = sphi 0, %s133
    %s136 = sphi 0, %s135
    %s150 = sphi 0, %s136
    %s154 = sphi 0, %s154
    %s156 = sphi 0, %s154
    %s157 = sphi 0, %s156
    %s171 = sphi 0, %s157
    %s177 = sphi 0, %s179
    %s180 = sphi 0, %s177
    %s181 = sphi 0, %s180
    %s197 = sphi 0, %s181
    %s203 = sphi 0, %s205
    %s206 = sphi 0, %s203
    %s207 = sphi 0, %s206
    %s223 = sphi 0, %s207
  $region4: #{edge_attention_forward.3} parent=0 // loop_header_branch
    %18 = sbr.rel (%p16) target = $region8
  $region5: #{edge_attention_forward.3} parent=0 // loop_body
    %s20 = ssub.s32 %s15, 1
    %s21 = ssub.s32 %s15, 2
    %s22 = sadd.s32 %s15, 1
    %s23 = ssub.s32 %s15, %s22
    %p24 = scmp.eq.s32.totalorder %s23, 0
    %s26 = sadd.s32 %s25, 1
    %s27 = scalar_select %p24, %s25, %s26
    %p30 = pneg %p24
    %p31 = scmp.eq.s32.totalorder %s15, 1
    %p32 = por %p30, %p31
    %p33 = scmp.ne.s32.totalorder %s25, %s28
    %p34 = scmp.eq.s32.totalorder %s15, 0
    %p35 = por %p33, %p34
    %p36 = scmp.ne.s32.totalorder %s25, %s28
    %p37 = scmp.eq.s32.totalorder %s20, 1
    %p38 = por %p36, %p37
    %p39 = scmp.ne.s32.totalorder %s28, %s29
    %p40 = scmp.eq.s32.totalorder %s20, 0
    %p41 = por %p39, %p40
    %p42 = scmp.ne.s32.totalorder %s28, %s29
    %p43 = scmp.eq.s32.totalorder %s21, 1
    %p44 = por %p42, %p43
    %p46 = scmp.ne.s32.totalorder %s29, %s45
    %p47 = scmp.eq.s32.totalorder %s21, 0
    %p48 = por %p46, %p47
    %s50 = sadd.s32 %s49, 1
    %p53 = scmp.eq.s32.totalorder %s15, 1
    %p54 = scmp.ne.s32.totalorder %s49, %s51
    %p55 = scmp.eq.s32.totalorder %s15, 0
    %p56 = por %p54, %p55
    %p57 = scmp.ne.s32.totalorder %s49, %s51
    %p58 = scmp.eq.s32.totalorder %s20, 1
    %p59 = por %p57, %p58
    %p60 = scmp.ne.s32.totalorder %s51, %s52
    %p61 = scmp.eq.s32.totalorder %s20, 0
    %p62 = por %p60, %p61
    %p63 = scmp.ne.s32.totalorder %s51, %s52
    %p64 = scmp.eq.s32.totalorder %s21, 1
    %p65 = por %p63, %p64
    %p67 = scmp.ne.s32.totalorder %s52, %s66
    %p68 = scmp.eq.s32.totalorder %s21, 0
    %p69 = por %p67, %p68
    %s71 = sadd.s32 %s70, 1
    %p74 = scmp.eq.s32.totalorder %s15, 1
    %p75 = scmp.ne.s32.totalorder %s70, %s72
    %p76 = scmp.eq.s32.totalorder %s15, 0
    %p77 = por %p75, %p76
    %p78 = scmp.ne.s32.totalorder %s70, %s72
    %p79 = scmp.eq.s32.totalorder %s20, 1
    %p80 = por %p78, %p79
    %p81 = scmp.ne.s32.totalorder %s72, %s73
    %p82 = scmp.eq.s32.totalorder %s20, 0
    %p83 = por %p81, %p82
    %p84 = scmp.ne.s32.totalorder %s72, %s73
    %p85 = scmp.eq.s32.totalorder %s21, 1
    %p86 = por %p84, %p85
    %p88 = scmp.ne.s32.totalorder %s73, %s87
    %p89 = scmp.eq.s32.totalorder %s21, 0
    %p90 = por %p88, %p89
    %s92 = sadd.s32 %s91, 1
    %p95 = scmp.eq.s32.totalorder %s15, 1
    %p96 = scmp.ne.s32.totalorder %s91, %s93
    %p97 = scmp.eq.s32.totalorder %s15, 0
    %p98 = por %p96, %p97
    %p99 = scmp.ne.s32.totalorder %s91, %s93
    %p100 = scmp.eq.s32.totalorder %s20, 1
    %p101 = por %p99, %p100
    %p102 = scmp.ne.s32.totalorder %s93, %s94
    %p103 = scmp.eq.s32.totalorder %s20, 0
    %p104 = por %p102, %p103
    %p105 = scmp.ne.s32.totalorder %s93, %s94
    %p106 = scmp.eq.s32.totalorder %s21, 1
    %p107 = por %p105, %p106
    %p109 = scmp.ne.s32.totalorder %s94, %s108
    %p110 = scmp.eq.s32.totalorder %s21, 0
    %p111 = por %p109, %p110
    %s113 = sadd.s32 %s112, 1
    %p116 = scmp.eq.s32.totalorder %s15, 1
    %p117 = scmp.ne.s32.totalorder %s112, %s114
    %p118 = scmp.eq.s32.totalorder %s15, 0
    %p119 = por %p117, %p118
    %p120 = scmp.ne.s32.totalorder %s112, %s114
    %p121 = scmp.eq.s32.totalorder %s20, 1
    %p122 = por %p120, %p121
    %p123 = scmp.ne.s32.totalorder %s114, %s115
    %p124 = scmp.eq.s32.totalorder %s20, 0
    %p125 = por %p123, %p124
    %p126 = scmp.ne.s32.totalorder %s114, %s115
    %p127 = scmp.eq.s32.totalorder %s21, 1
    %p128 = por %p126, %p127
    %p130 = scmp.ne.s32.totalorder %s115, %s129
    %p131 = scmp.eq.s32.totalorder %s21, 0
    %p132 = por %p130, %p131
    %s134 = sadd.s32 %s133, 1
    %p137 = scmp.eq.s32.totalorder %s15, 1
    %p138 = scmp.ne.s32.totalorder %s133, %s135
    %p139 = scmp.eq.s32.totalorder %s15, 0
    %p140 = por %p138, %p139
    %p141 = scmp.ne.s32.totalorder %s133, %s135
    %p142 = scmp.eq.s32.totalorder %s20, 1
    %p143 = por %p141, %p142
    %p144 = scmp.ne.s32.totalorder %s135, %s136
    %p145 = scmp.eq.s32.totalorder %s20, 0
    %p146 = por %p144, %p145
    %p147 = scmp.ne.s32.totalorder %s135, %s136
    %p148 = scmp.eq.s32.totalorder %s21, 1
    %p149 = por %p147, %p148
    %p151 = scmp.ne.s32.totalorder %s136, %s150
    %p152 = scmp.eq.s32.totalorder %s21, 0
    %p153 = por %p151, %p152
    %s155 = sadd.s32 %s154, 1
    %p158 = scmp.eq.s32.totalorder %s15, 1
    %p159 = scmp.ne.s32.totalorder %s154, %s156
    %p160 = scmp.eq.s32.totalorder %s15, 0
    %p161 = por %p159, %p160
    %p162 = scmp.ne.s32.totalorder %s154, %s156
    %p163 = scmp.eq.s32.totalorder %s20, 1
    %p164 = por %p162, %p163
    %p165 = scmp.ne.s32.totalorder %s156, %s157
    %p166 = scmp.eq.s32.totalorder %s20, 0
    %p167 = por %p165, %p166
    %p168 = scmp.ne.s32.totalorder %s156, %s157
    %p169 = scmp.eq.s32.totalorder %s21, 1
    %p170 = por %p168, %p169
    %p172 = scmp.ne.s32.totalorder %s157, %s171
    %p173 = scmp.eq.s32.totalorder %s21, 0
    %p174 = por %p172, %p173
    %s175 = ssub.s32 %s15, %s22
    %p176 = scmp.eq.s32.totalorder %s175, 0
    %s178 = sadd.s32 %s177, 1
    %s179 = scalar_select %p176, %s177, %s178
    %p182 = pneg %p176
    %p183 = scmp.eq.s32.totalorder %s15, 1
    %p184 = por %p182, %p183
    %p185 = scmp.ne.s32.totalorder %s177, %s180
    %p186 = scmp.eq.s32.totalorder %s15, 0
    %p187 = por %p185, %p186
    %p188 = scmp.ne.s32.totalorder %s177, %s180
    %p189 = scmp.eq.s32.totalorder %s20, 1
    %p190 = por %p188, %p189
    %p191 = scmp.ne.s32.totalorder %s180, %s181
    %p192 = scmp.eq.s32.totalorder %s20, 0
    %p193 = por %p191, %p192
    %p194 = scmp.ne.s32.totalorder %s180, %s181
    %p195 = scmp.eq.s32.totalorder %s21, 1
    %p196 = por %p194, %p195
    %p198 = scmp.ne.s32.totalorder %s181, %s197
    %p199 = scmp.eq.s32.totalorder %s21, 0
    %p200 = por %p198, %p199
    %s201 = ssub.s32 %s15, %s22
    %p202 = scmp.eq.s32.totalorder %s201, 0
    %s204 = sadd.s32 %s203, 1
    %s205 = scalar_select %p202, %s203, %s204
    %p208 = pneg %p202
    %p209 = scmp.eq.s32.totalorder %s15, 1
    %p210 = por %p208, %p209
    %p211 = scmp.ne.s32.totalorder %s203, %s206
    %p212 = scmp.eq.s32.totalorder %s15, 0
    %p213 = por %p211, %p212
    %p214 = scmp.ne.s32.totalorder %s203, %s206
    %p215 = scmp.eq.s32.totalorder %s20, 1
    %p216 = por %p214, %p215
    %p217 = scmp.ne.s32.totalorder %s206, %s207
    %p218 = scmp.eq.s32.totalorder %s20, 0
    %p219 = por %p217, %p218
    %p220 = scmp.ne.s32.totalorder %s206, %s207
    %p221 = scmp.eq.s32.totalorder %s21, 1
    %p222 = por %p220, %p221
    %p224 = scmp.ne.s32.totalorder %s207, %s223
    %p225 = scmp.eq.s32.totalorder %s21, 0
    %p226 = por %p224, %p225
    %p227 = scmp.le.s32.totalorder 1, %s15
    %p228 = scmp.lt.s32.totalorder %s15, 3
    %p229 = pnand %p227, %p228
    %p230 = pneg %p229
    // Predicated region
    $region9: #{edge_attention_forward.3} parent=5 // pred_check
      _
    $region10: #{edge_attention_forward.3} parent=5 // pred_check_branch
      %232 = sbr.rel (%p229) target = $region12
    $region11: #{edge_attention_forward.3} parent=5 // pred_region
      %s233 = ssub.s32 %s15, 1
      // Predicated region
      $region13: #{edge_attention_forward.3} parent=11 // pred_check
        %p234 = pneg %p62
      $region14: #{edge_attention_forward.3} parent=11 // pred_check_branch
        %236 = sbr.rel (%p234) target = $region16
      $region15: #{edge_attention_forward.3} parent=11 // pred_region
        _
      $region16: #{edge_attention_forward.3} parent=11 // pred_fallthru
        _
      // Predicated region
      $region17: #{edge_attention_forward.3} parent=11 // pred_check
        %p237 = pneg %p83
      $region18: #{edge_attention_forward.3} parent=11 // pred_check_branch
        %239 = sbr.rel (%p237) target = $region20
      $region19: #{edge_attention_forward.3} parent=11 // pred_region
        _
      $region20: #{edge_attention_forward.3} parent=11 // pred_fallthru
        _
      // Predicated region
      $region21: #{edge_attention_forward.3} parent=11 // pred_check
        %p240 = pneg %p104
      $region22: #{edge_attention_forward.3} parent=11 // pred_check_branch
        %242 = sbr.rel (%p240) target = $region24
      $region23: #{edge_attention_forward.3} parent=11 // pred_region
        _
      $region24: #{edge_attention_forward.3} parent=11 // pred_fallthru
        _
      // Predicated region
      $region25: #{edge_attention_forward.3} parent=11 // pred_check
        %p243 = pneg %p125
      $region26: #{edge_attention_forward.3} parent=11 // pred_check_branch
        %245 = sbr.rel (%p243) target = $region28
      $region27: #{edge_attention_forward.3} parent=11 // pred_region
        _
      $region28: #{edge_attention_forward.3} parent=11 // pred_fallthru
        _
      // Predicated region
      $region29: #{edge_attention_forward.3} parent=11 // pred_check
        %p246 = pneg %p146
      $region30: #{edge_attention_forward.3} parent=11 // pred_check_branch
        %248 = sbr.rel (%p246) target = $region32
      $region31: #{edge_attention_forward.3} parent=11 // pred_region
        _
      $region32: #{edge_attention_forward.3} parent=11 // pred_fallthru
        _
      // Predicated region
      $region33: #{edge_attention_forward.3} parent=11 // pred_check
        %p249 = pneg %p167
      $region34: #{edge_attention_forward.3} parent=11 // pred_check_branch
        %251 = sbr.rel (%p249) target = $region36
      $region35: #{edge_attention_forward.3} parent=11 // pred_region
        _
      $region36: #{edge_attention_forward.3} parent=11 // pred_fallthru
        _
    $region12: #{edge_attention_forward.3} parent=5 // pred_fallthru
      _
    %p252 = scmp.lt.s32.totalorder %s15, 2
    // Predicated region
    $region37: #{edge_attention_forward.3} parent=5 // pred_check
      %p253 = pneg %p252
    $region38: #{edge_attention_forward.3} parent=5 // pred_check_branch
      %255 = sbr.rel (%p253) target = $region40
    $region39: #{edge_attention_forward.3} parent=5 // pred_region
      // Predicated region
      $region41: #{edge_attention_forward.3} parent=39 // pred_check
        %p256 = pneg %p35
      $region42: #{edge_attention_forward.3} parent=39 // pred_check_branch
        %258 = sbr.rel (%p256) target = $region44
      $region43: #{edge_attention_forward.3} parent=39 // pred_region
        %p259 = scmp.lt.s32.totalorder %s15, 1
        %s260 = scalar_select %p259, %s15, 1
        %s261 = smul.addr %s260, 3
        %s262 = smul.addr %s261, 4
        %s263 = scalar_lea.vmem %s0, %s262
      $region44: #{edge_attention_forward.3} parent=39 // pred_fallthru
        _
    $region40: #{edge_attention_forward.3} parent=5 // pred_fallthru
      _
    %p264 = scmp.le.s32.totalorder 1, %s15
    %p265 = scmp.lt.s32.totalorder %s15, 3
    %p266 = pnand %p264, %p265
    %p267 = pneg %p266
    // Predicated region
    $region45: #{edge_attention_forward.3} parent=5 // pred_check
      _
    $region46: #{edge_attention_forward.3} parent=5 // pred_check_branch
      %269 = sbr.rel (%p266) target = $region48
    $region47: #{edge_attention_forward.3} parent=5 // pred_region
      %s270 = ssub.s32 %s15, 1
      %p271 = scmp.lt.s32.totalorder %s20, 1
      %s272 = scalar_select %p271, %s20, 1
      %s273 = smul.addr %s272, 3
      %s274 = smul.addr %s273, 4
      %s275 = scalar_lea.vmem %s0, %s274
      %p276 = pneg %p41
      %p277 = pneg %p38
      %p278 = pneg %p62
      %p279 = pneg %p59
      %p280 = pneg %p83
      %p281 = pneg %p80
      %p282 = pneg %p104
      %p283 = pneg %p101
      %p284 = pneg %p125
      %p285 = pneg %p122
      %p286 = pneg %p146
      %p287 = pneg %p143
      %p288 = pneg %p167
      %p289 = pneg %p164
      %p290 = pneg %p193
      %p291 = pneg %p190
      %p292 = scmp.lt.s32.totalorder %s20, 1
      %s293 = scalar_select %p292, %s20, 1
      %s294 = smul.addr %s293, 10
      %s295 = smul.addr %s294, 4
      %s296 = scalar_lea.vmem %s7, %s295
      %p297 = pneg %p219
      %p298 = pneg %p216
      %p299 = scmp.lt.s32.totalorder %s20, 1
      %s300 = scalar_select %p299, %s20, 1
      %s301 = smul.addr %s300, 10
      %s302 = smul.addr %s301, 4
      %s303 = scalar_lea.vmem %s8, %s302
      %p304 = scmp.lt.s32.totalorder %s20, 1
      %s305 = scalar_select %p304, %s20, 1
      %s306 = smul.addr %s305, 3
      %s307 = smul.addr %s306, 4
      %s308 = scalar_lea.vmem %s0, %s307
      %p309 = scmp.lt.s32.totalorder %s20, 1
      %s310 = scalar_select %p309, %s20, 1
      %s311 = smul.addr %s310, 10
      %s312 = smul.addr %s311, 4
      %s313 = scalar_lea.vmem %s7, %s312
      %p314 = scmp.lt.s32.totalorder %s20, 1
      %s315 = scalar_select %p314, %s20, 1
      %s316 = smul.addr %s315, 10
      %s317 = smul.addr %s316, 4
      %s318 = scalar_lea.vmem %s8, %s317
      %v320 = vld [vmem:[%s2] sm:$0xff]
      %v321 = vld [vmem:[%s2 + $0x8] sm:$0x3]
      %v322 = vld [vmem:[%s308] sm:$0xff]
      %v323 = vld [vmem:[%s308 + $0x8] sm:$0xf]
      %v324 = vld [vmem:[%s1] sm:$0xff]
      %v325 = vld [vmem:[%s1 + $0x8] sm:$0xff]
      %v326 = vld [vmem:[%s1 + $0x10] sm:$0xff]
      %v327 = vld [vmem:[%s1 + $0x18] sm:$0xff]
      %v328 = vld [vmem:[%s1 + $0x20] sm:$0xff]
      %v329 = vld [vmem:[%s1 + $0x28] sm:$0xff]
      %v330 = vld [vmem:[%s1 + $0x30] sm:$0xff]
      %v331 = vld [vmem:[%s1 + $0x38] sm:$0xff]
      %v332 = vld [vmem:[%s1 + $0x40] sm:$0xff]
      %v333 = vld [vmem:[%s1 + $0x48] sm:$0xff]
      %v334 = vld [vmem:[%s1 + $0x50] sm:$0xff]
      %v335 = vld [vmem:[%s1 + $0x58] sm:$0xff]
      %v336 = vld [vmem:[%s1 + $0x60] sm:$0xff]
      %v337 = vld [vmem:[%s1 + $0x68] sm:$0xff]
      %v338 = vld [vmem:[%s1 + $0x70] sm:$0xff]
      %v339 = vld [vmem:[%s1 + $0x78] sm:$0xff]
      %v340 = vld [vmem:[%s1 + $0x80] sm:$0xff]
      %v341 = vld [vmem:[%s1 + $0x88] sm:$0xff]
      %v342 = vld [vmem:[%s1 + $0x90] sm:$0xff]
      %v343 = vld [vmem:[%s1 + $0x98] sm:$0xff]
      %v344 = vld [vmem:[%s1 + $0xa0] sm:$0xff]
      %v345 = vld [vmem:[%s1 + $0xa8] sm:$0xff]
      %v346 = vld [vmem:[%s1 + $0xb0] sm:$0xff]
      %v347 = vld [vmem:[%s1 + $0xb8] sm:$0xff]
      %v348 = vld [vmem:[%s1 + $0xc0] sm:$0xff]
      %v349 = vld [vmem:[%s1 + $0xc8] sm:$0xff]
      %v350 = vld [vmem:[%s1 + $0xd0] sm:$0xff]
      %v351 = vld [vmem:[%s1 + $0xd8] sm:$0xff]
      %v352 = vld [vmem:[%s1 + $0xe0] sm:$0xff]
      %v353 = vld [vmem:[%s1 + $0xe8] sm:$0xff]
      %v354 = vld [vmem:[%s1 + $0xf0] sm:$0xff]
      %v355 = vld [vmem:[%s1 + $0xf8] sm:$0xff]
      %v356 = vld [vmem:[%s1 + $0x100] sm:$0xff]
      %v357 = vld [vmem:[%s1 + $0x108] sm:$0xff]
      %v358 = vld [vmem:[%s1 + $0x110] sm:$0xff]
      %v359 = vld [vmem:[%s1 + $0x118] sm:$0xff]
      %v360 = vld [vmem:[%s1 + $0x120] sm:$0xff]
      %v361 = vld [vmem:[%s1 + $0x128] sm:$0xff]
      %v362 = vld [vmem:[%s1 + $0x130] sm:$0xff]
      %v363 = vld [vmem:[%s1 + $0x138] sm:$0xff]
      %v364 = vld [vmem:[%s1 + $0x140] sm:$0xff]
      %v365 = vld [vmem:[%s1 + $0x148] sm:$0xff]
      %v366 = vld [vmem:[%s1 + $0x150] sm:$0xff]
      %v367 = vld [vmem:[%s1 + $0x158] sm:$0xff]
      %v368 = vld [vmem:[%s1 + $0x160] sm:$0xff]
      %v369 = vld [vmem:[%s1 + $0x168] sm:$0xff]
      %v370 = vld [vmem:[%s1 + $0x170] sm:$0xff]
      %v371 = vld [vmem:[%s1 + $0x178] sm:$0xff]
      %v372 = vld [vmem:[%s1 + $0x180] sm:$0xff]
      %v373 = vld [vmem:[%s1 + $0x188] sm:$0xff]
      %v374 = vld [vmem:[%s1 + $0x190] sm:$0xff]
      %v375 = vld [vmem:[%s1 + $0x198] sm:$0xff]
      %v376 = vld [vmem:[%s1 + $0x1a0] sm:$0xff]
      %v377 = vld [vmem:[%s1 + $0x1a8] sm:$0xff]
      %v378 = vld [vmem:[%s1 + $0x1b0] sm:$0xff]
      %v379 = vld [vmem:[%s1 + $0x1b8] sm:$0xff]
      %v380 = vld [vmem:[%s1 + $0x1c0] sm:$0xff]
      %v381 = vld [vmem:[%s1 + $0x1c8] sm:$0xff]
      %v382 = vld [vmem:[%s1 + $0x1d0] sm:$0xff]
      %v383 = vld [vmem:[%s1 + $0x1d8] sm:$0xff]
      %v384 = vld [vmem:[%s1 + $0x1e0] sm:$0xff]
      %v385 = vld [vmem:[%s1 + $0x1e8] sm:$0xff]
      %v386 = vld [vmem:[%s1 + $0x1f0] sm:$0xff]
      %v387 = vld [vmem:[%s1 + $0x1f8] sm:$0xff]
      %v388 = vld [vmem:[%s1 + $0x200] sm:$0xff]
      %v389 = vld [vmem:[%s1 + $0x208] sm:$0xff]
      %v390 = vld [vmem:[%s1 + $0x210] sm:$0xff]
      %v391 = vld [vmem:[%s1 + $0x218] sm:$0xff]
      %v392 = vld [vmem:[%s1 + $0x220] sm:$0xff]
      %v393 = vld [vmem:[%s1 + $0x228] sm:$0xff]
      %v394 = vld [vmem:[%s1 + $0x230] sm:$0xff]
      %v395 = vld [vmem:[%s1 + $0x238] sm:$0xff]
      %v396 = vld [vmem:[%s1 + $0x240] sm:$0xff]
      %v397 = vld [vmem:[%s1 + $0x248] sm:$0xff]
      %v398 = vld [vmem:[%s1 + $0x250] sm:$0xff]
      %v399 = vld [vmem:[%s1 + $0x258] sm:$0xff]
      %v400 = vld [vmem:[%s1 + $0x260] sm:$0xff]
      %v401 = vld [vmem:[%s1 + $0x268] sm:$0xff]
      %v402 = vld [vmem:[%s1 + $0x270] sm:$0xff]
      %v403 = vld [vmem:[%s1 + $0x278] sm:$0xff]
      %v404 = vld [vmem:[%s1 + $0x280] sm:$0xff]
      %v405 = vld [vmem:[%s1 + $0x288] sm:$0xff]
      %v406 = vld [vmem:[%s1 + $0x290] sm:$0xff]
      %v407 = vld [vmem:[%s1 + $0x298] sm:$0xff]
      %v408 = vld [vmem:[%s1 + $0x2a0] sm:$0xff]
      %v409 = vld [vmem:[%s1 + $0x2a8] sm:$0xff]
      %v410 = vld [vmem:[%s1 + $0x2b0] sm:$0xff]
      %v411 = vld [vmem:[%s1 + $0x2b8] sm:$0xff]
      %v412 = vld [vmem:[%s1 + $0x2c0] sm:$0xff]
      %v413 = vld [vmem:[%s1 + $0x2c8] sm:$0xff]
      %v414 = vld [vmem:[%s1 + $0x2d0] sm:$0xff]
      %v415 = vld [vmem:[%s1 + $0x2d8] sm:$0xff]
      %v416 = vld [vmem:[%s1 + $0x2e0] sm:$0xff]
      %v417 = vld [vmem:[%s1 + $0x2e8] sm:$0xff]
      %v418 = vld [vmem:[%s1 + $0x2f0] sm:$0xff]
      %v419 = vld [vmem:[%s1 + $0x2f8] sm:$0xff]
      %v420 = vld [vmem:[%s1 + $0x300] sm:$0xff]
      %v421 = vld [vmem:[%s1 + $0x308] sm:$0xff]
      %v422 = vld [vmem:[%s1 + $0x310] sm:$0xff]
      %v423 = vld [vmem:[%s1 + $0x318] sm:$0xff]
      %v424 = vld [vmem:[%s1 + $0x320] sm:$0xff]
      %v425 = vld [vmem:[%s1 + $0x328] sm:$0xff]
      %v426 = vld [vmem:[%s1 + $0x330] sm:$0xff]
      %v427 = vld [vmem:[%s1 + $0x338] sm:$0xff]
      %v428 = vld [vmem:[%s1 + $0x340] sm:$0xff]
      %v429 = vld [vmem:[%s1 + $0x348] sm:$0xff]
      %v430 = vld [vmem:[%s1 + $0x350] sm:$0xff]
      %v431 = vld [vmem:[%s1 + $0x358] sm:$0xff]
      %v432 = vld [vmem:[%s1 + $0x360] sm:$0xff]
      %v433 = vld [vmem:[%s1 + $0x368] sm:$0xff]
      %v434 = vld [vmem:[%s1 + $0x370] sm:$0xff]
      %v435 = vld [vmem:[%s1 + $0x378] sm:$0xff]
      %v436 = vld [vmem:[%s1 + $0x380] sm:$0xff]
      %v437 = vld [vmem:[%s1 + $0x388] sm:$0xff]
      %v438 = vld [vmem:[%s1 + $0x390] sm:$0xff]
      %v439 = vld [vmem:[%s1 + $0x398] sm:$0xff]
      %v440 = vld [vmem:[%s1 + $0x3a0] sm:$0xff]
      %v441 = vld [vmem:[%s1 + $0x3a8] sm:$0xff]
      %v442 = vld [vmem:[%s1 + $0x3b0] sm:$0xff]
      %v443 = vld [vmem:[%s1 + $0x3b8] sm:$0xff]
      %v444 = vld [vmem:[%s1 + $0x3c0] sm:$0xff]
      %v445 = vld [vmem:[%s1 + $0x3c8] sm:$0xff]
      %v446 = vld [vmem:[%s1 + $0x3d0] sm:$0xff]
      %v447 = vld [vmem:[%s1 + $0x3d8] sm:$0xff]
      %v448 = vld [vmem:[%s1 + $0x3e0] sm:$0xff]
      %v449 = vld [vmem:[%s1 + $0x3e8] sm:$0xff]
      %v450 = vld [vmem:[%s1 + $0x3f0] sm:$0xff]
      %v451 = vld [vmem:[%s1 + $0x3f8] sm:$0xff]
      %v452 = vld [vmem:[%s1 + $0x400] sm:$0xff]
      %v453 = vld [vmem:[%s1 + $0x408] sm:$0xff]
      %v454 = vld [vmem:[%s1 + $0x410] sm:$0xff]
      %v455 = vld [vmem:[%s1 + $0x418] sm:$0xff]
      %v456 = vld [vmem:[%s1 + $0x420] sm:$0xff]
      %v457 = vld [vmem:[%s1 + $0x428] sm:$0xff]
      %v458 = vld [vmem:[%s1 + $0x430] sm:$0xff]
      %v459 = vld [vmem:[%s1 + $0x438] sm:$0xff]
      %v460 = vld [vmem:[%s1 + $0x440] sm:$0xff]
      %v461 = vld [vmem:[%s1 + $0x448] sm:$0xff]
      %v462 = vld [vmem:[%s1 + $0x450] sm:$0xff]
      %v463 = vld [vmem:[%s1 + $0x458] sm:$0xff]
      %v464 = vld [vmem:[%s1 + $0x460] sm:$0xff]
      %v465 = vld [vmem:[%s1 + $0x468] sm:$0xff]
      %v466 = vld [vmem:[%s1 + $0x470] sm:$0xff]
      %v467 = vld [vmem:[%s1 + $0x478] sm:$0xff]
      %v468 = vld [vmem:[%s1 + $0x480] sm:$0xff]
      %v469 = vld [vmem:[%s1 + $0x488] sm:$0xff]
      %v470 = vld [vmem:[%s1 + $0x490] sm:$0xff]
      %v471 = vld [vmem:[%s1 + $0x498] sm:$0xff]
      %v472 = vld [vmem:[%s1 + $0x4a0] sm:$0xff]
      %v473 = vld [vmem:[%s1 + $0x4a8] sm:$0xff]
      %v474 = vld [vmem:[%s1 + $0x4b0] sm:$0xff]
      %v475 = vld [vmem:[%s1 + $0x4b8] sm:$0xff]
      %v476 = vld [vmem:[%s1 + $0x4c0] sm:$0xff]
      %v477 = vld [vmem:[%s1 + $0x4c8] sm:$0xff]
      %v478 = vld [vmem:[%s1 + $0x4d0] sm:$0xff]
      %v479 = vld [vmem:[%s1 + $0x4d8] sm:$0xff]
      %v480 = vld [vmem:[%s1 + $0x4e0] sm:$0xff]
      %v481 = vld [vmem:[%s1 + $0x4e8] sm:$0xff]
      %v482 = vld [vmem:[%s1 + $0x4f0] sm:$0xff]
      %v483 = vld [vmem:[%s1 + $0x4f8] sm:$0xff]
      %v484 = vld [vmem:[%s1 + $0x500] sm:$0xff]
      %v485 = vld [vmem:[%s1 + $0x508] sm:$0xff]
      %v486 = vld [vmem:[%s1 + $0x510] sm:$0xff]
      %v487 = vld [vmem:[%s1 + $0x518] sm:$0xff]
      %v488 = vld [vmem:[%s1 + $0x520] sm:$0xff]
      %v489 = vld [vmem:[%s1 + $0x528] sm:$0xff]
      %v490 = vld [vmem:[%s1 + $0x530] sm:$0xff]
      %v491 = vld [vmem:[%s1 + $0x538] sm:$0xff]
      %v492 = vld [vmem:[%s1 + $0x540] sm:$0xff]
      %v493 = vld [vmem:[%s1 + $0x548] sm:$0xff]
      %v494 = vld [vmem:[%s1 + $0x550] sm:$0xff]
      %v495 = vld [vmem:[%s1 + $0x558] sm:$0xff]
      %v496 = vld [vmem:[%s1 + $0x560] sm:$0xff]
      %v497 = vld [vmem:[%s1 + $0x568] sm:$0xff]
      %v498 = vld [vmem:[%s1 + $0x570] sm:$0xff]
      %v499 = vld [vmem:[%s1 + $0x578] sm:$0xff]
      %v500 = vld [vmem:[%s1 + $0x580] sm:$0xff]
      %v501 = vld [vmem:[%s1 + $0x588] sm:$0xff]
      %v502 = vld [vmem:[%s1 + $0x590] sm:$0xff]
      %v503 = vld [vmem:[%s1 + $0x598] sm:$0xff]
      %v504 = vld [vmem:[%s1 + $0x5a0] sm:$0xff]
      %v505 = vld [vmem:[%s1 + $0x5a8] sm:$0xff]
      %v506 = vld [vmem:[%s1 + $0x5b0] sm:$0xff]
      %v507 = vld [vmem:[%s1 + $0x5b8] sm:$0xff]
      %v508 = vld [vmem:[%s1 + $0x5c0] sm:$0xff]
      %v509 = vld [vmem:[%s1 + $0x5c8] sm:$0xff]
      %v510 = vld [vmem:[%s1 + $0x5d0] sm:$0xff]
      %v511 = vld [vmem:[%s1 + $0x5d8] sm:$0xff]
      %v512 = vld [vmem:[%s1 + $0x5e0] sm:$0xff]
      %v513 = vld [vmem:[%s1 + $0x5e8] sm:$0xff]
      %v514 = vld [vmem:[%s1 + $0x5f0] sm:$0xff]
      %v515 = vld [vmem:[%s1 + $0x5f8] sm:$0xff]
      %v516 = vld [vmem:[%s1 + $0x600] sm:$0xff]
      %v517 = vld [vmem:[%s1 + $0x608] sm:$0xff]
      %v518 = vld [vmem:[%s1 + $0x610] sm:$0xff]
      %v519 = vld [vmem:[%s1 + $0x618] sm:$0xff]
      %v520 = vld [vmem:[%s1 + $0x620] sm:$0xff]
      %v521 = vld [vmem:[%s1 + $0x628] sm:$0xff]
      %v522 = vld [vmem:[%s1 + $0x630] sm:$0xff]
      %v523 = vld [vmem:[%s1 + $0x638] sm:$0xff]
      %v524 = vld [vmem:[%s1 + $0x640] sm:$0x33]
      %v525 = vld [vmem:[%s1 + $0x648] sm:$0x33]
      %v526 = vld [vmem:[%s1 + $0x650] sm:$0x33]
      %v527 = vld [vmem:[%s1 + $0x658] sm:$0x33]
      %v528 = vld [vmem:[%s1 + $0x660] sm:$0x33]
      %v531 = vunpack.c.l.b16 %v322
      %v532 = vunpack.c.h.b16 %v322
      %v533 = vunpack.c.l.b16 %v323
      %v534 = vpack.c.b16 %v531, %v531
      %v535 = vpack.c.b16 %v532, %v532
      %v536 = vpack.c.b16 %v533, %v533
      %v744 = vunpack.c.l.b16 %v324
      %v745 = vunpack.c.h.b16 %v324
      %v746 = vunpack.c.l.b16 %v325
      %v747 = vunpack.c.h.b16 %v325
      %v748 = vunpack.c.l.b16 %v326
      %v749 = vunpack.c.h.b16 %v326
      %v750 = vunpack.c.l.b16 %v327
      %v751 = vunpack.c.h.b16 %v327
      %v752 = vunpack.c.l.b16 %v328
      %v753 = vunpack.c.h.b16 %v328
      %v754 = vunpack.c.l.b16 %v329
      %v755 = vunpack.c.h.b16 %v329
      %v756 = vunpack.c.l.b16 %v330
      %v757 = vunpack.c.h.b16 %v330
      %v758 = vunpack.c.l.b16 %v331
      %v759 = vunpack.c.h.b16 %v331
      %v760 = vunpack.c.l.b16 %v332
      %v761 = vunpack.c.h.b16 %v332
      %v762 = vunpack.c.l.b16 %v333
      %v763 = vunpack.c.h.b16 %v333
      %v764 = vunpack.c.l.b16 %v334
      %v765 = vunpack.c.h.b16 %v334
      %v766 = vunpack.c.l.b16 %v335
      %v767 = vunpack.c.h.b16 %v335
      %v768 = vunpack.c.l.b16 %v336
      %v769 = vunpack.c.h.b16 %v336
      %v770 = vunpack.c.l.b16 %v337
      %v771 = vunpack.c.h.b16 %v337
      %v772 = vunpack.c.l.b16 %v338
      %v773 = vunpack.c.h.b16 %v338
      %v774 = vunpack.c.l.b16 %v339
      %v775 = vunpack.c.h.b16 %v339
      %v776 = vunpack.c.l.b16 %v340
      %v777 = vunpack.c.h.b16 %v340
      %v778 = vunpack.c.l.b16 %v341
      %v779 = vunpack.c.h.b16 %v341
      %v780 = vunpack.c.l.b16 %v342
      %v781 = vunpack.c.h.b16 %v342
      %v782 = vunpack.c.l.b16 %v343
      %v783 = vunpack.c.h.b16 %v343
      %v784 = vunpack.c.l.b16 %v344
      %v785 = vunpack.c.h.b16 %v344
      %v786 = vunpack.c.l.b16 %v345
      %v787 = vunpack.c.h.b16 %v345
      %v788 = vunpack.c.l.b16 %v346
      %v789 = vunpack.c.h.b16 %v346
      %v790 = vunpack.c.l.b16 %v347
      %v791 = vunpack.c.h.b16 %v347
      %v792 = vunpack.c.l.b16 %v348
      %v793 = vunpack.c.h.b16 %v348
      %v794 = vunpack.c.l.b16 %v349
      %v795 = vunpack.c.h.b16 %v349
      %v796 = vunpack.c.l.b16 %v350
      %v797 = vunpack.c.h.b16 %v350
      %v798 = vunpack.c.l.b16 %v351
      %v799 = vunpack.c.h.b16 %v351
      %v800 = vunpack.c.l.b16 %v352
      %v801 = vunpack.c.h.b16 %v352
      %v802 = vunpack.c.l.b16 %v353
      %v803 = vunpack.c.h.b16 %v353
      %v804 = vunpack.c.l.b16 %v354
      %v805 = vunpack.c.h.b16 %v354
      %v806 = vunpack.c.l.b16 %v355
      %v807 = vunpack.c.h.b16 %v355
      %v808 = vunpack.c.l.b16 %v356
      %v809 = vunpack.c.h.b16 %v356
      %v810 = vunpack.c.l.b16 %v357
      %v811 = vunpack.c.h.b16 %v357
      %v812 = vunpack.c.l.b16 %v358
      %v813 = vunpack.c.h.b16 %v358
      %v814 = vunpack.c.l.b16 %v359
      %v815 = vunpack.c.h.b16 %v359
      %v816 = vunpack.c.l.b16 %v360
      %v817 = vunpack.c.h.b16 %v360
      %v818 = vunpack.c.l.b16 %v361
      %v819 = vunpack.c.h.b16 %v361
      %v820 = vunpack.c.l.b16 %v362
      %v821 = vunpack.c.h.b16 %v362
      %v822 = vunpack.c.l.b16 %v363
      %v823 = vunpack.c.h.b16 %v363
      %v824 = vunpack.c.l.b16 %v364
      %v825 = vunpack.c.h.b16 %v364
      %v826 = vunpack.c.l.b16 %v365
      %v827 = vunpack.c.h.b16 %v365
      %v828 = vunpack.c.l.b16 %v366
      %v829 = vunpack.c.h.b16 %v366
      %v830 = vunpack.c.l.b16 %v367
      %v831 = vunpack.c.h.b16 %v367
      %v832 = vunpack.c.l.b16 %v368
      %v833 = vunpack.c.h.b16 %v368
      %v834 = vunpack.c.l.b16 %v369
      %v835 = vunpack.c.h.b16 %v369
      %v836 = vunpack.c.l.b16 %v370
      %v837 = vunpack.c.h.b16 %v370
      %v838 = vunpack.c.l.b16 %v371
      %v839 = vunpack.c.h.b16 %v371
      %v840 = vunpack.c.l.b16 %v372
      %v841 = vunpack.c.h.b16 %v372
      %v842 = vunpack.c.l.b16 %v373
      %v843 = vunpack.c.h.b16 %v373
      %v844 = vunpack.c.l.b16 %v374
      %v845 = vunpack.c.h.b16 %v374
      %v846 = vunpack.c.l.b16 %v375
      %v847 = vunpack.c.h.b16 %v375
      %v848 = vunpack.c.l.b16 %v376
      %v849 = vunpack.c.h.b16 %v376
      %v850 = vunpack.c.l.b16 %v377
      %v851 = vunpack.c.h.b16 %v377
      %v852 = vunpack.c.l.b16 %v378
      %v853 = vunpack.c.h.b16 %v378
      %v854 = vunpack.c.l.b16 %v379
      %v855 = vunpack.c.h.b16 %v379
      %v856 = vunpack.c.l.b16 %v380
      %v857 = vunpack.c.h.b16 %v380
      %v858 = vunpack.c.l.b16 %v381
      %v859 = vunpack.c.h.b16 %v381
      %v860 = vunpack.c.l.b16 %v382
      %v861 = vunpack.c.h.b16 %v382
      %v862 = vunpack.c.l.b16 %v383
      %v863 = vunpack.c.h.b16 %v383
      %v864 = vunpack.c.l.b16 %v384
      %v865 = vunpack.c.h.b16 %v384
      %v866 = vunpack.c.l.b16 %v385
      %v867 = vunpack.c.h.b16 %v385
      %v868 = vunpack.c.l.b16 %v386
      %v869 = vunpack.c.h.b16 %v386
      %v870 = vunpack.c.l.b16 %v387
      %v871 = vunpack.c.h.b16 %v387
      %v872 = vunpack.c.l.b16 %v388
      %v873 = vunpack.c.h.b16 %v388
      %v874 = vunpack.c.l.b16 %v389
      %v875 = vunpack.c.h.b16 %v389
      %v876 = vunpack.c.l.b16 %v390
      %v877 = vunpack.c.h.b16 %v390
      %v878 = vunpack.c.l.b16 %v391
      %v879 = vunpack.c.h.b16 %v391
      %v880 = vunpack.c.l.b16 %v392
      %v881 = vunpack.c.h.b16 %v392
      %v882 = vunpack.c.l.b16 %v393
      %v883 = vunpack.c.h.b16 %v393
      %v884 = vunpack.c.l.b16 %v394
      %v885 = vunpack.c.h.b16 %v394
      %v886 = vunpack.c.l.b16 %v395
      %v887 = vunpack.c.h.b16 %v395
      %v888 = vunpack.c.l.b16 %v396
      %v889 = vunpack.c.h.b16 %v396
      %v890 = vunpack.c.l.b16 %v397
      %v891 = vunpack.c.h.b16 %v397
      %v892 = vunpack.c.l.b16 %v398
      %v893 = vunpack.c.h.b16 %v398
      %v894 = vunpack.c.l.b16 %v399
      %v895 = vunpack.c.h.b16 %v399
      %v896 = vunpack.c.l.b16 %v400
      %v897 = vunpack.c.h.b16 %v400
      %v898 = vunpack.c.l.b16 %v401
      %v899 = vunpack.c.h.b16 %v401
      %v900 = vunpack.c.l.b16 %v402
      %v901 = vunpack.c.h.b16 %v402
      %v902 = vunpack.c.l.b16 %v403
      %v903 = vunpack.c.h.b16 %v403
      %v904 = vunpack.c.l.b16 %v404
      %v905 = vunpack.c.h.b16 %v404
      %v906 = vunpack.c.l.b16 %v405
      %v907 = vunpack.c.h.b16 %v405
      %v908 = vunpack.c.l.b16 %v406
      %v909 = vunpack.c.h.b16 %v406
      %v910 = vunpack.c.l.b16 %v407
      %v911 = vunpack.c.h.b16 %v407
      %v912 = vunpack.c.l.b16 %v408
      %v913 = vunpack.c.h.b16 %v408
      %v914 = vunpack.c.l.b16 %v409
      %v915 = vunpack.c.h.b16 %v409
      %v916 = vunpack.c.l.b16 %v410
      %v917 = vunpack.c.h.b16 %v410
      %v918 = vunpack.c.l.b16 %v411
      %v919 = vunpack.c.h.b16 %v411
      %v920 = vunpack.c.l.b16 %v412
      %v921 = vunpack.c.h.b16 %v412
      %v922 = vunpack.c.l.b16 %v413
      %v923 = vunpack.c.h.b16 %v413
      %v924 = vunpack.c.l.b16 %v414
      %v925 = vunpack.c.h.b16 %v414
      %v926 = vunpack.c.l.b16 %v415
      %v927 = vunpack.c.h.b16 %v415
      %v928 = vunpack.c.l.b16 %v416
      %v929 = vunpack.c.h.b16 %v416
      %v930 = vunpack.c.l.b16 %v417
      %v931 = vunpack.c.h.b16 %v417
      %v932 = vunpack.c.l.b16 %v418
      %v933 = vunpack.c.h.b16 %v418
      %v934 = vunpack.c.l.b16 %v419
      %v935 = vunpack.c.h.b16 %v419
      %v936 = vunpack.c.l.b16 %v420
      %v937 = vunpack.c.h.b16 %v420
      %v938 = vunpack.c.l.b16 %v421
      %v939 = vunpack.c.h.b16 %v421
      %v940 = vunpack.c.l.b16 %v422
      %v941 = vunpack.c.h.b16 %v422
      %v942 = vunpack.c.l.b16 %v423
      %v943 = vunpack.c.h.b16 %v423
      %v944 = vunpack.c.l.b16 %v424
      %v945 = vunpack.c.h.b16 %v424
      %v946 = vunpack.c.l.b16 %v425
      %v947 = vunpack.c.h.b16 %v425
      %v948 = vunpack.c.l.b16 %v426
      %v949 = vunpack.c.h.b16 %v426
      %v950 = vunpack.c.l.b16 %v427
      %v951 = vunpack.c.h.b16 %v427
      %v952 = vunpack.c.l.b16 %v428
      %v953 = vunpack.c.h.b16 %v428
      %v954 = vunpack.c.l.b16 %v429
      %v955 = vunpack.c.h.b16 %v429
      %v956 = vunpack.c.l.b16 %v430
      %v957 = vunpack.c.h.b16 %v430
      %v958 = vunpack.c.l.b16 %v431
      %v959 = vunpack.c.h.b16 %v431
      %v960 = vunpack.c.l.b16 %v432
      %v961 = vunpack.c.h.b16 %v432
      %v962 = vunpack.c.l.b16 %v433
      %v963 = vunpack.c.h.b16 %v433
      %v964 = vunpack.c.l.b16 %v434
      %v965 = vunpack.c.h.b16 %v434
      %v966 = vunpack.c.l.b16 %v435
      %v967 = vunpack.c.h.b16 %v435
      %v968 = vunpack.c.l.b16 %v436
      %v969 = vunpack.c.h.b16 %v436
      %v970 = vunpack.c.l.b16 %v437
      %v971 = vunpack.c.h.b16 %v437
      %v972 = vunpack.c.l.b16 %v438
      %v973 = vunpack.c.h.b16 %v438
      %v974 = vunpack.c.l.b16 %v439
      %v975 = vunpack.c.h.b16 %v439
      %v976 = vunpack.c.l.b16 %v440
      %v977 = vunpack.c.h.b16 %v440
      %v978 = vunpack.c.l.b16 %v441
      %v979 = vunpack.c.h.b16 %v441
      %v980 = vunpack.c.l.b16 %v442
      %v981 = vunpack.c.h.b16 %v442
      %v982 = vunpack.c.l.b16 %v443
      %v983 = vunpack.c.h.b16 %v443
      %v984 = vunpack.c.l.b16 %v444
      %v985 = vunpack.c.h.b16 %v444
      %v986 = vunpack.c.l.b16 %v445
      %v987 = vunpack.c.h.b16 %v445
      %v988 = vunpack.c.l.b16 %v446
      %v989 = vunpack.c.h.b16 %v446
      %v990 = vunpack.c.l.b16 %v447
      %v991 = vunpack.c.h.b16 %v447
      %v992 = vunpack.c.l.b16 %v448
      %v993 = vunpack.c.h.b16 %v448
      %v994 = vunpack.c.l.b16 %v449
      %v995 = vunpack.c.h.b16 %v449
      %v996 = vunpack.c.l.b16 %v450
      %v997 = vunpack.c.h.b16 %v450
      %v998 = vunpack.c.l.b16 %v451
      %v999 = vunpack.c.h.b16 %v451
      %v1000 = vunpack.c.l.b16 %v452
      %v1001 = vunpack.c.h.b16 %v452
      %v1002 = vunpack.c.l.b16 %v453
      %v1003 = vunpack.c.h.b16 %v453
      %v1004 = vunpack.c.l.b16 %v454
      %v1005 = vunpack.c.h.b16 %v454
      %v1006 = vunpack.c.l.b16 %v455
      %v1007 = vunpack.c.h.b16 %v455
      %v1008 = vunpack.c.l.b16 %v456
      %v1009 = vunpack.c.h.b16 %v456
      %v1010 = vunpack.c.l.b16 %v457
      %v1011 = vunpack.c.h.b16 %v457
      %v1012 = vunpack.c.l.b16 %v458
      %v1013 = vunpack.c.h.b16 %v458
      %v1014 = vunpack.c.l.b16 %v459
      %v1015 = vunpack.c.h.b16 %v459
      %v1016 = vunpack.c.l.b16 %v460
      %v1017 = vunpack.c.h.b16 %v460
      %v1018 = vunpack.c.l.b16 %v461
      %v1019 = vunpack.c.h.b16 %v461
      %v1020 = vunpack.c.l.b16 %v462
      %v1021 = vunpack.c.h.b16 %v462
      %v1022 = vunpack.c.l.b16 %v463
      %v1023 = vunpack.c.h.b16 %v463
      %v1024 = vunpack.c.l.b16 %v464
      %v1025 = vunpack.c.h.b16 %v464
      %v1026 = vunpack.c.l.b16 %v465
      %v1027 = vunpack.c.h.b16 %v465
      %v1028 = vunpack.c.l.b16 %v466
      %v1029 = vunpack.c.h.b16 %v466
      %v1030 = vunpack.c.l.b16 %v467
      %v1031 = vunpack.c.h.b16 %v467
      %v1032 = vunpack.c.l.b16 %v468
      %v1033 = vunpack.c.h.b16 %v468
      %v1034 = vunpack.c.l.b16 %v469
      %v1035 = vunpack.c.h.b16 %v469
      %v1036 = vunpack.c.l.b16 %v470
      %v1037 = vunpack.c.h.b16 %v470
      %v1038 = vunpack.c.l.b16 %v471
      %v1039 = vunpack.c.h.b16 %v471
      %v1040 = vunpack.c.l.b16 %v472
      %v1041 = vunpack.c.h.b16 %v472
      %v1042 = vunpack.c.l.b16 %v473
      %v1043 = vunpack.c.h.b16 %v473
      %v1044 = vunpack.c.l.b16 %v474
      %v1045 = vunpack.c.h.b16 %v474
      %v1046 = vunpack.c.l.b16 %v475
      %v1047 = vunpack.c.h.b16 %v475
      %v1048 = vunpack.c.l.b16 %v476
      %v1049 = vunpack.c.h.b16 %v476
      %v1050 = vunpack.c.l.b16 %v477
      %v1051 = vunpack.c.h.b16 %v477
      %v1052 = vunpack.c.l.b16 %v478
      %v1053 = vunpack.c.h.b16 %v478
      %v1054 = vunpack.c.l.b16 %v479
      %v1055 = vunpack.c.h.b16 %v479
      %v1056 = vunpack.c.l.b16 %v480
      %v1057 = vunpack.c.h.b16 %v480
      %v1058 = vunpack.c.l.b16 %v481
      %v1059 = vunpack.c.h.b16 %v481
      %v1060 = vunpack.c.l.b16 %v482
      %v1061 = vunpack.c.h.b16 %v482
      %v1062 = vunpack.c.l.b16 %v483
      %v1063 = vunpack.c.h.b16 %v483
      %v1064 = vunpack.c.l.b16 %v484
      %v1065 = vunpack.c.h.b16 %v484
      %v1066 = vunpack.c.l.b16 %v485
      %v1067 = vunpack.c.h.b16 %v485
      %v1068 = vunpack.c.l.b16 %v486
      %v1069 = vunpack.c.h.b16 %v486
      %v1070 = vunpack.c.l.b16 %v487
      %v1071 = vunpack.c.h.b16 %v487
      %v1072 = vunpack.c.l.b16 %v488
      %v1073 = vunpack.c.h.b16 %v488
      %v1074 = vunpack.c.l.b16 %v489
      %v1075 = vunpack.c.h.b16 %v489
      %v1076 = vunpack.c.l.b16 %v490
      %v1077 = vunpack.c.h.b16 %v490
      %v1078 = vunpack.c.l.b16 %v491
      %v1079 = vunpack.c.h.b16 %v491
      %v1080 = vunpack.c.l.b16 %v492
      %v1081 = vunpack.c.h.b16 %v492
      %v1082 = vunpack.c.l.b16 %v493
      %v1083 = vunpack.c.h.b16 %v493
      %v1084 = vunpack.c.l.b16 %v494
      %v1085 = vunpack.c.h.b16 %v494
      %v1086 = vunpack.c.l.b16 %v495
      %v1087 = vunpack.c.h.b16 %v495
      %v1088 = vunpack.c.l.b16 %v496
      %v1089 = vunpack.c.h.b16 %v496
      %v1090 = vunpack.c.l.b16 %v497
      %v1091 = vunpack.c.h.b16 %v497
      %v1092 = vunpack.c.l.b16 %v498
      %v1093 = vunpack.c.h.b16 %v498
      %v1094 = vunpack.c.l.b16 %v499
      %v1095 = vunpack.c.h.b16 %v499
      %v1096 = vunpack.c.l.b16 %v500
      %v1097 = vunpack.c.h.b16 %v500
      %v1098 = vunpack.c.l.b16 %v501
      %v1099 = vunpack.c.h.b16 %v501
      %v1100 = vunpack.c.l.b16 %v502
      %v1101 = vunpack.c.h.b16 %v502
      %v1102 = vunpack.c.l.b16 %v503
      %v1103 = vunpack.c.h.b16 %v503
      %v1104 = vunpack.c.l.b16 %v504
      %v1105 = vunpack.c.h.b16 %v504
      %v1106 = vunpack.c.l.b16 %v505
      %v1107 = vunpack.c.h.b16 %v505
      %v1108 = vunpack.c.l.b16 %v506
      %v1109 = vunpack.c.h.b16 %v506
      %v1110 = vunpack.c.l.b16 %v507
      %v1111 = vunpack.c.h.b16 %v507
      %v1112 = vunpack.c.l.b16 %v508
      %v1113 = vunpack.c.h.b16 %v508
      %v1114 = vunpack.c.l.b16 %v509
      %v1115 = vunpack.c.h.b16 %v509
      %v1116 = vunpack.c.l.b16 %v510
      %v1117 = vunpack.c.h.b16 %v510
      %v1118 = vunpack.c.l.b16 %v511
      %v1119 = vunpack.c.h.b16 %v511
      %v1120 = vunpack.c.l.b16 %v512
      %v1121 = vunpack.c.h.b16 %v512
      %v1122 = vunpack.c.l.b16 %v513
      %v1123 = vunpack.c.h.b16 %v513
      %v1124 = vunpack.c.l.b16 %v514
      %v1125 = vunpack.c.h.b16 %v514
      %v1126 = vunpack.c.l.b16 %v515
      %v1127 = vunpack.c.h.b16 %v515
      %v1128 = vunpack.c.l.b16 %v516
      %v1129 = vunpack.c.h.b16 %v516
      %v1130 = vunpack.c.l.b16 %v517
      %v1131 = vunpack.c.h.b16 %v517
      %v1132 = vunpack.c.l.b16 %v518
      %v1133 = vunpack.c.h.b16 %v518
      %v1134 = vunpack.c.l.b16 %v519
      %v1135 = vunpack.c.h.b16 %v519
      %v1136 = vunpack.c.l.b16 %v520
      %v1137 = vunpack.c.h.b16 %v520
      %v1138 = vunpack.c.l.b16 %v521
      %v1139 = vunpack.c.h.b16 %v521
      %v1140 = vunpack.c.l.b16 %v522
      %v1141 = vunpack.c.h.b16 %v522
      %v1142 = vunpack.c.l.b16 %v523
      %v1143 = vunpack.c.h.b16 %v523
      %v1144 = vunpack.c.l.b16 %v524
      %v1145 = vunpack.c.h.b16 %v524
      %v1146 = vunpack.c.l.b16 %v525
      %v1147 = vunpack.c.h.b16 %v525
      %v1148 = vunpack.c.l.b16 %v526
      %v1149 = vunpack.c.h.b16 %v526
      %v1150 = vunpack.c.l.b16 %v527
      %v1151 = vunpack.c.h.b16 %v527
      %v1152 = vunpack.c.l.b16 %v528
      %v1153 = vunpack.c.h.b16 %v528
      %v1154 = vpack.c.b16 %v754, %v744
      %v1155 = vpack.c.b16 %v755, %v745
      %v1156 = vpack.c.b16 %v756, %v746
      %v1157 = vpack.c.b16 %v757, %v747
      %v1158 = vpack.c.b16 %v758, %v748
      %v1159 = vpack.c.b16 %v759, %v749
      %v1160 = vpack.c.b16 %v760, %v750
      %v1161 = vpack.c.b16 %v761, %v751
      %v1162 = vpack.c.b16 %v762, %v752
      %v1163 = vpack.c.b16 %v763, %v753
      %v1164 = vpack.c.b16 %v774, %v764
      %v1165 = vpack.c.b16 %v775, %v765
      %v1166 = vpack.c.b16 %v776, %v766
      %v1167 = vpack.c.b16 %v777, %v767
      %v1168 = vpack.c.b16 %v778, %v768
      %v1169 = vpack.c.b16 %v779, %v769
      %v1170 = vpack.c.b16 %v780, %v770
      %v1171 = vpack.c.b16 %v781, %v771
      %v1172 = vpack.c.b16 %v782, %v772
      %v1173 = vpack.c.b16 %v783, %v773
      %v1174 = vpack.c.b16 %v794, %v784
      %v1175 = vpack.c.b16 %v795, %v785
      %v1176 = vpack.c.b16 %v796, %v786
      %v1177 = vpack.c.b16 %v797, %v787
      %v1178 = vpack.c.b16 %v798, %v788
      %v1179 = vpack.c.b16 %v799, %v789
      %v1180 = vpack.c.b16 %v800, %v790
      %v1181 = vpack.c.b16 %v801, %v791
      %v1182 = vpack.c.b16 %v802, %v792
      %v1183 = vpack.c.b16 %v803, %v793
      %v1184 = vpack.c.b16 %v814, %v804
      %v1185 = vpack.c.b16 %v815, %v805
      %v1186 = vpack.c.b16 %v816, %v806
      %v1187 = vpack.c.b16 %v817, %v807
      %v1188 = vpack.c.b16 %v818, %v808
      %v1189 = vpack.c.b16 %v819, %v809
      %v1190 = vpack.c.b16 %v820, %v810
      %v1191 = vpack.c.b16 %v821, %v811
      %v1192 = vpack.c.b16 %v822, %v812
      %v1193 = vpack.c.b16 %v823, %v813
      %v1194 = vpack.c.b16 %v834, %v824
      %v1195 = vpack.c.b16 %v835, %v825
      %v1196 = vpack.c.b16 %v836, %v826
      %v1197 = vpack.c.b16 %v837, %v827
      %v1198 = vpack.c.b16 %v838, %v828
      %v1199 = vpack.c.b16 %v839, %v829
      %v1200 = vpack.c.b16 %v840, %v830
      %v1201 = vpack.c.b16 %v841, %v831
      %v1202 = vpack.c.b16 %v842, %v832
      %v1203 = vpack.c.b16 %v843, %v833
      %v1204 = vpack.c.b16 %v854, %v844
      %v1205 = vpack.c.b16 %v855, %v845
      %v1206 = vpack.c.b16 %v856, %v846
      %v1207 = vpack.c.b16 %v857, %v847
      %v1208 = vpack.c.b16 %v858, %v848
      %v1209 = vpack.c.b16 %v859, %v849
      %v1210 = vpack.c.b16 %v860, %v850
      %v1211 = vpack.c.b16 %v861, %v851
      %v1212 = vpack.c.b16 %v862, %v852
      %v1213 = vpack.c.b16 %v863, %v853
      %v1214 = vpack.c.b16 %v874, %v864
      %v1215 = vpack.c.b16 %v875, %v865
      %v1216 = vpack.c.b16 %v876, %v866
      %v1217 = vpack.c.b16 %v877, %v867
      %v1218 = vpack.c.b16 %v878, %v868
      %v1219 = vpack.c.b16 %v879, %v869
      %v1220 = vpack.c.b16 %v880, %v870
      %v1221 = vpack.c.b16 %v881, %v871
      %v1222 = vpack.c.b16 %v882, %v872
      %v1223 = vpack.c.b16 %v883, %v873
      %v1224 = vpack.c.b16 %v894, %v884
      %v1225 = vpack.c.b16 %v895, %v885
      %v1226 = vpack.c.b16 %v896, %v886
      %v1227 = vpack.c.b16 %v897, %v887
      %v1228 = vpack.c.b16 %v898, %v888
      %v1229 = vpack.c.b16 %v899, %v889
      %v1230 = vpack.c.b16 %v900, %v890
      %v1231 = vpack.c.b16 %v901, %v891
      %v1232 = vpack.c.b16 %v902, %v892
      %v1233 = vpack.c.b16 %v903, %v893
      %v1234 = vpack.c.b16 %v914, %v904
      %v1235 = vpack.c.b16 %v915, %v905
      %v1236 = vpack.c.b16 %v916, %v906
      %v1237 = vpack.c.b16 %v917, %v907
      %v1238 = vpack.c.b16 %v918, %v908
      %v1239 = vpack.c.b16 %v919, %v909
      %v1240 = vpack.c.b16 %v920, %v910
      %v1241 = vpack.c.b16 %v921, %v911
      %v1242 = vpack.c.b16 %v922, %v912
      %v1243 = vpack.c.b16 %v923, %v913
      %v1244 = vpack.c.b16 %v934, %v924
      %v1245 = vpack.c.b16 %v935, %v925
      %v1246 = vpack.c.b16 %v936, %v926
      %v1247 = vpack.c.b16 %v937, %v927
      %v1248 = vpack.c.b16 %v938, %v928
      %v1249 = vpack.c.b16 %v939, %v929
      %v1250 = vpack.c.b16 %v940, %v930
      %v1251 = vpack.c.b16 %v941, %v931
      %v1252 = vpack.c.b16 %v942, %v932
      %v1253 = vpack.c.b16 %v943, %v933
      %v1254 = vpack.c.b16 %v954, %v944
      %v1255 = vpack.c.b16 %v955, %v945
      %v1256 = vpack.c.b16 %v956, %v946
      %v1257 = vpack.c.b16 %v957, %v947
      %v1258 = vpack.c.b16 %v958, %v948
      %v1259 = vpack.c.b16 %v959, %v949
      %v1260 = vpack.c.b16 %v960, %v950
      %v1261 = vpack.c.b16 %v961, %v951
      %v1262 = vpack.c.b16 %v962, %v952
      %v1263 = vpack.c.b16 %v963, %v953
      %v1264 = vpack.c.b16 %v974, %v964
      %v1265 = vpack.c.b16 %v975, %v965
      %v1266 = vpack.c.b16 %v976, %v966
      %v1267 = vpack.c.b16 %v977, %v967
      %v1268 = vpack.c.b16 %v978, %v968
      %v1269 = vpack.c.b16 %v979, %v969
      %v1270 = vpack.c.b16 %v980, %v970
      %v1271 = vpack.c.b16 %v981, %v971
      %v1272 = vpack.c.b16 %v982, %v972
      %v1273 = vpack.c.b16 %v983, %v973
      %v1274 = vpack.c.b16 %v994, %v984
      %v1275 = vpack.c.b16 %v995, %v985
      %v1276 = vpack.c.b16 %v996, %v986
      %v1277 = vpack.c.b16 %v997, %v987
      %v1278 = vpack.c.b16 %v998, %v988
      %v1279 = vpack.c.b16 %v999, %v989
      %v1280 = vpack.c.b16 %v1000, %v990
      %v1281 = vpack.c.b16 %v1001, %v991
      %v1282 = vpack.c.b16 %v1002, %v992
      %v1283 = vpack.c.b16 %v1003, %v993
      %v1284 = vpack.c.b16 %v1014, %v1004
      %v1285 = vpack.c.b16 %v1015, %v1005
      %v1286 = vpack.c.b16 %v1016, %v1006
      %v1287 = vpack.c.b16 %v1017, %v1007
      %v1288 = vpack.c.b16 %v1018, %v1008
      %v1289 = vpack.c.b16 %v1019, %v1009
      %v1290 = vpack.c.b16 %v1020, %v1010
      %v1291 = vpack.c.b16 %v1021, %v1011
      %v1292 = vpack.c.b16 %v1022, %v1012
      %v1293 = vpack.c.b16 %v1023, %v1013
      %v1294 = vpack.c.b16 %v1034, %v1024
      %v1295 = vpack.c.b16 %v1035, %v1025
      %v1296 = vpack.c.b16 %v1036, %v1026
      %v1297 = vpack.c.b16 %v1037, %v1027
      %v1298 = vpack.c.b16 %v1038, %v1028
      %v1299 = vpack.c.b16 %v1039, %v1029
      %v1300 = vpack.c.b16 %v1040, %v1030
      %v1301 = vpack.c.b16 %v1041, %v1031
      %v1302 = vpack.c.b16 %v1042, %v1032
      %v1303 = vpack.c.b16 %v1043, %v1033
      %v1304 = vpack.c.b16 %v1054, %v1044
      %v1305 = vpack.c.b16 %v1055, %v1045
      %v1306 = vpack.c.b16 %v1056, %v1046
      %v1307 = vpack.c.b16 %v1057, %v1047
      %v1308 = vpack.c.b16 %v1058, %v1048
      %v1309 = vpack.c.b16 %v1059, %v1049
      %v1310 = vpack.c.b16 %v1060, %v1050
      %v1311 = vpack.c.b16 %v1061, %v1051
      %v1312 = vpack.c.b16 %v1062, %v1052
      %v1313 = vpack.c.b16 %v1063, %v1053
      %v1314 = vpack.c.b16 %v1074, %v1064
      %v1315 = vpack.c.b16 %v1075, %v1065
      %v1316 = vpack.c.b16 %v1076, %v1066
      %v1317 = vpack.c.b16 %v1077, %v1067
      %v1318 = vpack.c.b16 %v1078, %v1068
      %v1319 = vpack.c.b16 %v1079, %v1069
      %v1320 = vpack.c.b16 %v1080, %v1070
      %v1321 = vpack.c.b16 %v1081, %v1071
      %v1322 = vpack.c.b16 %v1082, %v1072
      %v1323 = vpack.c.b16 %v1083, %v1073
      %v1324 = vpack.c.b16 %v1094, %v1084
      %v1325 = vpack.c.b16 %v1095, %v1085
      %v1326 = vpack.c.b16 %v1096, %v1086
      %v1327 = vpack.c.b16 %v1097, %v1087
      %v1328 = vpack.c.b16 %v1098, %v1088
      %v1329 = vpack.c.b16 %v1099, %v1089
      %v1330 = vpack.c.b16 %v1100, %v1090
      %v1331 = vpack.c.b16 %v1101, %v1091
      %v1332 = vpack.c.b16 %v1102, %v1092
      %v1333 = vpack.c.b16 %v1103, %v1093
      %v1334 = vpack.c.b16 %v1114, %v1104
      %v1335 = vpack.c.b16 %v1115, %v1105
      %v1336 = vpack.c.b16 %v1116, %v1106
      %v1337 = vpack.c.b16 %v1117, %v1107
      %v1338 = vpack.c.b16 %v1118, %v1108
      %v1339 = vpack.c.b16 %v1119, %v1109
      %v1340 = vpack.c.b16 %v1120, %v1110
      %v1341 = vpack.c.b16 %v1121, %v1111
      %v1342 = vpack.c.b16 %v1122, %v1112
      %v1343 = vpack.c.b16 %v1123, %v1113
      %v1344 = vpack.c.b16 %v1134, %v1124
      %v1345 = vpack.c.b16 %v1135, %v1125
      %v1346 = vpack.c.b16 %v1136, %v1126
      %v1347 = vpack.c.b16 %v1137, %v1127
      %v1348 = vpack.c.b16 %v1138, %v1128
      %v1349 = vpack.c.b16 %v1139, %v1129
      %v1350 = vpack.c.b16 %v1140, %v1130
      %v1351 = vpack.c.b16 %v1141, %v1131
      %v1352 = vpack.c.b16 %v1142, %v1132
      %v1353 = vpack.c.b16 %v1143, %v1133
      %v1354 = vpack.c.b16 %v1144, %v1144
      %v1355 = vpack.c.b16 %v1145, %v1145
      %v1356 = vpack.c.b16 %v1146, %v1146
      %v1357 = vpack.c.b16 %v1147, %v1147
      %v1358 = vpack.c.b16 %v1148, %v1148
      %v1359 = vpack.c.b16 %v1149, %v1149
      %v1360 = vpack.c.b16 %v1150, %v1150
      %v1361 = vpack.c.b16 %v1151, %v1151
      %v1362 = vpack.c.b16 %v1152, %v1152
      %v1363 = vpack.c.b16 %v1153, %v1153
      %vm1564 = vcmask 556032
      %v1566 = vsel %vm1564, %v536, 0
      %vm1568 = vcmask 1041408
      %v1570 = vsel %vm1568, %v1354, 0
      %v1573 = vsel %vm1568, %v1355, 0
      %v1576 = vsel %vm1568, %v1356, 0
      %v1579 = vsel %vm1568, %v1357, 0
      %v1582 = vsel %vm1568, %v1358, 0
      %v1585 = vsel %vm1568, %v1359, 0
      %v1588 = vsel %vm1568, %v1360, 0
      %v1591 = vsel %vm1568, %v1361, 0
      %v1594 = vsel %vm1568, %v1362, 0
      %v1597 = vsel %vm1568, %v1363, 0
      %1599 = vmatprep.subr.bf16.mxu0 %v1225
      %1600 = vmatpush1.bf16.msra.mxu0 %v1224
      %1601 = vmatprep.subr.bf16.mxu0 %v1215
      %1602 = vmatpush1.bf16.msra.mxu0 %v1214
      %1603 = vmatprep.subr.bf16.mxu0 %v1205
      %1604 = vmatpush1.bf16.msra.mxu0 %v1204
      %1605 = vmatprep.subr.bf16.mxu0 %v1195
      %1606 = vmatpush1.bf16.msra.mxu0 %v1194
      %1607 = vmatprep.subr.bf16.mxu0 %v1185
      %1608 = vmatpush1.bf16.msra.mxu0 %v1184
      %1609 = vmatprep.subr.bf16.mxu0 %v1175
      %1610 = vmatpush1.bf16.msra.mxu0 %v1174
      %1611 = vmatprep.subr.bf16.mxu0 %v1165
      %1612 = vmatpush1.bf16.msra.mxu0 %v1164
      %1613 = vmatprep.subr.bf16.mxu0 %v1155
      %1614 = vmatpush1.bf16.msra.mxu0 %v1154
      %1615 = vmatprep.subr.bf16.mxu0 %v1305
      %1616 = vmatpush2.bf16.msra.mxu0 %v1304
      %1617 = vmatprep.subr.bf16.mxu0 %v1295
      %1618 = vmatpush2.bf16.msra.mxu0 %v1294
      %1619 = vmatprep.subr.bf16.mxu0 %v1285
      %1620 = vmatpush2.bf16.msra.mxu0 %v1284
      %1621 = vmatprep.subr.bf16.mxu0 %v1275
      %1622 = vmatpush2.bf16.msra.mxu0 %v1274
      %1623 = vmatprep.subr.bf16.mxu0 %v1265
      %1624 = vmatpush2.bf16.msra.mxu0 %v1264
      %1625 = vmatprep.subr.bf16.mxu0 %v1255
      %1626 = vmatpush2.bf16.msra.mxu0 %v1254
      %1627 = vmatprep.subr.bf16.mxu0 %v1245
      %1628 = vmatpush2.bf16.msra.mxu0 %v1244
      %1629 = vmatprep.subr.bf16.mxu0 %v1235
      %1630 = vmatpush2.bf16.msra.mxu0 %v1234
      %1631 = vmatprep.mubr.bf16.mxu0 %v535
      %1632 = vmatmul.mubr.bf16.gmra.mxu0 %v534
      %v1633 = vpop.f32.mrf.mxu0
      %v1634 = vadd.f32 0.0, %v1633
      %v1635 = vpop.f32.mrf.mxu0
      %v1636 = vadd.f32 0.0, %v1635
      %v1637 = vpop.f32.mrf.mxu0
      %v1638 = vpop.f32.mrf.mxu0
      %1639 = vdwg.mxu0
      %1640 = vmatprep.subr.bf16.mxu0 0
      %1641 = vmatpush1.bf16.msra.mxu0 0
      %1642 = vmatprep.subr.bf16.mxu0 0
      %1643 = vmatpush1.bf16.msra.mxu0 0
      %1644 = vmatprep.subr.bf16.mxu0 0
      %1645 = vmatpush1.bf16.msra.mxu0 0
      %1646 = vmatprep.subr.bf16.mxu0 %v1573
      %1647 = vmatpush1.bf16.msra.mxu0 %v1570
      %1648 = vmatprep.subr.bf16.mxu0 %v1345
      %1649 = vmatpush1.bf16.msra.mxu0 %v1344
      %1650 = vmatprep.subr.bf16.mxu0 %v1335
      %1651 = vmatpush1.bf16.msra.mxu0 %v1334
      %1652 = vmatprep.subr.bf16.mxu0 %v1325
      %1653 = vmatpush1.bf16.msra.mxu0 %v1324
      %1654 = vmatprep.subr.bf16.mxu0 %v1315
      %1655 = vmatpush1.bf16.msra.mxu0 %v1314
      %1656 = vmatprep.subr.bf16.mxu0 0
      %1657 = vmatpush2.bf16.msra.mxu0 0
      %1658 = vmatprep.subr.bf16.mxu0 0
      %1659 = vmatpush2.bf16.msra.mxu0 0
      %1660 = vmatprep.subr.bf16.mxu0 0
      %1661 = vmatpush2.bf16.msra.mxu0 0
      %1662 = vmatprep.subr.bf16.mxu0 0
      %1663 = vmatpush2.bf16.msra.mxu0 0
      %1664 = vmatprep.subr.bf16.mxu0 0
      %1665 = vmatpush2.bf16.msra.mxu0 0
      %1666 = vmatprep.subr.bf16.mxu0 0
      %1667 = vmatpush2.bf16.msra.mxu0 0
      %1668 = vmatprep.subr.bf16.mxu0 0
      %1669 = vmatpush2.bf16.msra.mxu0 0
      %1670 = vmatprep.subr.bf16.mxu0 0
      %1671 = vmatpush2.bf16.msra.mxu0 0
      %1672 = vmatprep.mubr.bf16.mxu0 0
      %1673 = vmatmul.mubr.bf16.gmra.mxu0 %v1566
      %v1674 = vpop.f32.mrf.mxu0
      %v1675 = vadd.f32 %v1634, %v1674
      %v1676 = vpop.f32.mrf.mxu0
      %v1677 = vadd.f32 %v1636, %v1676
      %v1678 = vpop.f32.mrf.mxu0
      %v1679 = vpop.f32.mrf.mxu0
      %1680 = vdwg.mxu0
      %1681 = vmatprep.subr.bf16.mxu0 %v1227
      %1682 = vmatpush1.bf16.msra.mxu0 %v1226
      %1683 = vmatprep.subr.bf16.mxu0 %v1217
      %1684 = vmatpush1.bf16.msra.mxu0 %v1216
      %1685 = vmatprep.subr.bf16.mxu0 %v1207
      %1686 = vmatpush1.bf16.msra.mxu0 %v1206
      %1687 = vmatprep.subr.bf16.mxu0 %v1197
      %1688 = vmatpush1.bf16.msra.mxu0 %v1196
      %1689 = vmatprep.subr.bf16.mxu0 %v1187
      %1690 = vmatpush1.bf16.msra.mxu0 %v1186
      %1691 = vmatprep.subr.bf16.mxu0 %v1177
      %1692 = vmatpush1.bf16.msra.mxu0 %v1176
      %1693 = vmatprep.subr.bf16.mxu0 %v1167
      %1694 = vmatpush1.bf16.msra.mxu0 %v1166
      %1695 = vmatprep.subr.bf16.mxu0 %v1157
      %1696 = vmatpush1.bf16.msra.mxu0 %v1156
      %1697 = vmatprep.subr.bf16.mxu0 %v1307
      %1698 = vmatpush2.bf16.msra.mxu0 %v1306
      %1699 = vmatprep.subr.bf16.mxu0 %v1297
      %1700 = vmatpush2.bf16.msra.mxu0 %v1296
      %1701 = vmatprep.subr.bf16.mxu0 %v1287
      %1702 = vmatpush2.bf16.msra.mxu0 %v1286
      %1703 = vmatprep.subr.bf16.mxu0 %v1277
      %1704 = vmatpush2.bf16.msra.mxu0 %v1276
      %1705 = vmatprep.subr.bf16.mxu0 %v1267
      %1706 = vmatpush2.bf16.msra.mxu0 %v1266
      %1707 = vmatprep.subr.bf16.mxu0 %v1257
      %1708 = vmatpush2.bf16.msra.mxu0 %v1256
      %1709 = vmatprep.subr.bf16.mxu0 %v1247
      %1710 = vmatpush2.bf16.msra.mxu0 %v1246
      %1711 = vmatprep.subr.bf16.mxu0 %v1237
      %1712 = vmatpush2.bf16.msra.mxu0 %v1236
      %1713 = vmatprep.mubr.bf16.mxu0 %v535
      %1714 = vmatmul.mubr.bf16.gmra.mxu0 %v534
      %v1715 = vpop.f32.mrf.mxu0
      %v1716 = vadd.f32 0.0, %v1715
      %v1717 = vpop.f32.mrf.mxu0
      %v1718 = vadd.f32 0.0, %v1717
      %v1719 = vpop.f32.mrf.mxu0
      %v1720 = vpop.f32.mrf.mxu0
      %1721 = vdwg.mxu0
      %1722 = vmatprep.subr.bf16.mxu0 0
      %1723 = vmatpush1.bf16.msra.mxu0 0
      %1724 = vmatprep.subr.bf16.mxu0 0
      %1725 = vmatpush1.bf16.msra.mxu0 0
      %1726 = vmatprep.subr.bf16.mxu0 0
      %1727 = vmatpush1.bf16.msra.mxu0 0
      %1728 = vmatprep.subr.bf16.mxu0 %v1579
      %1729 = vmatpush1.bf16.msra.mxu0 %v1576
      %1730 = vmatprep.subr.bf16.mxu0 %v1347
      %1731 = vmatpush1.bf16.msra.mxu0 %v1346
      %1732 = vmatprep.subr.bf16.mxu0 %v1337
      %1733 = vmatpush1.bf16.msra.mxu0 %v1336
      %1734 = vmatprep.subr.bf16.mxu0 %v1327
      %1735 = vmatpush1.bf16.msra.mxu0 %v1326
      %1736 = vmatprep.subr.bf16.mxu0 %v1317
      %1737 = vmatpush1.bf16.msra.mxu0 %v1316
      %1738 = vmatprep.subr.bf16.mxu0 0
      %1739 = vmatpush2.bf16.msra.mxu0 0
      %1740 = vmatprep.subr.bf16.mxu0 0
      %1741 = vmatpush2.bf16.msra.mxu0 0
      %1742 = vmatprep.subr.bf16.mxu0 0
      %1743 = vmatpush2.bf16.msra.mxu0 0
      %1744 = vmatprep.subr.bf16.mxu0 0
      %1745 = vmatpush2.bf16.msra.mxu0 0
      %1746 = vmatprep.subr.bf16.mxu0 0
      %1747 = vmatpush2.bf16.msra.mxu0 0
      %1748 = vmatprep.subr.bf16.mxu0 0
      %1749 = vmatpush2.bf16.msra.mxu0 0
      %1750 = vmatprep.subr.bf16.mxu0 0
      %1751 = vmatpush2.bf16.msra.mxu0 0
      %1752 = vmatprep.subr.bf16.mxu0 0
      %1753 = vmatpush2.bf16.msra.mxu0 0
      %1754 = vmatprep.mubr.bf16.mxu0 0
      %1755 = vmatmul.mubr.bf16.gmra.mxu0 %v1566
      %v1756 = vpop.f32.mrf.mxu0
      %v1757 = vadd.f32 %v1716, %v1756
      %v1758 = vpop.f32.mrf.mxu0
      %v1759 = vadd.f32 %v1718, %v1758
      %v1760 = vpop.f32.mrf.mxu0
      %v1761 = vpop.f32.mrf.mxu0
      %1762 = vdwg.mxu0
      %1763 = vmatprep.subr.bf16.mxu0 %v1229
      %1764 = vmatpush1.bf16.msra.mxu0 %v1228
      %1765 = vmatprep.subr.bf16.mxu0 %v1219
      %1766 = vmatpush1.bf16.msra.mxu0 %v1218
      %1767 = vmatprep.subr.bf16.mxu0 %v1209
      %1768 = vmatpush1.bf16.msra.mxu0 %v1208
      %1769 = vmatprep.subr.bf16.mxu0 %v1199
      %1770 = vmatpush1.bf16.msra.mxu0 %v1198
      %1771 = vmatprep.subr.bf16.mxu0 %v1189
      %1772 = vmatpush1.bf16.msra.mxu0 %v1188
      %1773 = vmatprep.subr.bf16.mxu0 %v1179
      %1774 = vmatpush1.bf16.msra.mxu0 %v1178
      %1775 = vmatprep.subr.bf16.mxu0 %v1169
      %1776 = vmatpush1.bf16.msra.mxu0 %v1168
      %1777 = vmatprep.subr.bf16.mxu0 %v1159
      %1778 = vmatpush1.bf16.msra.mxu0 %v1158
      %1779 = vmatprep.subr.bf16.mxu0 %v1309
      %1780 = vmatpush2.bf16.msra.mxu0 %v1308
      %1781 = vmatprep.subr.bf16.mxu0 %v1299
      %1782 = vmatpush2.bf16.msra.mxu0 %v1298
      %1783 = vmatprep.subr.bf16.mxu0 %v1289
      %1784 = vmatpush2.bf16.msra.mxu0 %v1288
      %1785 = vmatprep.subr.bf16.mxu0 %v1279
      %1786 = vmatpush2.bf16.msra.mxu0 %v1278
      %1787 = vmatprep.subr.bf16.mxu0 %v1269
      %1788 = vmatpush2.bf16.msra.mxu0 %v1268
      %1789 = vmatprep.subr.bf16.mxu0 %v1259
      %1790 = vmatpush2.bf16.msra.mxu0 %v1258
      %1791 = vmatprep.subr.bf16.mxu0 %v1249
      %1792 = vmatpush2.bf16.msra.mxu0 %v1248
      %1793 = vmatprep.subr.bf16.mxu0 %v1239
      %1794 = vmatpush2.bf16.msra.mxu0 %v1238
      %1795 = vmatprep.mubr.bf16.mxu0 %v535
      %1796 = vmatmul.mubr.bf16.gmra.mxu0 %v534
      %v1797 = vpop.f32.mrf.mxu0
      %v1798 = vadd.f32 0.0, %v1797
      %v1799 = vpop.f32.mrf.mxu0
      %v1800 = vadd.f32 0.0, %v1799
      %v1801 = vpop.f32.mrf.mxu0
      %v1802 = vpop.f32.mrf.mxu0
      %1803 = vdwg.mxu0
      %1804 = vmatprep.subr.bf16.mxu0 0
      %1805 = vmatpush1.bf16.msra.mxu0 0
      %1806 = vmatprep.subr.bf16.mxu0 0
      %1807 = vmatpush1.bf16.msra.mxu0 0
      %1808 = vmatprep.subr.bf16.mxu0 0
      %1809 = vmatpush1.bf16.msra.mxu0 0
      %1810 = vmatprep.subr.bf16.mxu0 %v1585
      %1811 = vmatpush1.bf16.msra.mxu0 %v1582
      %1812 = vmatprep.subr.bf16.mxu0 %v1349
      %1813 = vmatpush1.bf16.msra.mxu0 %v1348
      %1814 = vmatprep.subr.bf16.mxu0 %v1339
      %1815 = vmatpush1.bf16.msra.mxu0 %v1338
      %1816 = vmatprep.subr.bf16.mxu0 %v1329
      %1817 = vmatpush1.bf16.msra.mxu0 %v1328
      %1818 = vmatprep.subr.bf16.mxu0 %v1319
      %1819 = vmatpush1.bf16.msra.mxu0 %v1318
      %1820 = vmatprep.subr.bf16.mxu0 0
      %1821 = vmatpush2.bf16.msra.mxu0 0
      %1822 = vmatprep.subr.bf16.mxu0 0
      %1823 = vmatpush2.bf16.msra.mxu0 0
      %1824 = vmatprep.subr.bf16.mxu0 0
      %1825 = vmatpush2.bf16.msra.mxu0 0
      %1826 = vmatprep.subr.bf16.mxu0 0
      %1827 = vmatpush2.bf16.msra.mxu0 0
      %1828 = vmatprep.subr.bf16.mxu0 0
      %1829 = vmatpush2.bf16.msra.mxu0 0
      %1830 = vmatprep.subr.bf16.mxu0 0
      %1831 = vmatpush2.bf16.msra.mxu0 0
      %1832 = vmatprep.subr.bf16.mxu0 0
      %1833 = vmatpush2.bf16.msra.mxu0 0
      %1834 = vmatprep.subr.bf16.mxu0 0
      %1835 = vmatpush2.bf16.msra.mxu0 0
      %1836 = vmatprep.mubr.bf16.mxu0 0
      %1837 = vmatmul.mubr.bf16.gmra.mxu0 %v1566
      %v1838 = vpop.f32.mrf.mxu0
      %v1839 = vadd.f32 %v1798, %v1838
      %v1840 = vpop.f32.mrf.mxu0
      %v1841 = vadd.f32 %v1800, %v1840
      %v1842 = vpop.f32.mrf.mxu0
      %v1843 = vpop.f32.mrf.mxu0
      %1844 = vdwg.mxu0
      %1845 = vmatprep.subr.bf16.mxu0 %v1231
      %1846 = vmatpush1.bf16.msra.mxu0 %v1230
      %1847 = vmatprep.subr.bf16.mxu0 %v1221
      %1848 = vmatpush1.bf16.msra.mxu0 %v1220
      %1849 = vmatprep.subr.bf16.mxu0 %v1211
      %1850 = vmatpush1.bf16.msra.mxu0 %v1210
      %1851 = vmatprep.subr.bf16.mxu0 %v1201
      %1852 = vmatpush1.bf16.msra.mxu0 %v1200
      %1853 = vmatprep.subr.bf16.mxu0 %v1191
      %1854 = vmatpush1.bf16.msra.mxu0 %v1190
      %1855 = vmatprep.subr.bf16.mxu0 %v1181
      %1856 = vmatpush1.bf16.msra.mxu0 %v1180
      %1857 = vmatprep.subr.bf16.mxu0 %v1171
      %1858 = vmatpush1.bf16.msra.mxu0 %v1170
      %1859 = vmatprep.subr.bf16.mxu0 %v1161
      %1860 = vmatpush1.bf16.msra.mxu0 %v1160
      %1861 = vmatprep.subr.bf16.mxu0 %v1311
      %1862 = vmatpush2.bf16.msra.mxu0 %v1310
      %1863 = vmatprep.subr.bf16.mxu0 %v1301
      %1864 = vmatpush2.bf16.msra.mxu0 %v1300
      %1865 = vmatprep.subr.bf16.mxu0 %v1291
      %1866 = vmatpush2.bf16.msra.mxu0 %v1290
      %1867 = vmatprep.subr.bf16.mxu0 %v1281
      %1868 = vmatpush2.bf16.msra.mxu0 %v1280
      %1869 = vmatprep.subr.bf16.mxu0 %v1271
      %1870 = vmatpush2.bf16.msra.mxu0 %v1270
      %1871 = vmatprep.subr.bf16.mxu0 %v1261
      %1872 = vmatpush2.bf16.msra.mxu0 %v1260
      %1873 = vmatprep.subr.bf16.mxu0 %v1251
      %1874 = vmatpush2.bf16.msra.mxu0 %v1250
      %1875 = vmatprep.subr.bf16.mxu0 %v1241
      %1876 = vmatpush2.bf16.msra.mxu0 %v1240
      %1877 = vmatprep.mubr.bf16.mxu0 %v535
      %1878 = vmatmul.mubr.bf16.gmra.mxu0 %v534
      %v1879 = vpop.f32.mrf.mxu0
      %v1880 = vadd.f32 0.0, %v1879
      %v1881 = vpop.f32.mrf.mxu0
      %v1882 = vadd.f32 0.0, %v1881
      %v1883 = vpop.f32.mrf.mxu0
      %v1884 = vpop.f32.mrf.mxu0
      %1885 = vdwg.mxu0
      %1886 = vmatprep.subr.bf16.mxu0 0
      %1887 = vmatpush1.bf16.msra.mxu0 0
      %1888 = vmatprep.subr.bf16.mxu0 0
      %1889 = vmatpush1.bf16.msra.mxu0 0
      %1890 = vmatprep.subr.bf16.mxu0 0
      %1891 = vmatpush1.bf16.msra.mxu0 0
      %1892 = vmatprep.subr.bf16.mxu0 %v1591
      %1893 = vmatpush1.bf16.msra.mxu0 %v1588
      %1894 = vmatprep.subr.bf16.mxu0 %v1351
      %1895 = vmatpush1.bf16.msra.mxu0 %v1350
      %1896 = vmatprep.subr.bf16.mxu0 %v1341
      %1897 = vmatpush1.bf16.msra.mxu0 %v1340
      %1898 = vmatprep.subr.bf16.mxu0 %v1331
      %1899 = vmatpush1.bf16.msra.mxu0 %v1330
      %1900 = vmatprep.subr.bf16.mxu0 %v1321
      %1901 = vmatpush1.bf16.msra.mxu0 %v1320
      %1902 = vmatprep.subr.bf16.mxu0 0
      %1903 = vmatpush2.bf16.msra.mxu0 0
      %1904 = vmatprep.subr.bf16.mxu0 0
      %1905 = vmatpush2.bf16.msra.mxu0 0
      %1906 = vmatprep.subr.bf16.mxu0 0
      %1907 = vmatpush2.bf16.msra.mxu0 0
      %1908 = vmatprep.subr.bf16.mxu0 0
      %1909 = vmatpush2.bf16.msra.mxu0 0
      %1910 = vmatprep.subr.bf16.mxu0 0
      %1911 = vmatpush2.bf16.msra.mxu0 0
      %1912 = vmatprep.subr.bf16.mxu0 0
      %1913 = vmatpush2.bf16.msra.mxu0 0
      %1914 = vmatprep.subr.bf16.mxu0 0
      %1915 = vmatpush2.bf16.msra.mxu0 0
      %1916 = vmatprep.subr.bf16.mxu0 0
      %1917 = vmatpush2.bf16.msra.mxu0 0
      %1918 = vmatprep.mubr.bf16.mxu0 0
      %1919 = vmatmul.mubr.bf16.gmra.mxu0 %v1566
      %v1920 = vpop.f32.mrf.mxu0
      %v1921 = vadd.f32 %v1880, %v1920
      %v1922 = vpop.f32.mrf.mxu0
      %v1923 = vadd.f32 %v1882, %v1922
      %v1924 = vpop.f32.mrf.mxu0
      %v1925 = vpop.f32.mrf.mxu0
      %1926 = vdwg.mxu0
      %1927 = vmatprep.subr.bf16.mxu0 %v1233
      %1928 = vmatpush1.bf16.msra.mxu0 %v1232
      %1929 = vmatprep.subr.bf16.mxu0 %v1223
      %1930 = vmatpush1.bf16.msra.mxu0 %v1222
      %1931 = vmatprep.subr.bf16.mxu0 %v1213
      %1932 = vmatpush1.bf16.msra.mxu0 %v1212
      %1933 = vmatprep.subr.bf16.mxu0 %v1203
      %1934 = vmatpush1.bf16.msra.mxu0 %v1202
      %1935 = vmatprep.subr.bf16.mxu0 %v1193
      %1936 = vmatpush1.bf16.msra.mxu0 %v1192
      %1937 = vmatprep.subr.bf16.mxu0 %v1183
      %1938 = vmatpush1.bf16.msra.mxu0 %v1182
      %1939 = vmatprep.subr.bf16.mxu0 %v1173
      %1940 = vmatpush1.bf16.msra.mxu0 %v1172
      %1941 = vmatprep.subr.bf16.mxu0 %v1163
      %1942 = vmatpush1.bf16.msra.mxu0 %v1162
      %1943 = vmatprep.subr.bf16.mxu0 %v1313
      %1944 = vmatpush2.bf16.msra.mxu0 %v1312
      %1945 = vmatprep.subr.bf16.mxu0 %v1303
      %1946 = vmatpush2.bf16.msra.mxu0 %v1302
      %1947 = vmatprep.subr.bf16.mxu0 %v1293
      %1948 = vmatpush2.bf16.msra.mxu0 %v1292
      %1949 = vmatprep.subr.bf16.mxu0 %v1283
      %1950 = vmatpush2.bf16.msra.mxu0 %v1282
      %1951 = vmatprep.subr.bf16.mxu0 %v1273
      %1952 = vmatpush2.bf16.msra.mxu0 %v1272
      %1953 = vmatprep.subr.bf16.mxu0 %v1263
      %1954 = vmatpush2.bf16.msra.mxu0 %v1262
      %1955 = vmatprep.subr.bf16.mxu0 %v1253
      %1956 = vmatpush2.bf16.msra.mxu0 %v1252
      %1957 = vmatprep.subr.bf16.mxu0 %v1243
      %1958 = vmatpush2.bf16.msra.mxu0 %v1242
      %1959 = vmatprep.mubr.bf16.mxu0 %v535
      %1960 = vmatmul.mubr.bf16.gmra.mxu0 %v534
      %v1961 = vpop.f32.mrf.mxu0
      %v1962 = vadd.f32 0.0, %v1961
      %v1963 = vpop.f32.mrf.mxu0
      %v1964 = vadd.f32 0.0, %v1963
      %v1965 = vpop.f32.mrf.mxu0
      %v1966 = vpop.f32.mrf.mxu0
      %1967 = vdwg.mxu0
      %1968 = vmatprep.subr.bf16.mxu0 0
      %1969 = vmatpush1.bf16.msra.mxu0 0
      %1970 = vmatprep.subr.bf16.mxu0 0
      %1971 = vmatpush1.bf16.msra.mxu0 0
      %1972 = vmatprep.subr.bf16.mxu0 0
      %1973 = vmatpush1.bf16.msra.mxu0 0
      %1974 = vmatprep.subr.bf16.mxu0 %v1597
      %1975 = vmatpush1.bf16.msra.mxu0 %v1594
      %1976 = vmatprep.subr.bf16.mxu0 %v1353
      %1977 = vmatpush1.bf16.msra.mxu0 %v1352
      %1978 = vmatprep.subr.bf16.mxu0 %v1343
      %1979 = vmatpush1.bf16.msra.mxu0 %v1342
      %1980 = vmatprep.subr.bf16.mxu0 %v1333
      %1981 = vmatpush1.bf16.msra.mxu0 %v1332
      %1982 = vmatprep.subr.bf16.mxu0 %v1323
      %1983 = vmatpush1.bf16.msra.mxu0 %v1322
      %1984 = vmatprep.subr.bf16.mxu0 0
      %1985 = vmatpush2.bf16.msra.mxu0 0
      %1986 = vmatprep.subr.bf16.mxu0 0
      %1987 = vmatpush2.bf16.msra.mxu0 0
      %1988 = vmatprep.subr.bf16.mxu0 0
      %1989 = vmatpush2.bf16.msra.mxu0 0
      %1990 = vmatprep.subr.bf16.mxu0 0
      %1991 = vmatpush2.bf16.msra.mxu0 0
      %1992 = vmatprep.subr.bf16.mxu0 0
      %1993 = vmatpush2.bf16.msra.mxu0 0
      %1994 = vmatprep.subr.bf16.mxu0 0
      %1995 = vmatpush2.bf16.msra.mxu0 0
      %1996 = vmatprep.subr.bf16.mxu0 0
      %1997 = vmatpush2.bf16.msra.mxu0 0
      %1998 = vmatprep.subr.bf16.mxu0 0
      %1999 = vmatpush2.bf16.msra.mxu0 0
      %2000 = vmatprep.mubr.bf16.mxu0 0
      %2001 = vmatmul.mubr.bf16.gmra.mxu0 %v1566
      %v2002 = vpop.f32.mrf.mxu0
      %v2003 = vadd.f32 %v1962, %v2002
      %v2004 = vpop.f32.mrf.mxu0
      %v2005 = vadd.f32 %v1964, %v2004
      %v2006 = vpop.f32.mrf.mxu0
      %v2007 = vpop.f32.mrf.mxu0
      %2008 = vdwg.mxu0
      %2009 = vst [vmem:[#allocation2] sm:$0xff] %v1675
      %2010 = vst [vmem:[#allocation2 + $0x8] sm:$0xff] %v1677
      %2011 = vst [vmem:[#allocation2 + $0x10] sm:$0xff] %v1757
      %2012 = vst [vmem:[#allocation2 + $0x18] sm:$0xff] %v1759
      %2013 = vst [vmem:[#allocation2 + $0x20] sm:$0xff] %v1839
      %2014 = vst [vmem:[#allocation2 + $0x28] sm:$0xff] %v1841
      %2015 = vst [vmem:[#allocation2 + $0x30] sm:$0xff] %v1921
      %2016 = vst [vmem:[#allocation2 + $0x38] sm:$0xff] %v1923
      %2017 = vst [vmem:[#allocation2 + $0x40] sm:$0xff] %v2003
      %vm2018 = vcmask 31744
      %2019 = vst.msk [vmem:[#allocation2 + $0x48] sm:$0xff] %vm2018, %v2005
      %2030 = vrot.lane.b32.xlu0 %v1675, 127
      %v2031 = vpop.permute.xlu0 %2030
      %2032 = vrot.lane.b32.xlu0 %v1677, 127
      %v2033 = vpop.permute.xlu0 %2032
      %2034 = vrot.lane.b32.xlu0 %v1757, 127
      %v2035 = vpop.permute.xlu0 %2034
      %2036 = vrot.lane.b32.xlu0 %v1759, 127
      %v2037 = vpop.permute.xlu0 %2036
      %2038 = vrot.lane.b32.xlu0 %v1839, 127
      %v2039 = vpop.permute.xlu0 %2038
      %2040 = vrot.lane.b32.xlu0 %v1841, 127
      %v2041 = vpop.permute.xlu0 %2040
      %2042 = vrot.lane.b32.xlu0 %v1921, 127
      %v2043 = vpop.permute.xlu0 %2042
      %2044 = vrot.lane.b32.xlu0 %v1923, 127
      %v2045 = vpop.permute.xlu0 %2044
      %2046 = vrot.lane.b32.xlu0 %v2003, 127
      %v2047 = vpop.permute.xlu0 %2046
      %2048 = vrot.lane.b32.xlu0 %v2005, 127
      %v2049 = vpop.permute.xlu0 %2048
      %vm2050 = vcmask 1039360
      %v2051 = vsel %vm2050, %v2031, %v2033
      %v2052 = vsel %vm2050, %v2033, %v2035
      %v2053 = vsel %vm2050, %v2035, %v2037
      %v2054 = vsel %vm2050, %v2037, %v2039
      %v2055 = vsel %vm2050, %v2039, %v2041
      %v2056 = vsel %vm2050, %v2041, %v2043
      %v2057 = vsel %vm2050, %v2043, %v2045
      %v2058 = vsel %vm2050, %v2045, %v2047
      %v2059 = vsel %vm2050, %v2047, %v2049
      %2070 = vst [vmem:[#allocation2 + $0x50] sm:$0xff] %v2051
      %2071 = vst [vmem:[#allocation2 + $0x58] sm:$0xff] %v2052
      %2072 = vst [vmem:[#allocation2 + $0x60] sm:$0xff] %v2053
      %2073 = vst [vmem:[#allocation2 + $0x68] sm:$0xff] %v2054
      %2074 = vst [vmem:[#allocation2 + $0x70] sm:$0xff] %v2055
      %2075 = vst [vmem:[#allocation2 + $0x78] sm:$0xff] %v2056
      %2076 = vst [vmem:[#allocation2 + $0x80] sm:$0xff] %v2057
      %2077 = vst [vmem:[#allocation2 + $0x88] sm:$0xff] %v2058
      %2078 = vst [vmem:[#allocation2 + $0x90] sm:$0xff] %v2059
      %2079 = vst.msk [vmem:[#allocation2 + $0x98] sm:$0xff] %vm2018, %v2049
      %2080 = vrot.lane.b32.xlu0 %v1675, 126
      %v2081 = vpop.permute.xlu0 %2080
      %2082 = vrot.lane.b32.xlu0 %v1677, 126
      %v2083 = vpop.permute.xlu0 %2082
      %2084 = vrot.lane.b32.xlu0 %v1757, 126
      %v2085 = vpop.permute.xlu0 %2084
      %2086 = vrot.lane.b32.xlu0 %v1759, 126
      %v2087 = vpop.permute.xlu0 %2086
      %2088 = vrot.lane.b32.xlu0 %v1839, 126
      %v2089 = vpop.permute.xlu0 %2088
      %2090 = vrot.lane.b32.xlu0 %v1841, 126
      %v2091 = vpop.permute.xlu0 %2090
      %2092 = vrot.lane.b32.xlu0 %v1921, 126
      %v2093 = vpop.permute.xlu0 %2092
      %2094 = vrot.lane.b32.xlu0 %v1923, 126
      %v2095 = vpop.permute.xlu0 %2094
      %2096 = vrot.lane.b32.xlu0 %v2003, 126
      %v2097 = vpop.permute.xlu0 %2096
      %2098 = vrot.lane.b32.xlu0 %v2005, 126
      %v2099 = vpop.permute.xlu0 %2098
      %vm2100 = vcmask 1031168
      %v2101 = vsel %vm2100, %v2081, %v2083
      %v2102 = vsel %vm2100, %v2083, %v2085
      %v2103 = vsel %vm2100, %v2085, %v2087
      %v2104 = vsel %vm2100, %v2087, %v2089
      %v2105 = vsel %vm2100, %v2089, %v2091
      %v2106 = vsel %vm2100, %v2091, %v2093
      %v2107 = vsel %vm2100, %v2093, %v2095
      %v2108 = vsel %vm2100, %v2095, %v2097
      %v2109 = vsel %vm2100, %v2097, %v2099
      %2120 = vst [vmem:[#allocation2 + $0xa0] sm:$0xff] %v2101
      %2121 = vst [vmem:[#allocation2 + $0xa8] sm:$0xff] %v2102
      %2122 = vst [vmem:[#allocation2 + $0xb0] sm:$0xff] %v2103
      %2123 = vst [vmem:[#allocation2 + $0xb8] sm:$0xff] %v2104
      %2124 = vst [vmem:[#allocation2 + $0xc0] sm:$0xff] %v2105
      %2125 = vst [vmem:[#allocation2 + $0xc8] sm:$0xff] %v2106
      %2126 = vst [vmem:[#allocation2 + $0xd0] sm:$0xff] %v2107
      %2127 = vst [vmem:[#allocation2 + $0xd8] sm:$0xff] %v2108
      %2128 = vst [vmem:[#allocation2 + $0xe0] sm:$0xff] %v2109
      %2129 = vst.msk [vmem:[#allocation2 + $0xe8] sm:$0xff] %vm2018, %v2099
      %2130 = vrot.lane.b32.xlu0 %v1675, 94
      %v2131 = vpop.permute.xlu0 %2130
      %2132 = vrot.lane.b32.xlu0 %v1677, 94
      %v2133 = vpop.permute.xlu0 %2132
      %2134 = vrot.lane.b32.xlu0 %v1757, 94
      %v2135 = vpop.permute.xlu0 %2134
      %2136 = vrot.lane.b32.xlu0 %v1759, 94
      %v2137 = vpop.permute.xlu0 %2136
      %2138 = vrot.lane.b32.xlu0 %v1839, 94
      %v2139 = vpop.permute.xlu0 %2138
      %2140 = vrot.lane.b32.xlu0 %v1841, 94
      %v2141 = vpop.permute.xlu0 %2140
      %2142 = vrot.lane.b32.xlu0 %v1921, 94
      %v2143 = vpop.permute.xlu0 %2142
      %2144 = vrot.lane.b32.xlu0 %v1923, 94
      %v2145 = vpop.permute.xlu0 %2144
      %2146 = vrot.lane.b32.xlu0 %v2003, 94
      %v2147 = vpop.permute.xlu0 %2146
      %2148 = vrot.lane.b32.xlu0 %v2005, 94
      %v2149 = vpop.permute.xlu0 %2148
      %vm2150 = vcmask 769024
      %v2151 = vsel %vm2150, %v2131, %v2133
      %v2152 = vsel %vm2150, %v2133, %v2135
      %v2153 = vsel %vm2150, %v2135, %v2137
      %v2154 = vsel %vm2150, %v2137, %v2139
      %v2155 = vsel %vm2150, %v2139, %v2141
      %v2156 = vsel %vm2150, %v2141, %v2143
      %v2157 = vsel %vm2150, %v2143, %v2145
      %v2158 = vsel %vm2150, %v2145, %v2147
      %v2159 = vsel %vm2150, %v2147, %v2149
      %2170 = vst [vmem:[#allocation2 + $0xf0] sm:$0xff] %v2151
      %2171 = vst [vmem:[#allocation2 + $0xf8] sm:$0xff] %v2152
      %2172 = vst [vmem:[#allocation2 + $0x100] sm:$0xff] %v2153
      %2173 = vst [vmem:[#allocation2 + $0x108] sm:$0xff] %v2154
      %2174 = vst [vmem:[#allocation2 + $0x110] sm:$0xff] %v2155
      %2175 = vst [vmem:[#allocation2 + $0x118] sm:$0xff] %v2156
      %2176 = vst [vmem:[#allocation2 + $0x120] sm:$0xff] %v2157
      %2177 = vst [vmem:[#allocation2 + $0x128] sm:$0xff] %v2158
      %2178 = vst [vmem:[#allocation2 + $0x130] sm:$0xff] %v2159
      %2179 = vst.msk [vmem:[#allocation2 + $0x138] sm:$0xff] %vm2018, %v2149
      %2180 = vrot.lane.b32.xlu0 %v1675, 93
      %v2181 = vpop.permute.xlu0 %2180
      %2182 = vrot.lane.b32.xlu0 %v1677, 93
      %v2183 = vpop.permute.xlu0 %2182
      %2184 = vrot.lane.b32.xlu0 %v1757, 93
      %v2185 = vpop.permute.xlu0 %2184
      %2186 = vrot.lane.b32.xlu0 %v1759, 93
      %v2187 = vpop.permute.xlu0 %2186
      %2188 = vrot.lane.b32.xlu0 %v1839, 93
      %v2189 = vpop.permute.xlu0 %2188
      %2190 = vrot.lane.b32.xlu0 %v1841, 93
      %v2191 = vpop.permute.xlu0 %2190
      %2192 = vrot.lane.b32.xlu0 %v1921, 93
      %v2193 = vpop.permute.xlu0 %2192
      %2194 = vrot.lane.b32.xlu0 %v1923, 93
      %v2195 = vpop.permute.xlu0 %2194
      %2196 = vrot.lane.b32.xlu0 %v2003, 93
      %v2197 = vpop.permute.xlu0 %2196
      %2198 = vrot.lane.b32.xlu0 %v2005, 93
      %v2199 = vpop.permute.xlu0 %2198
      %vm2200 = vcmask 760832
      %v2201 = vsel %vm2200, %v2181, %v2183
      %v2202 = vsel %vm2200, %v2183, %v2185
      %v2203 = vsel %vm2200, %v2185, %v2187
      %v2204 = vsel %vm2200, %v2187, %v2189
      %v2205 = vsel %vm2200, %v2189, %v2191
      %v2206 = vsel %vm2200, %v2191, %v2193
      %v2207 = vsel %vm2200, %v2193, %v2195
      %v2208 = vsel %vm2200, %v2195, %v2197
      %v2209 = vsel %vm2200, %v2197, %v2199
      %2220 = vst [vmem:[#allocation2 + $0x140] sm:$0xff] %v2201
      %2221 = vst [vmem:[#allocation2 + $0x148] sm:$0xff] %v2202
      %2222 = vst [vmem:[#allocation2 + $0x150] sm:$0xff] %v2203
      %2223 = vst [vmem:[#allocation2 + $0x158] sm:$0xff] %v2204
      %2224 = vst [vmem:[#allocation2 + $0x160] sm:$0xff] %v2205
      %2225 = vst [vmem:[#allocation2 + $0x168] sm:$0xff] %v2206
      %2226 = vst [vmem:[#allocation2 + $0x170] sm:$0xff] %v2207
      %2227 = vst [vmem:[#allocation2 + $0x178] sm:$0xff] %v2208
      %2228 = vst [vmem:[#allocation2 + $0x180] sm:$0xff] %v2209
      %2229 = vst.msk [vmem:[#allocation2 + $0x188] sm:$0xff] %vm2018, %v2199
      %2230 = vrot.lane.b32.xlu0 %v1675, 92
      %v2231 = vpop.permute.xlu0 %2230
      %2232 = vrot.lane.b32.xlu0 %v1677, 92
      %v2233 = vpop.permute.xlu0 %2232
      %2234 = vrot.lane.b32.xlu0 %v1757, 92
      %v2235 = vpop.permute.xlu0 %2234
      %2236 = vrot.lane.b32.xlu0 %v1759, 92
      %v2237 = vpop.permute.xlu0 %2236
      %2238 = vrot.lane.b32.xlu0 %v1839, 92
      %v2239 = vpop.permute.xlu0 %2238
      %2240 = vrot.lane.b32.xlu0 %v1841, 92
      %v2241 = vpop.permute.xlu0 %2240
      %2242 = vrot.lane.b32.xlu0 %v1921, 92
      %v2243 = vpop.permute.xlu0 %2242
      %2244 = vrot.lane.b32.xlu0 %v1923, 92
      %v2245 = vpop.permute.xlu0 %2244
      %2246 = vrot.lane.b32.xlu0 %v2003, 92
      %v2247 = vpop.permute.xlu0 %2246
      %2248 = vrot.lane.b32.xlu0 %v2005, 92
      %v2249 = vpop.permute.xlu0 %2248
      %vm2250 = vcmask 752640
      %v2251 = vsel %vm2250, %v2231, %v2233
      %v2252 = vsel %vm2250, %v2233, %v2235
      %v2253 = vsel %vm2250, %v2235, %v2237
      %v2254 = vsel %vm2250, %v2237, %v2239
      %v2255 = vsel %vm2250, %v2239, %v2241
      %v2256 = vsel %vm2250, %v2241, %v2243
      %v2257 = vsel %vm2250, %v2243, %v2245
      %v2258 = vsel %vm2250, %v2245, %v2247
      %v2259 = vsel %vm2250, %v2247, %v2249
      %2270 = vst [vmem:[#allocation2 + $0x190] sm:$0xff] %v2251
      %2271 = vst [vmem:[#allocation2 + $0x198] sm:$0xff] %v2252
      %2272 = vst [vmem:[#allocation2 + $0x1a0] sm:$0xff] %v2253
      %2273 = vst [vmem:[#allocation2 + $0x1a8] sm:$0xff] %v2254
      %2274 = vst [vmem:[#allocation2 + $0x1b0] sm:$0xff] %v2255
      %2275 = vst [vmem:[#allocation2 + $0x1b8] sm:$0xff] %v2256
      %2276 = vst [vmem:[#allocation2 + $0x1c0] sm:$0xff] %v2257
      %2277 = vst [vmem:[#allocation2 + $0x1c8] sm:$0xff] %v2258
      %2278 = vst [vmem:[#allocation2 + $0x1d0] sm:$0xff] %v2259
      %2279 = vst.msk [vmem:[#allocation2 + $0x1d8] sm:$0xff] %vm2018, %v2249
      %2280 = vrot.lane.b32.xlu0 %v1675, 60
      %v2281 = vpop.permute.xlu0 %2280
      %2282 = vrot.lane.b32.xlu0 %v1677, 60
      %v2283 = vpop.permute.xlu0 %2282
      %2284 = vrot.lane.b32.xlu0 %v1757, 60
      %v2285 = vpop.permute.xlu0 %2284
      %2286 = vrot.lane.b32.xlu0 %v1759, 60
      %v2287 = vpop.permute.xlu0 %2286
      %2288 = vrot.lane.b32.xlu0 %v1839, 60
      %v2289 = vpop.permute.xlu0 %2288
      %2290 = vrot.lane.b32.xlu0 %v1841, 60
      %v2291 = vpop.permute.xlu0 %2290
      %2292 = vrot.lane.b32.xlu0 %v1921, 60
      %v2293 = vpop.permute.xlu0 %2292
      %2294 = vrot.lane.b32.xlu0 %v1923, 60
      %v2295 = vpop.permute.xlu0 %2294
      %2296 = vrot.lane.b32.xlu0 %v2003, 60
      %v2297 = vpop.permute.xlu0 %2296
      %2298 = vrot.lane.b32.xlu0 %v2005, 60
      %v2299 = vpop.permute.xlu0 %2298
      %vm2300 = vcmask 490496
      %v2301 = vsel %vm2300, %v2281, %v2283
      %v2302 = vsel %vm2300, %v2283, %v2285
      %v2303 = vsel %vm2300, %v2285, %v2287
      %v2304 = vsel %vm2300, %v2287, %v2289
      %v2305 = vsel %vm2300, %v2289, %v2291
      %v2306 = vsel %vm2300, %v2291, %v2293
      %v2307 = vsel %vm2300, %v2293, %v2295
      %v2308 = vsel %vm2300, %v2295, %v2297
      %v2309 = vsel %vm2300, %v2297, %v2299
      %2320 = vst [vmem:[#allocation2 + $0x1e0] sm:$0xff] %v2301
      %2321 = vst [vmem:[#allocation2 + $0x1e8] sm:$0xff] %v2302
      %2322 = vst [vmem:[#allocation2 + $0x1f0] sm:$0xff] %v2303
      %2323 = vst [vmem:[#allocation2 + $0x1f8] sm:$0xff] %v2304
      %2324 = vst [vmem:[#allocation2 + $0x200] sm:$0xff] %v2305
      %2325 = vst [vmem:[#allocation2 + $0x208] sm:$0xff] %v2306
      %2326 = vst [vmem:[#allocation2 + $0x210] sm:$0xff] %v2307
      %2327 = vst [vmem:[#allocation2 + $0x218] sm:$0xff] %v2308
      %2328 = vst [vmem:[#allocation2 + $0x220] sm:$0xff] %v2309
      %2329 = vst.msk [vmem:[#allocation2 + $0x228] sm:$0xff] %vm2018, %v2299
      %2330 = vrot.lane.b32.xlu0 %v1675, 59
      %v2331 = vpop.permute.xlu0 %2330
      %2332 = vrot.lane.b32.xlu0 %v1677, 59
      %v2333 = vpop.permute.xlu0 %2332
      %2334 = vrot.lane.b32.xlu0 %v1757, 59
      %v2335 = vpop.permute.xlu0 %2334
      %2336 = vrot.lane.b32.xlu0 %v1759, 59
      %v2337 = vpop.permute.xlu0 %2336
      %2338 = vrot.lane.b32.xlu0 %v1839, 59
      %v2339 = vpop.permute.xlu0 %2338
      %2340 = vrot.lane.b32.xlu0 %v1841, 59
      %v2341 = vpop.permute.xlu0 %2340
      %2342 = vrot.lane.b32.xlu0 %v1921, 59
      %v2343 = vpop.permute.xlu0 %2342
      %2344 = vrot.lane.b32.xlu0 %v1923, 59
      %v2345 = vpop.permute.xlu0 %2344
      %2346 = vrot.lane.b32.xlu0 %v2003, 59
      %v2347 = vpop.permute.xlu0 %2346
      %2348 = vrot.lane.b32.xlu0 %v2005, 59
      %v2349 = vpop.permute.xlu0 %2348
      %vm2350 = vcmask 482304
      %v2351 = vsel %vm2350, %v2331, %v2333
      %v2352 = vsel %vm2350, %v2333, %v2335
      %v2353 = vsel %vm2350, %v2335, %v2337
      %v2354 = vsel %vm2350, %v2337, %v2339
      %v2355 = vsel %vm2350, %v2339, %v2341
      %v2356 = vsel %vm2350, %v2341, %v2343
      %v2357 = vsel %vm2350, %v2343, %v2345
      %v2358 = vsel %vm2350, %v2345, %v2347
      %v2359 = vsel %vm2350, %v2347, %v2349
      %2370 = vst [vmem:[#allocation2 + $0x230] sm:$0xff] %v2351
      %2371 = vst [vmem:[#allocation2 + $0x238] sm:$0xff] %v2352
      %2372 = vst [vmem:[#allocation2 + $0x240] sm:$0xff] %v2353
      %2373 = vst [vmem:[#allocation2 + $0x248] sm:$0xff] %v2354
      %2374 = vst [vmem:[#allocation2 + $0x250] sm:$0xff] %v2355
      %2375 = vst [vmem:[#allocation2 + $0x258] sm:$0xff] %v2356
      %2376 = vst [vmem:[#allocation2 + $0x260] sm:$0xff] %v2357
      %2377 = vst [vmem:[#allocation2 + $0x268] sm:$0xff] %v2358
      %2378 = vst [vmem:[#allocation2 + $0x270] sm:$0xff] %v2359
      %2379 = vst.msk [vmem:[#allocation2 + $0x278] sm:$0xff] %vm2018, %v2349
      %2380 = vrot.lane.b32.xlu0 %v1675, 58
      %v2381 = vpop.permute.xlu0 %2380
      %2382 = vrot.lane.b32.xlu0 %v1677, 58
      %v2383 = vpop.permute.xlu0 %2382
      %2384 = vrot.lane.b32.xlu0 %v1757, 58
      %v2385 = vpop.permute.xlu0 %2384
      %2386 = vrot.lane.b32.xlu0 %v1759, 58
      %v2387 = vpop.permute.xlu0 %2386
      %2388 = vrot.lane.b32.xlu0 %v1839, 58
      %v2389 = vpop.permute.xlu0 %2388
      %2390 = vrot.lane.b32.xlu0 %v1841, 58
      %v2391 = vpop.permute.xlu0 %2390
      %2392 = vrot.lane.b32.xlu0 %v1921, 58
      %v2393 = vpop.permute.xlu0 %2392
      %2394 = vrot.lane.b32.xlu0 %v1923, 58
      %v2395 = vpop.permute.xlu0 %2394
      %2396 = vrot.lane.b32.xlu0 %v2003, 58
      %v2397 = vpop.permute.xlu0 %2396
      %2398 = vrot.lane.b32.xlu0 %v2005, 58
      %v2399 = vpop.permute.xlu0 %2398
      %vm2400 = vcmask 474112
      %v2401 = vsel %vm2400, %v2381, %v2383
      %v2402 = vsel %vm2400, %v2383, %v2385
      %v2403 = vsel %vm2400, %v2385, %v2387
      %v2404 = vsel %vm2400, %v2387, %v2389
      %v2405 = vsel %vm2400, %v2389, %v2391
      %v2406 = vsel %vm2400, %v2391, %v2393
      %v2407 = vsel %vm2400, %v2393, %v2395
      %v2408 = vsel %vm2400, %v2395, %v2397
      %v2409 = vsel %vm2400, %v2397, %v2399
      %2420 = vst [vmem:[#allocation2 + $0x280] sm:$0xff] %v2401
      %2421 = vst [vmem:[#allocation2 + $0x288] sm:$0xff] %v2402
      %2422 = vst [vmem:[#allocation2 + $0x290] sm:$0xff] %v2403
      %2423 = vst [vmem:[#allocation2 + $0x298] sm:$0xff] %v2404
      %2424 = vst [vmem:[#allocation2 + $0x2a0] sm:$0xff] %v2405
      %2425 = vst [vmem:[#allocation2 + $0x2a8] sm:$0xff] %v2406
      %2426 = vst [vmem:[#allocation2 + $0x2b0] sm:$0xff] %v2407
      %2427 = vst [vmem:[#allocation2 + $0x2b8] sm:$0xff] %v2408
      %2428 = vst [vmem:[#allocation2 + $0x2c0] sm:$0xff] %v2409
      %2429 = vst.msk [vmem:[#allocation2 + $0x2c8] sm:$0xff] %vm2018, %v2399
      %v2430 = vld [vmem:[%s3] sm:$0xff]
      %v2431 = vld [vmem:[%s3 + $0x8] sm:$0xff]
      %v2432 = vld [vmem:[#allocation2] sm:$0xff]
      %v2433 = vld [vmem:[#allocation2 + $0x8] sm:$0xff]
      %v2434 = vld [vmem:[#allocation2 + $0x10] sm:$0xff]
      %v2435 = vld [vmem:[#allocation2 + $0x18] sm:$0xff]
      %v2436 = vld [vmem:[#allocation2 + $0x20] sm:$0xff]
      %v2437 = vld [vmem:[#allocation2 + $0x28] sm:$0xff]
      %v2438 = vld [vmem:[#allocation2 + $0x30] sm:$0xff]
      %v2439 = vld [vmem:[#allocation2 + $0x38] sm:$0xff]
      %v2440 = vld [vmem:[#allocation2 + $0x40] sm:$0xff]
      %v2441 = vld [vmem:[#allocation2 + $0x48] sm:$0xff]
      %v2442 = vld [vmem:[#allocation2 + $0x50] sm:$0xff]
      %v2443 = vld [vmem:[#allocation2 + $0x58] sm:$0xff]
      %v2444 = vld [vmem:[#allocation2 + $0x60] sm:$0xff]
      %v2445 = vld [vmem:[#allocation2 + $0x68] sm:$0xff]
      %v2446 = vld [vmem:[#allocation2 + $0x70] sm:$0xff]
      %v2447 = vld [vmem:[#allocation2 + $0x78] sm:$0xff]
      %v2448 = vld [vmem:[#allocation2 + $0x80] sm:$0xff]
      %v2449 = vld [vmem:[#allocation2 + $0x88] sm:$0xff]
      %v2450 = vld [vmem:[#allocation2 + $0x90] sm:$0xff]
      %v2451 = vld [vmem:[#allocation2 + $0x98] sm:$0xff]
      %v2452 = vld [vmem:[#allocation2 + $0xa0] sm:$0xff]
      %v2453 = vld [vmem:[#allocation2 + $0xa8] sm:$0xff]
      %v2454 = vld [vmem:[#allocation2 + $0xb0] sm:$0xff]
      %v2455 = vld [vmem:[#allocation2 + $0xb8] sm:$0xff]
      %v2456 = vld [vmem:[#allocation2 + $0xc0] sm:$0xff]
      %v2457 = vld [vmem:[#allocation2 + $0xc8] sm:$0xff]
      %v2458 = vld [vmem:[#allocation2 + $0xd0] sm:$0xff]
      %v2459 = vld [vmem:[#allocation2 + $0xd8] sm:$0xff]
      %v2460 = vld [vmem:[#allocation2 + $0xe0] sm:$0xff]
      %v2461 = vld [vmem:[#allocation2 + $0xe8] sm:$0xff]
      %v2462 = vld [vmem:[#allocation2 + $0xf0] sm:$0xff]
      %v2463 = vld [vmem:[#allocation2 + $0xf8] sm:$0xff]
      %v2464 = vld [vmem:[#allocation2 + $0x100] sm:$0xff]
      %v2465 = vld [vmem:[#allocation2 + $0x108] sm:$0xff]
      %v2466 = vld [vmem:[#allocation2 + $0x110] sm:$0xff]
      %v2467 = vld [vmem:[#allocation2 + $0x118] sm:$0xff]
      %v2468 = vld [vmem:[#allocation2 + $0x120] sm:$0xff]
      %v2469 = vld [vmem:[#allocation2 + $0x128] sm:$0xff]
      %v2470 = vld [vmem:[#allocation2 + $0x130] sm:$0xff]
      %v2471 = vld [vmem:[#allocation2 + $0x138] sm:$0xff]
      %v2472 = vld [vmem:[#allocation2 + $0x140] sm:$0xff]
      %v2473 = vld [vmem:[#allocation2 + $0x148] sm:$0xff]
      %v2474 = vld [vmem:[#allocation2 + $0x150] sm:$0xff]
      %v2475 = vld [vmem:[#allocation2 + $0x158] sm:$0xff]
      %v2476 = vld [vmem:[#allocation2 + $0x160] sm:$0xff]
      %v2477 = vld [vmem:[#allocation2 + $0x168] sm:$0xff]
      %v2478 = vld [vmem:[#allocation2 + $0x170] sm:$0xff]
      %v2479 = vld [vmem:[#allocation2 + $0x178] sm:$0xff]
      %v2480 = vld [vmem:[#allocation2 + $0x180] sm:$0xff]
      %v2481 = vld [vmem:[#allocation2 + $0x188] sm:$0xff]
      %v2482 = vld [vmem:[#allocation2 + $0x190] sm:$0xff]
      %v2483 = vld [vmem:[#allocation2 + $0x198] sm:$0xff]
      %v2484 = vld [vmem:[#allocation2 + $0x1a0] sm:$0xff]
      %v2485 = vld [vmem:[#allocation2 + $0x1a8] sm:$0xff]
      %v2486 = vld [vmem:[#allocation2 + $0x1b0] sm:$0xff]
      %v2487 = vld [vmem:[#allocation2 + $0x1b8] sm:$0xff]
      %v2488 = vld [vmem:[#allocation2 + $0x1c0] sm:$0xff]
      %v2489 = vld [vmem:[#allocation2 + $0x1c8] sm:$0xff]
      %v2490 = vld [vmem:[#allocation2 + $0x1d0] sm:$0xff]
      %v2491 = vld [vmem:[#allocation2 + $0x1d8] sm:$0xff]
      %v2492 = vld [vmem:[#allocation2 + $0x1e0] sm:$0xff]
      %v2493 = vld [vmem:[#allocation2 + $0x1e8] sm:$0xff]
      %v2494 = vld [vmem:[#allocation2 + $0x1f0] sm:$0xff]
      %v2495 = vld [vmem:[#allocation2 + $0x1f8] sm:$0xff]
      %v2496 = vld [vmem:[#allocation2 + $0x200] sm:$0xff]
      %v2497 = vld [vmem:[#allocation2 + $0x208] sm:$0xff]
      %v2498 = vld [vmem:[#allocation2 + $0x210] sm:$0xff]
      %v2499 = vld [vmem:[#allocation2 + $0x218] sm:$0xff]
      %v2500 = vld [vmem:[#allocation2 + $0x220] sm:$0xff]
      %v2501 = vld [vmem:[#allocation2 + $0x228] sm:$0xff]
      %v2502 = vld [vmem:[#allocation2 + $0x230] sm:$0xff]
      %v2503 = vld [vmem:[#allocation2 + $0x238] sm:$0xff]
      %v2504 = vld [vmem:[#allocation2 + $0x240] sm:$0xff]
      %v2505 = vld [vmem:[#allocation2 + $0x248] sm:$0xff]
      %v2506 = vld [vmem:[#allocation2 + $0x250] sm:$0xff]
      %v2507 = vld [vmem:[#allocation2 + $0x258] sm:$0xff]
      %v2508 = vld [vmem:[#allocation2 + $0x260] sm:$0xff]
      %v2509 = vld [vmem:[#allocation2 + $0x268] sm:$0xff]
      %v2510 = vld [vmem:[#allocation2 + $0x270] sm:$0xff]
      %v2511 = vld [vmem:[#allocation2 + $0x278] sm:$0xff]
      %v2512 = vld [vmem:[#allocation2 + $0x280] sm:$0xff]
      %v2513 = vld [vmem:[#allocation2 + $0x288] sm:$0xff]
      %v2514 = vld [vmem:[#allocation2 + $0x290] sm:$0xff]
      %v2515 = vld [vmem:[#allocation2 + $0x298] sm:$0xff]
      %v2516 = vld [vmem:[#allocation2 + $0x2a0] sm:$0xff]
      %v2517 = vld [vmem:[#allocation2 + $0x2a8] sm:$0xff]
      %v2518 = vld [vmem:[#allocation2 + $0x2b0] sm:$0xff]
      %v2519 = vld [vmem:[#allocation2 + $0x2b8] sm:$0xff]
      %v2520 = vld [vmem:[#allocation2 + $0x2c0] sm:$0xff]
      %v2521 = vld [vmem:[#allocation2 + $0x2c8] sm:$0xff]
      %v2522 = vld [vmem:[%s4] sm:$0xff]
      %v2523 = vld [vmem:[%s4 + $0x8] sm:$0xff]
      %2525 = vset.pattern.permute.xlu0 0
      %2526 = vperm.xlu0 %2525, %v2522
      %v2527 = vpop.permute.xlu0 %2526
      %2530 = vset.pattern.permute.xlu0 0
      %2531 = vperm.xlu0 %2530, %v2523
      %v2532 = vpop.permute.xlu0 %2531
      %vm2534 = vcmask 588800
      %v2536 = vsel %vm2534, %v2430, 0
      %v2539 = vsel %vm2534, %v2431, 0
      %2541 = vmatprep.subr.mxu0 0.0
      %2542 = vmatpush1.msra.mxu0 0.0
      %2543 = vmatprep.subr.mxu0 0.0
      %2544 = vmatpush1.msra.mxu0 0.0
      %2545 = vmatprep.subr.mxu0 0.0
      %2546 = vmatpush1.msra.mxu0 0.0
      %2547 = vmatprep.subr.mxu0 0.0
      %2548 = vmatpush1.msra.mxu0 0.0
      %2549 = vmatprep.subr.mxu0 0.0
      %2550 = vmatpush1.msra.mxu0 0.0
      %2551 = vmatprep.subr.mxu0 0.0
      %2552 = vmatpush1.msra.mxu0 0.0
      %2553 = vmatprep.subr.mxu0 0.0
      %2554 = vmatpush1.msra.mxu0 0.0
      %2555 = vmatprep.subr.mxu0 %v2513
      %2556 = vmatpush1.msra.mxu0 %v2512
      %2557 = vmatprep.subr.mxu0 %v2503
      %2558 = vmatpush1.msra.mxu0 %v2502
      %2559 = vmatprep.subr.mxu0 %v2493
      %2560 = vmatpush1.msra.mxu0 %v2492
      %2561 = vmatprep.subr.mxu0 %v2483
      %2562 = vmatpush1.msra.mxu0 %v2482
      %2563 = vmatprep.subr.mxu0 %v2473
      %2564 = vmatpush1.msra.mxu0 %v2472
      %2565 = vmatprep.subr.mxu0 %v2463
      %2566 = vmatpush1.msra.mxu0 %v2462
      %2567 = vmatprep.subr.mxu0 %v2453
      %2568 = vmatpush1.msra.mxu0 %v2452
      %2569 = vmatprep.subr.mxu0 %v2443
      %2570 = vmatpush1.msra.mxu0 %v2442
      %2571 = vmatprep.subr.mxu0 %v2433
      %2572 = vmatpush1.msra.mxu0 %v2432
      %2573 = vmatprep.subr.mxu0 0.0
      %2574 = vmatpush2.msra.mxu0 0.0
      %2575 = vmatprep.subr.mxu0 0.0
      %2576 = vmatpush2.msra.mxu0 0.0
      %2577 = vmatprep.subr.mxu0 0.0
      %2578 = vmatpush2.msra.mxu0 0.0
      %2579 = vmatprep.subr.mxu0 0.0
      %2580 = vmatpush2.msra.mxu0 0.0
      %2581 = vmatprep.subr.mxu0 0.0
      %2582 = vmatpush2.msra.mxu0 0.0
      %2583 = vmatprep.subr.mxu0 0.0
      %2584 = vmatpush2.msra.mxu0 0.0
      %2585 = vmatprep.subr.mxu0 0.0
      %2586 = vmatpush2.msra.mxu0 0.0
      %2587 = vmatprep.subr.mxu0 0.0
      %2588 = vmatpush2.msra.mxu0 0.0
      %2589 = vmatprep.subr.mxu0 0.0
      %2590 = vmatpush2.msra.mxu0 0.0
      %2591 = vmatprep.subr.mxu0 0.0
      %2592 = vmatpush2.msra.mxu0 0.0
      %2593 = vmatprep.subr.mxu0 0.0
      %2594 = vmatpush2.msra.mxu0 0.0
      %2595 = vmatprep.subr.mxu0 0.0
      %2596 = vmatpush2.msra.mxu0 0.0
      %2597 = vmatprep.subr.mxu0 0.0
      %2598 = vmatpush2.msra.mxu0 0.0
      %2599 = vmatprep.subr.mxu0 0.0
      %2600 = vmatpush2.msra.mxu0 0.0
      %2601 = vmatprep.subr.mxu0 0.0
      %2602 = vmatpush2.msra.mxu0 0.0
      %2603 = vmatprep.subr.mxu0 0.0
      %2604 = vmatpush2.msra.mxu0 0.0
      %2605 = vmatprep.mubr.f32.mxu0 0.0
      %2606 = vmatmul.mubr.f32.gmra.mxu0 %v2536
      %v2607 = vpop.f32.mrf.mxu0
      %v2608 = vadd.f32 %v2527, %v2607
      %v2609 = vpop.f32.mrf.mxu0
      %v2610 = vadd.f32 %v2527, %v2609
      %2611 = vmatprep.mubr.f32.mxu0 0.0
      %2612 = vmatmul.mubr.f32.gmra.mxu0 %v2539
      %v2613 = vpop.f32.mrf.mxu0
      %v2614 = vadd.f32 %v2532, %v2613
      %v2615 = vpop.f32.mrf.mxu0
      %v2616 = vadd.f32 %v2532, %v2615
      %2617 = vdwg.mxu0
      %2618 = vmatprep.subr.mxu0 0.0
      %2619 = vmatpush1.msra.mxu0 0.0
      %2620 = vmatprep.subr.mxu0 0.0
      %2621 = vmatpush1.msra.mxu0 0.0
      %2622 = vmatprep.subr.mxu0 0.0
      %2623 = vmatpush1.msra.mxu0 0.0
      %2624 = vmatprep.subr.mxu0 0.0
      %2625 = vmatpush1.msra.mxu0 0.0
      %2626 = vmatprep.subr.mxu0 0.0
      %2627 = vmatpush1.msra.mxu0 0.0
      %2628 = vmatprep.subr.mxu0 0.0
      %2629 = vmatpush1.msra.mxu0 0.0
      %2630 = vmatprep.subr.mxu0 0.0
      %2631 = vmatpush1.msra.mxu0 0.0
      %2632 = vmatprep.subr.mxu0 %v2515
      %2633 = vmatpush1.msra.mxu0 %v2514
      %2634 = vmatprep.subr.mxu0 %v2505
      %2635 = vmatpush1.msra.mxu0 %v2504
      %2636 = vmatprep.subr.mxu0 %v2495
      %2637 = vmatpush1.msra.mxu0 %v2494
      %2638 = vmatprep.subr.mxu0 %v2485
      %2639 = vmatpush1.msra.mxu0 %v2484
      %2640 = vmatprep.subr.mxu0 %v2475
      %2641 = vmatpush1.msra.mxu0 %v2474
      %2642 = vmatprep.subr.mxu0 %v2465
      %2643 = vmatpush1.msra.mxu0 %v2464
      %2644 = vmatprep.subr.mxu0 %v2455
      %2645 = vmatpush1.msra.mxu0 %v2454
      %2646 = vmatprep.subr.mxu0 %v2445
      %2647 = vmatpush1.msra.mxu0 %v2444
      %2648 = vmatprep.subr.mxu0 %v2435
      %2649 = vmatpush1.msra.mxu0 %v2434
      %2650 = vmatprep.subr.mxu0 0.0
      %2651 = vmatpush2.msra.mxu0 0.0
      %2652 = vmatprep.subr.mxu0 0.0
      %2653 = vmatpush2.msra.mxu0 0.0
      %2654 = vmatprep.subr.mxu0 0.0
      %2655 = vmatpush2.msra.mxu0 0.0
      %2656 = vmatprep.subr.mxu0 0.0
      %2657 = vmatpush2.msra.mxu0 0.0
      %2658 = vmatprep.subr.mxu0 0.0
      %2659 = vmatpush2.msra.mxu0 0.0
      %2660 = vmatprep.subr.mxu0 0.0
      %2661 = vmatpush2.msra.mxu0 0.0
      %2662 = vmatprep.subr.mxu0 0.0
      %2663 = vmatpush2.msra.mxu0 0.0
      %2664 = vmatprep.subr.mxu0 0.0
      %2665 = vmatpush2.msra.mxu0 0.0
      %2666 = vmatprep.subr.mxu0 0.0
      %2667 = vmatpush2.msra.mxu0 0.0
      %2668 = vmatprep.subr.mxu0 0.0
      %2669 = vmatpush2.msra.mxu0 0.0
      %2670 = vmatprep.subr.mxu0 0.0
      %2671 = vmatpush2.msra.mxu0 0.0
      %2672 = vmatprep.subr.mxu0 0.0
      %2673 = vmatpush2.msra.mxu0 0.0
      %2674 = vmatprep.subr.mxu0 0.0
      %2675 = vmatpush2.msra.mxu0 0.0
      %2676 = vmatprep.subr.mxu0 0.0
      %2677 = vmatpush2.msra.mxu0 0.0
      %2678 = vmatprep.subr.mxu0 0.0
      %2679 = vmatpush2.msra.mxu0 0.0
      %2680 = vmatprep.subr.mxu0 0.0
      %2681 = vmatpush2.msra.mxu0 0.0
      %2682 = vmatprep.mubr.f32.mxu0 0.0
      %2683 = vmatmul.mubr.f32.gmra.mxu0 %v2536
      %v2684 = vpop.f32.mrf.mxu0
      %v2685 = vadd.f32 %v2527, %v2684
      %v2686 = vpop.f32.mrf.mxu0
      %v2687 = vadd.f32 %v2527, %v2686
      %2688 = vmatprep.mubr.f32.mxu0 0.0
      %2689 = vmatmul.mubr.f32.gmra.mxu0 %v2539
      %v2690 = vpop.f32.mrf.mxu0
      %v2691 = vadd.f32 %v2532, %v2690
      %v2692 = vpop.f32.mrf.mxu0
      %v2693 = vadd.f32 %v2532, %v2692
      %2694 = vdwg.mxu0
      %2695 = vmatprep.subr.mxu0 0.0
      %2696 = vmatpush1.msra.mxu0 0.0
      %2697 = vmatprep.subr.mxu0 0.0
      %2698 = vmatpush1.msra.mxu0 0.0
      %2699 = vmatprep.subr.mxu0 0.0
      %2700 = vmatpush1.msra.mxu0 0.0
      %2701 = vmatprep.subr.mxu0 0.0
      %2702 = vmatpush1.msra.mxu0 0.0
      %2703 = vmatprep.subr.mxu0 0.0
      %2704 = vmatpush1.msra.mxu0 0.0
      %2705 = vmatprep.subr.mxu0 0.0
      %2706 = vmatpush1.msra.mxu0 0.0
      %2707 = vmatprep.subr.mxu0 0.0
      %2708 = vmatpush1.msra.mxu0 0.0
      %2709 = vmatprep.subr.mxu0 %v2517
      %2710 = vmatpush1.msra.mxu0 %v2516
      %2711 = vmatprep.subr.mxu0 %v2507
      %2712 = vmatpush1.msra.mxu0 %v2506
      %2713 = vmatprep.subr.mxu0 %v2497
      %2714 = vmatpush1.msra.mxu0 %v2496
      %2715 = vmatprep.subr.mxu0 %v2487
      %2716 = vmatpush1.msra.mxu0 %v2486
      %2717 = vmatprep.subr.mxu0 %v2477
      %2718 = vmatpush1.msra.mxu0 %v2476
      %2719 = vmatprep.subr.mxu0 %v2467
      %2720 = vmatpush1.msra.mxu0 %v2466
      %2721 = vmatprep.subr.mxu0 %v2457
      %2722 = vmatpush1.msra.mxu0 %v2456
      %2723 = vmatprep.subr.mxu0 %v2447
      %2724 = vmatpush1.msra.mxu0 %v2446
      %2725 = vmatprep.subr.mxu0 %v2437
      %2726 = vmatpush1.msra.mxu0 %v2436
      %2727 = vmatprep.subr.mxu0 0.0
      %2728 = vmatpush2.msra.mxu0 0.0
      %2729 = vmatprep.subr.mxu0 0.0
      %2730 = vmatpush2.msra.mxu0 0.0
      %2731 = vmatprep.subr.mxu0 0.0
      %2732 = vmatpush2.msra.mxu0 0.0
      %2733 = vmatprep.subr.mxu0 0.0
      %2734 = vmatpush2.msra.mxu0 0.0
      %2735 = vmatprep.subr.mxu0 0.0
      %2736 = vmatpush2.msra.mxu0 0.0
      %2737 = vmatprep.subr.mxu0 0.0
      %2738 = vmatpush2.msra.mxu0 0.0
      %2739 = vmatprep.subr.mxu0 0.0
      %2740 = vmatpush2.msra.mxu0 0.0
      %2741 = vmatprep.subr.mxu0 0.0
      %2742 = vmatpush2.msra.mxu0 0.0
      %2743 = vmatprep.subr.mxu0 0.0
      %2744 = vmatpush2.msra.mxu0 0.0
      %2745 = vmatprep.subr.mxu0 0.0
      %2746 = vmatpush2.msra.mxu0 0.0
      %2747 = vmatprep.subr.mxu0 0.0
      %2748 = vmatpush2.msra.mxu0 0.0
      %2749 = vmatprep.subr.mxu0 0.0
      %2750 = vmatpush2.msra.mxu0 0.0
      %2751 = vmatprep.subr.mxu0 0.0
      %2752 = vmatpush2.msra.mxu0 0.0
      %2753 = vmatprep.subr.mxu0 0.0
      %2754 = vmatpush2.msra.mxu0 0.0
      %2755 = vmatprep.subr.mxu0 0.0
      %2756 = vmatpush2.msra.mxu0 0.0
      %2757 = vmatprep.subr.mxu0 0.0
      %2758 = vmatpush2.msra.mxu0 0.0
      %2759 = vmatprep.mubr.f32.mxu0 0.0
      %2760 = vmatmul.mubr.f32.gmra.mxu0 %v2536
      %v2761 = vpop.f32.mrf.mxu0
      %v2762 = vadd.f32 %v2527, %v2761
      %v2763 = vpop.f32.mrf.mxu0
      %v2764 = vadd.f32 %v2527, %v2763
      %2765 = vmatprep.mubr.f32.mxu0 0.0
      %2766 = vmatmul.mubr.f32.gmra.mxu0 %v2539
      %v2767 = vpop.f32.mrf.mxu0
      %v2768 = vadd.f32 %v2532, %v2767
      %v2769 = vpop.f32.mrf.mxu0
      %v2770 = vadd.f32 %v2532, %v2769
      %2771 = vdwg.mxu0
      %2772 = vmatprep.subr.mxu0 0.0
      %2773 = vmatpush1.msra.mxu0 0.0
      %2774 = vmatprep.subr.mxu0 0.0
      %2775 = vmatpush1.msra.mxu0 0.0
      %2776 = vmatprep.subr.mxu0 0.0
      %2777 = vmatpush1.msra.mxu0 0.0
      %2778 = vmatprep.subr.mxu0 0.0
      %2779 = vmatpush1.msra.mxu0 0.0
      %2780 = vmatprep.subr.mxu0 0.0
      %2781 = vmatpush1.msra.mxu0 0.0
      %2782 = vmatprep.subr.mxu0 0.0
      %2783 = vmatpush1.msra.mxu0 0.0
      %2784 = vmatprep.subr.mxu0 0.0
      %2785 = vmatpush1.msra.mxu0 0.0
      %2786 = vmatprep.subr.mxu0 %v2519
      %2787 = vmatpush1.msra.mxu0 %v2518
      %2788 = vmatprep.subr.mxu0 %v2509
      %2789 = vmatpush1.msra.mxu0 %v2508
      %2790 = vmatprep.subr.mxu0 %v2499
      %2791 = vmatpush1.msra.mxu0 %v2498
      %2792 = vmatprep.subr.mxu0 %v2489
      %2793 = vmatpush1.msra.mxu0 %v2488
      %2794 = vmatprep.subr.mxu0 %v2479
      %2795 = vmatpush1.msra.mxu0 %v2478
      %2796 = vmatprep.subr.mxu0 %v2469
      %2797 = vmatpush1.msra.mxu0 %v2468
      %2798 = vmatprep.subr.mxu0 %v2459
      %2799 = vmatpush1.msra.mxu0 %v2458
      %2800 = vmatprep.subr.mxu0 %v2449
      %2801 = vmatpush1.msra.mxu0 %v2448
      %2802 = vmatprep.subr.mxu0 %v2439
      %2803 = vmatpush1.msra.mxu0 %v2438
      %2804 = vmatprep.subr.mxu0 0.0
      %2805 = vmatpush2.msra.mxu0 0.0
      %2806 = vmatprep.subr.mxu0 0.0
      %2807 = vmatpush2.msra.mxu0 0.0
      %2808 = vmatprep.subr.mxu0 0.0
      %2809 = vmatpush2.msra.mxu0 0.0
      %2810 = vmatprep.subr.mxu0 0.0
      %2811 = vmatpush2.msra.mxu0 0.0
      %2812 = vmatprep.subr.mxu0 0.0
      %2813 = vmatpush2.msra.mxu0 0.0
      %2814 = vmatprep.subr.mxu0 0.0
      %2815 = vmatpush2.msra.mxu0 0.0
      %2816 = vmatprep.subr.mxu0 0.0
      %2817 = vmatpush2.msra.mxu0 0.0
      %2818 = vmatprep.subr.mxu0 0.0
      %2819 = vmatpush2.msra.mxu0 0.0
      %2820 = vmatprep.subr.mxu0 0.0
      %2821 = vmatpush2.msra.mxu0 0.0
      %2822 = vmatprep.subr.mxu0 0.0
      %2823 = vmatpush2.msra.mxu0 0.0
      %2824 = vmatprep.subr.mxu0 0.0
      %2825 = vmatpush2.msra.mxu0 0.0
      %2826 = vmatprep.subr.mxu0 0.0
      %2827 = vmatpush2.msra.mxu0 0.0
      %2828 = vmatprep.subr.mxu0 0.0
      %2829 = vmatpush2.msra.mxu0 0.0
      %2830 = vmatprep.subr.mxu0 0.0
      %2831 = vmatpush2.msra.mxu0 0.0
      %2832 = vmatprep.subr.mxu0 0.0
      %2833 = vmatpush2.msra.mxu0 0.0
      %2834 = vmatprep.subr.mxu0 0.0
      %2835 = vmatpush2.msra.mxu0 0.0
      %2836 = vmatprep.mubr.f32.mxu0 0.0
      %2837 = vmatmul.mubr.f32.gmra.mxu0 %v2536
      %v2838 = vpop.f32.mrf.mxu0
      %v2839 = vadd.f32 %v2527, %v2838
      %v2840 = vpop.f32.mrf.mxu0
      %v2841 = vadd.f32 %v2527, %v2840
      %2842 = vmatprep.mubr.f32.mxu0 0.0
      %2843 = vmatmul.mubr.f32.gmra.mxu0 %v2539
      %v2844 = vpop.f32.mrf.mxu0
      %v2845 = vadd.f32 %v2532, %v2844
      %v2846 = vpop.f32.mrf.mxu0
      %v2847 = vadd.f32 %v2532, %v2846
      %2848 = vdwg.mxu0
      %2849 = vmatprep.subr.mxu0 0.0
      %2850 = vmatpush1.msra.mxu0 0.0
      %2851 = vmatprep.subr.mxu0 0.0
      %2852 = vmatpush1.msra.mxu0 0.0
      %2853 = vmatprep.subr.mxu0 0.0
      %2854 = vmatpush1.msra.mxu0 0.0
      %2855 = vmatprep.subr.mxu0 0.0
      %2856 = vmatpush1.msra.mxu0 0.0
      %2857 = vmatprep.subr.mxu0 0.0
      %2858 = vmatpush1.msra.mxu0 0.0
      %2859 = vmatprep.subr.mxu0 0.0
      %2860 = vmatpush1.msra.mxu0 0.0
      %2861 = vmatprep.subr.mxu0 0.0
      %2862 = vmatpush1.msra.mxu0 0.0
      %2863 = vmatprep.subr.mxu0 %v2521
      %2864 = vmatpush1.msra.mxu0 %v2520
      %2865 = vmatprep.subr.mxu0 %v2511
      %2866 = vmatpush1.msra.mxu0 %v2510
      %2867 = vmatprep.subr.mxu0 %v2501
      %2868 = vmatpush1.msra.mxu0 %v2500
      %2869 = vmatprep.subr.mxu0 %v2491
      %2870 = vmatpush1.msra.mxu0 %v2490
      %2871 = vmatprep.subr.mxu0 %v2481
      %2872 = vmatpush1.msra.mxu0 %v2480
      %2873 = vmatprep.subr.mxu0 %v2471
      %2874 = vmatpush1.msra.mxu0 %v2470
      %2875 = vmatprep.subr.mxu0 %v2461
      %2876 = vmatpush1.msra.mxu0 %v2460
      %2877 = vmatprep.subr.mxu0 %v2451
      %2878 = vmatpush1.msra.mxu0 %v2450
      %2879 = vmatprep.subr.mxu0 %v2441
      %2880 = vmatpush1.msra.mxu0 %v2440
      %2881 = vmatprep.subr.mxu0 0.0
      %2882 = vmatpush2.msra.mxu0 0.0
      %2883 = vmatprep.subr.mxu0 0.0
      %2884 = vmatpush2.msra.mxu0 0.0
      %2885 = vmatprep.subr.mxu0 0.0
      %2886 = vmatpush2.msra.mxu0 0.0
      %2887 = vmatprep.subr.mxu0 0.0
      %2888 = vmatpush2.msra.mxu0 0.0
      %2889 = vmatprep.subr.mxu0 0.0
      %2890 = vmatpush2.msra.mxu0 0.0
      %2891 = vmatprep.subr.mxu0 0.0
      %2892 = vmatpush2.msra.mxu0 0.0
      %2893 = vmatprep.subr.mxu0 0.0
      %2894 = vmatpush2.msra.mxu0 0.0
      %2895 = vmatprep.subr.mxu0 0.0
      %2896 = vmatpush2.msra.mxu0 0.0
      %2897 = vmatprep.subr.mxu0 0.0
      %2898 = vmatpush2.msra.mxu0 0.0
      %2899 = vmatprep.subr.mxu0 0.0
      %2900 = vmatpush2.msra.mxu0 0.0
      %2901 = vmatprep.subr.mxu0 0.0
      %2902 = vmatpush2.msra.mxu0 0.0
      %2903 = vmatprep.subr.mxu0 0.0
      %2904 = vmatpush2.msra.mxu0 0.0
      %2905 = vmatprep.subr.mxu0 0.0
      %2906 = vmatpush2.msra.mxu0 0.0
      %2907 = vmatprep.subr.mxu0 0.0
      %2908 = vmatpush2.msra.mxu0 0.0
      %2909 = vmatprep.subr.mxu0 0.0
      %2910 = vmatpush2.msra.mxu0 0.0
      %2911 = vmatprep.subr.mxu0 0.0
      %2912 = vmatpush2.msra.mxu0 0.0
      %2913 = vmatprep.mubr.f32.mxu0 0.0
      %2914 = vmatmul.mubr.f32.gmra.mxu0 %v2536
      %v2915 = vpop.f32.mrf.mxu0
      %v2916 = vadd.f32 %v2527, %v2915
      %v2917 = vpop.f32.mrf.mxu0
      %v2918 = vadd.f32 %v2527, %v2917
      %2919 = vmatprep.mubr.f32.mxu0 0.0
      %2920 = vmatmul.mubr.f32.gmra.mxu0 %v2539
      %v2921 = vpop.f32.mrf.mxu0
      %v2922 = vadd.f32 %v2532, %v2921
      %v2923 = vpop.f32.mrf.mxu0
      %v2924 = vadd.f32 %v2532, %v2923
      %2925 = vdwg.mxu0
      %v2926 = vmax.f32 %v2608, 0.0
      %v2927 = vmax.f32 %v2610, 0.0
      %v2928 = vmax.f32 %v2685, 0.0
      %v2929 = vmax.f32 %v2687, 0.0
      %v2930 = vmax.f32 %v2762, 0.0
      %v2931 = vmax.f32 %v2764, 0.0
      %v2932 = vmax.f32 %v2839, 0.0
      %v2933 = vmax.f32 %v2841, 0.0
      %v2934 = vmax.f32 %v2916, 0.0
      %v2935 = vmax.f32 %v2918, 0.0
      %v2938 = vlaneseq
      %v2939 = vshrl.u32 %v2938, 7
      %v2940 = vsub.s32 0, %v2939
      %v2941 = vrot.slane %v320, %v2940
      %v2942 = vlaneseq
      %v2943 = vshrl.u32 %v2942, 7
      %v2944 = vsub.s32 1, %v2943
      %v2945 = vrot.slane %v320, %v2944
      %v2946 = vlaneseq
      %v2947 = vshrl.u32 %v2946, 7
      %v2948 = vsub.s32 2, %v2947
      %v2949 = vrot.slane %v320, %v2948
      %v2950 = vlaneseq
      %v2951 = vshrl.u32 %v2950, 7
      %v2952 = vsub.s32 3, %v2951
      %v2953 = vrot.slane %v320, %v2952
      %v2954 = vlaneseq
      %v2955 = vshrl.u32 %v2954, 7
      %v2956 = vsub.s32 4, %v2955
      %v2957 = vrot.slane %v320, %v2956
      %v2958 = vlaneseq
      %v2959 = vshrl.u32 %v2958, 7
      %v2960 = vsub.s32 5, %v2959
      %v2961 = vrot.slane %v320, %v2960
      %v2962 = vlaneseq
      %v2963 = vshrl.u32 %v2962, 7
      %v2964 = vsub.s32 6, %v2963
      %v2965 = vrot.slane %v320, %v2964
      %v2966 = vlaneseq
      %v2967 = vshrl.u32 %v2966, 7
      %v2968 = vsub.s32 7, %v2967
      %v2969 = vrot.slane %v320, %v2968
      %v2970 = vlaneseq
      %v2971 = vshrl.u32 %v2970, 7
      %v2972 = vsub.s32 0, %v2971
      %v2973 = vrot.slane %v321, %v2972
      %v2974 = vlaneseq
      %v2975 = vshrl.u32 %v2974, 7
      %v2976 = vsub.s32 1, %v2975
      %v2977 = vrot.slane %v321, %v2976
      %v2988 = vmul.f32 %v2926, %v2941
      %v2989 = vmul.f32 %v2927, %v2945
      %v2990 = vmul.f32 %v2928, %v2949
      %v2991 = vmul.f32 %v2929, %v2953
      %v2992 = vmul.f32 %v2930, %v2957
      %v2993 = vmul.f32 %v2931, %v2961
      %v2994 = vmul.f32 %v2932, %v2965
      %v2995 = vmul.f32 %v2933, %v2969
      %v2996 = vmul.f32 %v2934, %v2973
      %v2997 = vmul.f32 %v2935, %v2977
      %3008 = vrot.lane.b32.xlu0 %v2988, 35
      %v3009 = vpop.permute.xlu0 %3008
      %3010 = vrot.lane.b32.xlu0 %v2989, 35
      %v3011 = vpop.permute.xlu0 %3010
      %3012 = vrot.lane.b32.xlu0 %v2990, 35
      %v3013 = vpop.permute.xlu0 %3012
      %3014 = vrot.lane.b32.xlu0 %v2991, 35
      %v3015 = vpop.permute.xlu0 %3014
      %3016 = vrot.lane.b32.xlu0 %v2992, 35
      %v3017 = vpop.permute.xlu0 %3016
      %3018 = vrot.lane.b32.xlu0 %v2993, 35
      %v3019 = vpop.permute.xlu0 %3018
      %3020 = vrot.lane.b32.xlu0 %v2994, 35
      %v3021 = vpop.permute.xlu0 %3020
      %3022 = vrot.lane.b32.xlu0 %v2995, 35
      %v3023 = vpop.permute.xlu0 %3022
      %3024 = vrot.lane.b32.xlu0 %v2996, 35
      %v3025 = vpop.permute.xlu0 %3024
      %3026 = vrot.lane.b32.xlu0 %v2997, 35
      %v3027 = vpop.permute.xlu0 %3026
      %vm3028 = vcmask 285696
      %v3029 = vsel %vm3028, %v3009, %v3011
      %v3030 = vsel %vm3028, %v3011, %v3013
      %v3031 = vsel %vm3028, %v3013, %v3015
      %v3032 = vsel %vm3028, %v3015, %v3017
      %v3033 = vsel %vm3028, %v3017, %v3019
      %v3034 = vsel %vm3028, %v3019, %v3021
      %v3035 = vsel %vm3028, %v3021, %v3023
      %v3036 = vsel %vm3028, %v3023, %v3025
      %v3037 = vsel %vm3028, %v3025, %v3027
      %vm3048 = vcmask 1047832
      %3049 = vst.msk [vmem:[#allocation4] sm:$0xff] %vm3048, %v3009
      %3050 = vst [vmem:[#allocation4 + $0x8] sm:$0xff] %v3029
      %3051 = vst [vmem:[#allocation4 + $0x10] sm:$0xff] %v3030
      %3052 = vst [vmem:[#allocation4 + $0x18] sm:$0xff] %v3031
      %3053 = vst [vmem:[#allocation4 + $0x20] sm:$0xff] %v3032
      %3054 = vst [vmem:[#allocation4 + $0x28] sm:$0xff] %v3033
      %3055 = vst [vmem:[#allocation4 + $0x30] sm:$0xff] %v3034
      %3056 = vst [vmem:[#allocation4 + $0x38] sm:$0xff] %v3035
      %3057 = vst [vmem:[#allocation4 + $0x40] sm:$0xff] %v3036
      %vm3058 = vcmask 318464
      %3059 = vst.msk [vmem:[#allocation4 + $0x48] sm:$0xff] %vm3058, %v3037
      %v3060 = vld [vmem:[#allocation4] sm:$0xff]
      %v3061 = vld [vmem:[#allocation4 + $0x8] sm:$0xff]
      %v3062 = vld [vmem:[#allocation4 + $0x10] sm:$0xff]
      %v3063 = vld [vmem:[#allocation4 + $0x18] sm:$0xff]
      %v3064 = vld [vmem:[#allocation4 + $0x20] sm:$0xff]
      %v3065 = vld [vmem:[#allocation4 + $0x28] sm:$0xff]
      %v3066 = vld [vmem:[#allocation4 + $0x30] sm:$0xff]
      %v3067 = vld [vmem:[#allocation4 + $0x38] sm:$0xff]
      %v3068 = vld [vmem:[#allocation4 + $0x40] sm:$0xff]
      %v3069 = vld [vmem:[#allocation4 + $0x48] sm:$0xff]
      %3070 = vst [vmem:[#allocation3] sm:$0xff] %v3060
      %3071 = vst [vmem:[#allocation3 + $0x8] sm:$0xff] %v3061
      %3072 = vst [vmem:[#allocation3 + $0x10] sm:$0xff] %v3062
      %3073 = vst [vmem:[#allocation3 + $0x18] sm:$0xff] %v3063
      %3074 = vst [vmem:[#allocation3 + $0x20] sm:$0xff] %v3064
      %3075 = vst [vmem:[#allocation3 + $0x28] sm:$0xff] %v3065
      %3076 = vst [vmem:[#allocation3 + $0x30] sm:$0xff] %v3066
      %3077 = vst [vmem:[#allocation3 + $0x38] sm:$0xff] %v3067
      %3078 = vst [vmem:[#allocation3 + $0x40] sm:$0xff] %v3068
      %3079 = vst.msk [vmem:[#allocation3 + $0x48] sm:$0xff] %vm2018, %v3069
      %v3080 = vld [vmem:[#allocation4] sm:$0xff]
      %v3081 = vld [vmem:[#allocation4 + $0x8] sm:$0xff]
      %v3082 = vld [vmem:[#allocation4 + $0x10] sm:$0xff]
      %v3083 = vld [vmem:[#allocation4 + $0x18] sm:$0xff]
      %v3084 = vld [vmem:[#allocation4 + $0x20] sm:$0xff]
      %v3085 = vld [vmem:[#allocation4 + $0x28] sm:$0xff]
      %v3086 = vld [vmem:[#allocation4 + $0x30] sm:$0xff]
      %v3087 = vld [vmem:[#allocation4 + $0x38] sm:$0xff]
      %v3088 = vld [vmem:[#allocation4 + $0x40] sm:$0xff]
      %v3089 = vld [vmem:[#allocation4 + $0x48] sm:$0xff]
      %3100 = vrot.lane.b32.xlu0 %v3080, 127
      %v3101 = vpop.permute.xlu0 %3100
      %3102 = vrot.lane.b32.xlu0 %v3081, 127
      %v3103 = vpop.permute.xlu0 %3102
      %3104 = vrot.lane.b32.xlu0 %v3082, 127
      %v3105 = vpop.permute.xlu0 %3104
      %3106 = vrot.lane.b32.xlu0 %v3083, 127
      %v3107 = vpop.permute.xlu0 %3106
      %3108 = vrot.lane.b32.xlu0 %v3084, 127
      %v3109 = vpop.permute.xlu0 %3108
      %3110 = vrot.lane.b32.xlu0 %v3085, 127
      %v3111 = vpop.permute.xlu0 %3110
      %3112 = vrot.lane.b32.xlu0 %v3086, 127
      %v3113 = vpop.permute.xlu0 %3112
      %3114 = vrot.lane.b32.xlu0 %v3087, 127
      %v3115 = vpop.permute.xlu0 %3114
      %3116 = vrot.lane.b32.xlu0 %v3088, 127
      %v3117 = vpop.permute.xlu0 %3116
      %3118 = vrot.lane.b32.xlu0 %v3089, 127
      %v3119 = vpop.permute.xlu0 %3118
      %v3120 = vsel %vm2050, %v3101, %v3103
      %v3121 = vsel %vm2050, %v3103, %v3105
      %v3122 = vsel %vm2050, %v3105, %v3107
      %v3123 = vsel %vm2050, %v3107, %v3109
      %v3124 = vsel %vm2050, %v3109, %v3111
      %v3125 = vsel %vm2050, %v3111, %v3113
      %v3126 = vsel %vm2050, %v3113, %v3115
      %v3127 = vsel %vm2050, %v3115, %v3117
      %v3128 = vsel %vm2050, %v3117, %v3119
      %3139 = vst [vmem:[#allocation3 + $0x50] sm:$0xff] %v3120
      %3140 = vst [vmem:[#allocation3 + $0x58] sm:$0xff] %v3121
      %3141 = vst [vmem:[#allocation3 + $0x60] sm:$0xff] %v3122
      %3142 = vst [vmem:[#allocation3 + $0x68] sm:$0xff] %v3123
      %3143 = vst [vmem:[#allocation3 + $0x70] sm:$0xff] %v3124
      %3144 = vst [vmem:[#allocation3 + $0x78] sm:$0xff] %v3125
      %3145 = vst [vmem:[#allocation3 + $0x80] sm:$0xff] %v3126
      %3146 = vst [vmem:[#allocation3 + $0x88] sm:$0xff] %v3127
      %3147 = vst [vmem:[#allocation3 + $0x90] sm:$0xff] %v3128
      %3148 = vst.msk [vmem:[#allocation3 + $0x98] sm:$0xff] %vm2018, %v3119
      %v3149 = vld [vmem:[#allocation4] sm:$0xff]
      %v3150 = vld [vmem:[#allocation4 + $0x8] sm:$0xff]
      %v3151 = vld [vmem:[#allocation4 + $0x10] sm:$0xff]
      %v3152 = vld [vmem:[#allocation4 + $0x18] sm:$0xff]
      %v3153 = vld [vmem:[#allocation4 + $0x20] sm:$0xff]
      %v3154 = vld [vmem:[#allocation4 + $0x28] sm:$0xff]
      %v3155 = vld [vmem:[#allocation4 + $0x30] sm:$0xff]
      %v3156 = vld [vmem:[#allocation4 + $0x38] sm:$0xff]
      %v3157 = vld [vmem:[#allocation4 + $0x40] sm:$0xff]
      %v3158 = vld [vmem:[#allocation4 + $0x48] sm:$0xff]
      %3169 = vrot.lane.b32.xlu0 %v3149, 126
      %v3170 = vpop.permute.xlu0 %3169
      %3171 = vrot.lane.b32.xlu0 %v3150, 126
      %v3172 = vpop.permute.xlu0 %3171
      %3173 = vrot.lane.b32.xlu0 %v3151, 126
      %v3174 = vpop.permute.xlu0 %3173
      %3175 = vrot.lane.b32.xlu0 %v3152, 126
      %v3176 = vpop.permute.xlu0 %3175
      %3177 = vrot.lane.b32.xlu0 %v3153, 126
      %v3178 = vpop.permute.xlu0 %3177
      %3179 = vrot.lane.b32.xlu0 %v3154, 126
      %v3180 = vpop.permute.xlu0 %3179
      %3181 = vrot.lane.b32.xlu0 %v3155, 126
      %v3182 = vpop.permute.xlu0 %3181
      %3183 = vrot.lane.b32.xlu0 %v3156, 126
      %v3184 = vpop.permute.xlu0 %3183
      %3185 = vrot.lane.b32.xlu0 %v3157, 126
      %v3186 = vpop.permute.xlu0 %3185
      %3187 = vrot.lane.b32.xlu0 %v3158, 126
      %v3188 = vpop.permute.xlu0 %3187
      %v3189 = vsel %vm2100, %v3170, %v3172
      %v3190 = vsel %vm2100, %v3172, %v3174
      %v3191 = vsel %vm2100, %v3174, %v3176
      %v3192 = vsel %vm2100, %v3176, %v3178
      %v3193 = vsel %vm2100, %v3178, %v3180
      %v3194 = vsel %vm2100, %v3180, %v3182
      %v3195 = vsel %vm2100, %v3182, %v3184
      %v3196 = vsel %vm2100, %v3184, %v3186
      %v3197 = vsel %vm2100, %v3186, %v3188
      %3208 = vst [vmem:[#allocation3 + $0xa0] sm:$0xff] %v3189
      %3209 = vst [vmem:[#allocation3 + $0xa8] sm:$0xff] %v3190
      %3210 = vst [vmem:[#allocation3 + $0xb0] sm:$0xff] %v3191
      %3211 = vst [vmem:[#allocation3 + $0xb8] sm:$0xff] %v3192
      %3212 = vst [vmem:[#allocation3 + $0xc0] sm:$0xff] %v3193
      %3213 = vst [vmem:[#allocation3 + $0xc8] sm:$0xff] %v3194
      %3214 = vst [vmem:[#allocation3 + $0xd0] sm:$0xff] %v3195
      %3215 = vst [vmem:[#allocation3 + $0xd8] sm:$0xff] %v3196
      %3216 = vst [vmem:[#allocation3 + $0xe0] sm:$0xff] %v3197
      %3217 = vst.msk [vmem:[#allocation3 + $0xe8] sm:$0xff] %vm2018, %v3188
      %v3218 = vld [vmem:[#allocation4] sm:$0xff]
      %v3219 = vld [vmem:[#allocation4 + $0x8] sm:$0xff]
      %v3220 = vld [vmem:[#allocation4 + $0x10] sm:$0xff]
      %v3221 = vld [vmem:[#allocation4 + $0x18] sm:$0xff]
      %v3222 = vld [vmem:[#allocation4 + $0x20] sm:$0xff]
      %v3223 = vld [vmem:[#allocation4 + $0x28] sm:$0xff]
      %v3224 = vld [vmem:[#allocation4 + $0x30] sm:$0xff]
      %v3225 = vld [vmem:[#allocation4 + $0x38] sm:$0xff]
      %v3226 = vld [vmem:[#allocation4 + $0x40] sm:$0xff]
      %v3227 = vld [vmem:[#allocation4 + $0x48] sm:$0xff]
      %3238 = vrot.lane.b32.xlu0 %v3218, 94
      %v3239 = vpop.permute.xlu0 %3238
      %3240 = vrot.lane.b32.xlu0 %v3219, 94
      %v3241 = vpop.permute.xlu0 %3240
      %3242 = vrot.lane.b32.xlu0 %v3220, 94
      %v3243 = vpop.permute.xlu0 %3242
      %3244 = vrot.lane.b32.xlu0 %v3221, 94
      %v3245 = vpop.permute.xlu0 %3244
      %3246 = vrot.lane.b32.xlu0 %v3222, 94
      %v3247 = vpop.permute.xlu0 %3246
      %3248 = vrot.lane.b32.xlu0 %v3223, 94
      %v3249 = vpop.permute.xlu0 %3248
      %3250 = vrot.lane.b32.xlu0 %v3224, 94
      %v3251 = vpop.permute.xlu0 %3250
      %3252 = vrot.lane.b32.xlu0 %v3225, 94
      %v3253 = vpop.permute.xlu0 %3252
      %3254 = vrot.lane.b32.xlu0 %v3226, 94
      %v3255 = vpop.permute.xlu0 %3254
      %3256 = vrot.lane.b32.xlu0 %v3227, 94
      %v3257 = vpop.permute.xlu0 %3256
      %v3258 = vsel %vm2150, %v3239, %v3241
      %v3259 = vsel %vm2150, %v3241, %v3243
      %v3260 = vsel %vm2150, %v3243, %v3245
      %v3261 = vsel %vm2150, %v3245, %v3247
      %v3262 = vsel %vm2150, %v3247, %v3249
      %v3263 = vsel %vm2150, %v3249, %v3251
      %v3264 = vsel %vm2150, %v3251, %v3253
      %v3265 = vsel %vm2150, %v3253, %v3255
      %v3266 = vsel %vm2150, %v3255, %v3257
      %3277 = vst [vmem:[#allocation3 + $0xf0] sm:$0xff] %v3258
      %3278 = vst [vmem:[#allocation3 + $0xf8] sm:$0xff] %v3259
      %3279 = vst [vmem:[#allocation3 + $0x100] sm:$0xff] %v3260
      %3280 = vst [vmem:[#allocation3 + $0x108] sm:$0xff] %v3261
      %3281 = vst [vmem:[#allocation3 + $0x110] sm:$0xff] %v3262
      %3282 = vst [vmem:[#allocation3 + $0x118] sm:$0xff] %v3263
      %3283 = vst [vmem:[#allocation3 + $0x120] sm:$0xff] %v3264
      %3284 = vst [vmem:[#allocation3 + $0x128] sm:$0xff] %v3265
      %3285 = vst [vmem:[#allocation3 + $0x130] sm:$0xff] %v3266
      %3286 = vst.msk [vmem:[#allocation3 + $0x138] sm:$0xff] %vm2018, %v3257
      %v3287 = vld [vmem:[#allocation4] sm:$0xff]
      %v3288 = vld [vmem:[#allocation4 + $0x8] sm:$0xff]
      %v3289 = vld [vmem:[#allocation4 + $0x10] sm:$0xff]
      %v3290 = vld [vmem:[#allocation4 + $0x18] sm:$0xff]
      %v3291 = vld [vmem:[#allocation4 + $0x20] sm:$0xff]
      %v3292 = vld [vmem:[#allocation4 + $0x28] sm:$0xff]
      %v3293 = vld [vmem:[#allocation4 + $0x30] sm:$0xff]
      %v3294 = vld [vmem:[#allocation4 + $0x38] sm:$0xff]
      %v3295 = vld [vmem:[#allocation4 + $0x40] sm:$0xff]
      %v3296 = vld [vmem:[#allocation4 + $0x48] sm:$0xff]
      %3307 = vrot.lane.b32.xlu0 %v3287, 93
      %v3308 = vpop.permute.xlu0 %3307
      %3309 = vrot.lane.b32.xlu0 %v3288, 93
      %v3310 = vpop.permute.xlu0 %3309
      %3311 = vrot.lane.b32.xlu0 %v3289, 93
      %v3312 = vpop.permute.xlu0 %3311
      %3313 = vrot.lane.b32.xlu0 %v3290, 93
      %v3314 = vpop.permute.xlu0 %3313
      %3315 = vrot.lane.b32.xlu0 %v3291, 93
      %v3316 = vpop.permute.xlu0 %3315
      %3317 = vrot.lane.b32.xlu0 %v3292, 93
      %v3318 = vpop.permute.xlu0 %3317
      %3319 = vrot.lane.b32.xlu0 %v3293, 93
      %v3320 = vpop.permute.xlu0 %3319
      %3321 = vrot.lane.b32.xlu0 %v3294, 93
      %v3322 = vpop.permute.xlu0 %3321
      %3323 = vrot.lane.b32.xlu0 %v3295, 93
      %v3324 = vpop.permute.xlu0 %3323
      %3325 = vrot.lane.b32.xlu0 %v3296, 93
      %v3326 = vpop.permute.xlu0 %3325
      %v3327 = vsel %vm2200, %v3308, %v3310
      %v3328 = vsel %vm2200, %v3310, %v3312
      %v3329 = vsel %vm2200, %v3312, %v3314
      %v3330 = vsel %vm2200, %v3314, %v3316
      %v3331 = vsel %vm2200, %v3316, %v3318
      %v3332 = vsel %vm2200, %v3318, %v3320
      %v3333 = vsel %vm2200, %v3320, %v3322
      %v3334 = vsel %vm2200, %v3322, %v3324
      %v3335 = vsel %vm2200, %v3324, %v3326
      %3346 = vst [vmem:[#allocation3 + $0x140] sm:$0xff] %v3327
      %3347 = vst [vmem:[#allocation3 + $0x148] sm:$0xff] %v3328
      %3348 = vst [vmem:[#allocation3 + $0x150] sm:$0xff] %v3329
      %3349 = vst [vmem:[#allocation3 + $0x158] sm:$0xff] %v3330
      %3350 = vst [vmem:[#allocation3 + $0x160] sm:$0xff] %v3331
      %3351 = vst [vmem:[#allocation3 + $0x168] sm:$0xff] %v3332
      %3352 = vst [vmem:[#allocation3 + $0x170] sm:$0xff] %v3333
      %3353 = vst [vmem:[#allocation3 + $0x178] sm:$0xff] %v3334
      %3354 = vst [vmem:[#allocation3 + $0x180] sm:$0xff] %v3335
      %3355 = vst.msk [vmem:[#allocation3 + $0x188] sm:$0xff] %vm2018, %v3326
      %v3356 = vld [vmem:[#allocation4] sm:$0xff]
      %v3357 = vld [vmem:[#allocation4 + $0x8] sm:$0xff]
      %v3358 = vld [vmem:[#allocation4 + $0x10] sm:$0xff]
      %v3359 = vld [vmem:[#allocation4 + $0x18] sm:$0xff]
      %v3360 = vld [vmem:[#allocation4 + $0x20] sm:$0xff]
      %v3361 = vld [vmem:[#allocation4 + $0x28] sm:$0xff]
      %v3362 = vld [vmem:[#allocation4 + $0x30] sm:$0xff]
      %v3363 = vld [vmem:[#allocation4 + $0x38] sm:$0xff]
      %v3364 = vld [vmem:[#allocation4 + $0x40] sm:$0xff]
      %v3365 = vld [vmem:[#allocation4 + $0x48] sm:$0xff]
      %3376 = vrot.lane.b32.xlu0 %v3356, 92
      %v3377 = vpop.permute.xlu0 %3376
      %3378 = vrot.lane.b32.xlu0 %v3357, 92
      %v3379 = vpop.permute.xlu0 %3378
      %3380 = vrot.lane.b32.xlu0 %v3358, 92
      %v3381 = vpop.permute.xlu0 %3380
      %3382 = vrot.lane.b32.xlu0 %v3359, 92
      %v3383 = vpop.permute.xlu0 %3382
      %3384 = vrot.lane.b32.xlu0 %v3360, 92
      %v3385 = vpop.permute.xlu0 %3384
      %3386 = vrot.lane.b32.xlu0 %v3361, 92
      %v3387 = vpop.permute.xlu0 %3386
      %3388 = vrot.lane.b32.xlu0 %v3362, 92
      %v3389 = vpop.permute.xlu0 %3388
      %3390 = vrot.lane.b32.xlu0 %v3363, 92
      %v3391 = vpop.permute.xlu0 %3390
      %3392 = vrot.lane.b32.xlu0 %v3364, 92
      %v3393 = vpop.permute.xlu0 %3392
      %3394 = vrot.lane.b32.xlu0 %v3365, 92
      %v3395 = vpop.permute.xlu0 %3394
      %v3396 = vsel %vm2250, %v3377, %v3379
      %v3397 = vsel %vm2250, %v3379, %v3381
      %v3398 = vsel %vm2250, %v3381, %v3383
      %v3399 = vsel %vm2250, %v3383, %v3385
      %v3400 = vsel %vm2250, %v3385, %v3387
      %v3401 = vsel %vm2250, %v3387, %v3389
      %v3402 = vsel %vm2250, %v3389, %v3391
      %v3403 = vsel %vm2250, %v3391, %v3393
      %v3404 = vsel %vm2250, %v3393, %v3395
      %3415 = vst [vmem:[#allocation3 + $0x190] sm:$0xff] %v3396
      %3416 = vst [vmem:[#allocation3 + $0x198] sm:$0xff] %v3397
      %3417 = vst [vmem:[#allocation3 + $0x1a0] sm:$0xff] %v3398
      %3418 = vst [vmem:[#allocation3 + $0x1a8] sm:$0xff] %v3399
      %3419 = vst [vmem:[#allocation3 + $0x1b0] sm:$0xff] %v3400
      %3420 = vst [vmem:[#allocation3 + $0x1b8] sm:$0xff] %v3401
      %3421 = vst [vmem:[#allocation3 + $0x1c0] sm:$0xff] %v3402
      %3422 = vst [vmem:[#allocation3 + $0x1c8] sm:$0xff] %v3403
      %3423 = vst [vmem:[#allocation3 + $0x1d0] sm:$0xff] %v3404
      %3424 = vst.msk [vmem:[#allocation3 + $0x1d8] sm:$0xff] %vm2018, %v3395
      %v3425 = vld [vmem:[#allocation4] sm:$0xff]
      %v3426 = vld [vmem:[#allocation4 + $0x8] sm:$0xff]
      %v3427 = vld [vmem:[#allocation4 + $0x10] sm:$0xff]
      %v3428 = vld [vmem:[#allocation4 + $0x18] sm:$0xff]
      %v3429 = vld [vmem:[#allocation4 + $0x20] sm:$0xff]
      %v3430 = vld [vmem:[#allocation4 + $0x28] sm:$0xff]
      %v3431 = vld [vmem:[#allocation4 + $0x30] sm:$0xff]
      %v3432 = vld [vmem:[#allocation4 + $0x38] sm:$0xff]
      %v3433 = vld [vmem:[#allocation4 + $0x40] sm:$0xff]
      %v3434 = vld [vmem:[#allocation4 + $0x48] sm:$0xff]
      %3445 = vrot.lane.b32.xlu0 %v3425, 60
      %v3446 = vpop.permute.xlu0 %3445
      %3447 = vrot.lane.b32.xlu0 %v3426, 60
      %v3448 = vpop.permute.xlu0 %3447
      %3449 = vrot.lane.b32.xlu0 %v3427, 60
      %v3450 = vpop.permute.xlu0 %3449
      %3451 = vrot.lane.b32.xlu0 %v3428, 60
      %v3452 = vpop.permute.xlu0 %3451
      %3453 = vrot.lane.b32.xlu0 %v3429, 60
      %v3454 = vpop.permute.xlu0 %3453
      %3455 = vrot.lane.b32.xlu0 %v3430, 60
      %v3456 = vpop.permute.xlu0 %3455
      %3457 = vrot.lane.b32.xlu0 %v3431, 60
      %v3458 = vpop.permute.xlu0 %3457
      %3459 = vrot.lane.b32.xlu0 %v3432, 60
      %v3460 = vpop.permute.xlu0 %3459
      %3461 = vrot.lane.b32.xlu0 %v3433, 60
      %v3462 = vpop.permute.xlu0 %3461
      %3463 = vrot.lane.b32.xlu0 %v3434, 60
      %v3464 = vpop.permute.xlu0 %3463
      %v3465 = vsel %vm2300, %v3446, %v3448
      %v3466 = vsel %vm2300, %v3448, %v3450
      %v3467 = vsel %vm2300, %v3450, %v3452
      %v3468 = vsel %vm2300, %v3452, %v3454
      %v3469 = vsel %vm2300, %v3454, %v3456
      %v3470 = vsel %vm2300, %v3456, %v3458
      %v3471 = vsel %vm2300, %v3458, %v3460
      %v3472 = vsel %vm2300, %v3460, %v3462
      %v3473 = vsel %vm2300, %v3462, %v3464
      %3484 = vst [vmem:[#allocation3 + $0x1e0] sm:$0xff] %v3465
      %3485 = vst [vmem:[#allocation3 + $0x1e8] sm:$0xff] %v3466
      %3486 = vst [vmem:[#allocation3 + $0x1f0] sm:$0xff] %v3467
      %3487 = vst [vmem:[#allocation3 + $0x1f8] sm:$0xff] %v3468
      %3488 = vst [vmem:[#allocation3 + $0x200] sm:$0xff] %v3469
      %3489 = vst [vmem:[#allocation3 + $0x208] sm:$0xff] %v3470
      %3490 = vst [vmem:[#allocation3 + $0x210] sm:$0xff] %v3471
      %3491 = vst [vmem:[#allocation3 + $0x218] sm:$0xff] %v3472
      %3492 = vst [vmem:[#allocation3 + $0x220] sm:$0xff] %v3473
      %3493 = vst.msk [vmem:[#allocation3 + $0x228] sm:$0xff] %vm2018, %v3464
      %v3494 = vld [vmem:[#allocation4] sm:$0xff]
      %v3495 = vld [vmem:[#allocation4 + $0x8] sm:$0xff]
      %v3496 = vld [vmem:[#allocation4 + $0x10] sm:$0xff]
      %v3497 = vld [vmem:[#allocation4 + $0x18] sm:$0xff]
      %v3498 = vld [vmem:[#allocation4 + $0x20] sm:$0xff]
      %v3499 = vld [vmem:[#allocation4 + $0x28] sm:$0xff]
      %v3500 = vld [vmem:[#allocation4 + $0x30] sm:$0xff]
      %v3501 = vld [vmem:[#allocation4 + $0x38] sm:$0xff]
      %v3502 = vld [vmem:[#allocation4 + $0x40] sm:$0xff]
      %v3503 = vld [vmem:[#allocation4 + $0x48] sm:$0xff]
      %3514 = vrot.lane.b32.xlu0 %v3494, 59
      %v3515 = vpop.permute.xlu0 %3514
      %3516 = vrot.lane.b32.xlu0 %v3495, 59
      %v3517 = vpop.permute.xlu0 %3516
      %3518 = vrot.lane.b32.xlu0 %v3496, 59
      %v3519 = vpop.permute.xlu0 %3518
      %3520 = vrot.lane.b32.xlu0 %v3497, 59
      %v3521 = vpop.permute.xlu0 %3520
      %3522 = vrot.lane.b32.xlu0 %v3498, 59
      %v3523 = vpop.permute.xlu0 %3522
      %3524 = vrot.lane.b32.xlu0 %v3499, 59
      %v3525 = vpop.permute.xlu0 %3524
      %3526 = vrot.lane.b32.xlu0 %v3500, 59
      %v3527 = vpop.permute.xlu0 %3526
      %3528 = vrot.lane.b32.xlu0 %v3501, 59
      %v3529 = vpop.permute.xlu0 %3528
      %3530 = vrot.lane.b32.xlu0 %v3502, 59
      %v3531 = vpop.permute.xlu0 %3530
      %3532 = vrot.lane.b32.xlu0 %v3503, 59
      %v3533 = vpop.permute.xlu0 %3532
      %v3534 = vsel %vm2350, %v3515, %v3517
      %v3535 = vsel %vm2350, %v3517, %v3519
      %v3536 = vsel %vm2350, %v3519, %v3521
      %v3537 = vsel %vm2350, %v3521, %v3523
      %v3538 = vsel %vm2350, %v3523, %v3525
      %v3539 = vsel %vm2350, %v3525, %v3527
      %v3540 = vsel %vm2350, %v3527, %v3529
      %v3541 = vsel %vm2350, %v3529, %v3531
      %v3542 = vsel %vm2350, %v3531, %v3533
      %3553 = vst [vmem:[#allocation3 + $0x230] sm:$0xff] %v3534
      %3554 = vst [vmem:[#allocation3 + $0x238] sm:$0xff] %v3535
      %3555 = vst [vmem:[#allocation3 + $0x240] sm:$0xff] %v3536
      %3556 = vst [vmem:[#allocation3 + $0x248] sm:$0xff] %v3537
      %3557 = vst [vmem:[#allocation3 + $0x250] sm:$0xff] %v3538
      %3558 = vst [vmem:[#allocation3 + $0x258] sm:$0xff] %v3539
      %3559 = vst [vmem:[#allocation3 + $0x260] sm:$0xff] %v3540
      %3560 = vst [vmem:[#allocation3 + $0x268] sm:$0xff] %v3541
      %3561 = vst [vmem:[#allocation3 + $0x270] sm:$0xff] %v3542
      %3562 = vst.msk [vmem:[#allocation3 + $0x278] sm:$0xff] %vm2018, %v3533
      %v3563 = vld [vmem:[#allocation4] sm:$0xff]
      %v3564 = vld [vmem:[#allocation4 + $0x8] sm:$0xff]
      %v3565 = vld [vmem:[#allocation4 + $0x10] sm:$0xff]
      %v3566 = vld [vmem:[#allocation4 + $0x18] sm:$0xff]
      %v3567 = vld [vmem:[#allocation4 + $0x20] sm:$0xff]
      %v3568 = vld [vmem:[#allocation4 + $0x28] sm:$0xff]
      %v3569 = vld [vmem:[#allocation4 + $0x30] sm:$0xff]
      %v3570 = vld [vmem:[#allocation4 + $0x38] sm:$0xff]
      %v3571 = vld [vmem:[#allocation4 + $0x40] sm:$0xff]
      %v3572 = vld [vmem:[#allocation4 + $0x48] sm:$0xff]
      %3583 = vrot.lane.b32.xlu0 %v3563, 58
      %v3584 = vpop.permute.xlu0 %3583
      %3585 = vrot.lane.b32.xlu0 %v3564, 58
      %v3586 = vpop.permute.xlu0 %3585
      %3587 = vrot.lane.b32.xlu0 %v3565, 58
      %v3588 = vpop.permute.xlu0 %3587
      %3589 = vrot.lane.b32.xlu0 %v3566, 58
      %v3590 = vpop.permute.xlu0 %3589
      %3591 = vrot.lane.b32.xlu0 %v3567, 58
      %v3592 = vpop.permute.xlu0 %3591
      %3593 = vrot.lane.b32.xlu0 %v3568, 58
      %v3594 = vpop.permute.xlu0 %3593
      %3595 = vrot.lane.b32.xlu0 %v3569, 58
      %v3596 = vpop.permute.xlu0 %3595
      %3597 = vrot.lane.b32.xlu0 %v3570, 58
      %v3598 = vpop.permute.xlu0 %3597
      %3599 = vrot.lane.b32.xlu0 %v3571, 58
      %v3600 = vpop.permute.xlu0 %3599
      %3601 = vrot.lane.b32.xlu0 %v3572, 58
      %v3602 = vpop.permute.xlu0 %3601
      %v3603 = vsel %vm2400, %v3584, %v3586
      %v3604 = vsel %vm2400, %v3586, %v3588
      %v3605 = vsel %vm2400, %v3588, %v3590
      %v3606 = vsel %vm2400, %v3590, %v3592
      %v3607 = vsel %vm2400, %v3592, %v3594
      %v3608 = vsel %vm2400, %v3594, %v3596
      %v3609 = vsel %vm2400, %v3596, %v3598
      %v3610 = vsel %vm2400, %v3598, %v3600
      %v3611 = vsel %vm2400, %v3600, %v3602
      %3622 = vst [vmem:[#allocation3 + $0x280] sm:$0xff] %v3603
      %3623 = vst [vmem:[#allocation3 + $0x288] sm:$0xff] %v3604
      %3624 = vst [vmem:[#allocation3 + $0x290] sm:$0xff] %v3605
      %3625 = vst [vmem:[#allocation3 + $0x298] sm:$0xff] %v3606
      %3626 = vst [vmem:[#allocation3 + $0x2a0] sm:$0xff] %v3607
      %3627 = vst [vmem:[#allocation3 + $0x2a8] sm:$0xff] %v3608
      %3628 = vst [vmem:[#allocation3 + $0x2b0] sm:$0xff] %v3609
      %3629 = vst [vmem:[#allocation3 + $0x2b8] sm:$0xff] %v3610
      %3630 = vst [vmem:[#allocation3 + $0x2c0] sm:$0xff] %v3611
      %3631 = vst.msk [vmem:[#allocation3 + $0x2c8] sm:$0xff] %vm2018, %v3602
      %v3632 = vld [vmem:[%s5] sm:$0xff]
      %v3633 = vld [vmem:[%s5 + $0x8] sm:$0xff]
      %v3634 = vld [vmem:[#allocation3] sm:$0xff]
      %v3635 = vld [vmem:[#allocation3 + $0x8] sm:$0xff]
      %v3636 = vld [vmem:[#allocation3 + $0x10] sm:$0xff]
      %v3637 = vld [vmem:[#allocation3 + $0x18] sm:$0xff]
      %v3638 = vld [vmem:[#allocation3 + $0x20] sm:$0xff]
      %v3639 = vld [vmem:[#allocation3 + $0x28] sm:$0xff]
      %v3640 = vld [vmem:[#allocation3 + $0x30] sm:$0xff]
      %v3641 = vld [vmem:[#allocation3 + $0x38] sm:$0xff]
      %v3642 = vld [vmem:[#allocation3 + $0x40] sm:$0xff]
      %v3643 = vld [vmem:[#allocation3 + $0x48] sm:$0xff]
      %v3644 = vld [vmem:[#allocation3 + $0x50] sm:$0xff]
      %v3645 = vld [vmem:[#allocation3 + $0x58] sm:$0xff]
      %v3646 = vld [vmem:[#allocation3 + $0x60] sm:$0xff]
      %v3647 = vld [vmem:[#allocation3 + $0x68] sm:$0xff]
      %v3648 = vld [vmem:[#allocation3 + $0x70] sm:$0xff]
      %v3649 = vld [vmem:[#allocation3 + $0x78] sm:$0xff]
      %v3650 = vld [vmem:[#allocation3 + $0x80] sm:$0xff]
      %v3651 = vld [vmem:[#allocation3 + $0x88] sm:$0xff]
      %v3652 = vld [vmem:[#allocation3 + $0x90] sm:$0xff]
      %v3653 = vld [vmem:[#allocation3 + $0x98] sm:$0xff]
      %v3654 = vld [vmem:[#allocation3 + $0xa0] sm:$0xff]
      %v3655 = vld [vmem:[#allocation3 + $0xa8] sm:$0xff]
      %v3656 = vld [vmem:[#allocation3 + $0xb0] sm:$0xff]
      %v3657 = vld [vmem:[#allocation3 + $0xb8] sm:$0xff]
      %v3658 = vld [vmem:[#allocation3 + $0xc0] sm:$0xff]
      %v3659 = vld [vmem:[#allocation3 + $0xc8] sm:$0xff]
      %v3660 = vld [vmem:[#allocation3 + $0xd0] sm:$0xff]
      %v3661 = vld [vmem:[#allocation3 + $0xd8] sm:$0xff]
      %v3662 = vld [vmem:[#allocation3 + $0xe0] sm:$0xff]
      %v3663 = vld [vmem:[#allocation3 + $0xe8] sm:$0xff]
      %v3664 = vld [vmem:[#allocation3 + $0xf0] sm:$0xff]
      %v3665 = vld [vmem:[#allocation3 + $0xf8] sm:$0xff]
      %v3666 = vld [vmem:[#allocation3 + $0x100] sm:$0xff]
      %v3667 = vld [vmem:[#allocation3 + $0x108] sm:$0xff]
      %v3668 = vld [vmem:[#allocation3 + $0x110] sm:$0xff]
      %v3669 = vld [vmem:[#allocation3 + $0x118] sm:$0xff]
      %v3670 = vld [vmem:[#allocation3 + $0x120] sm:$0xff]
      %v3671 = vld [vmem:[#allocation3 + $0x128] sm:$0xff]
      %v3672 = vld [vmem:[#allocation3 + $0x130] sm:$0xff]
      %v3673 = vld [vmem:[#allocation3 + $0x138] sm:$0xff]
      %v3674 = vld [vmem:[#allocation3 + $0x140] sm:$0xff]
      %v3675 = vld [vmem:[#allocation3 + $0x148] sm:$0xff]
      %v3676 = vld [vmem:[#allocation3 + $0x150] sm:$0xff]
      %v3677 = vld [vmem:[#allocation3 + $0x158] sm:$0xff]
      %v3678 = vld [vmem:[#allocation3 + $0x160] sm:$0xff]
      %v3679 = vld [vmem:[#allocation3 + $0x168] sm:$0xff]
      %v3680 = vld [vmem:[#allocation3 + $0x170] sm:$0xff]
      %v3681 = vld [vmem:[#allocation3 + $0x178] sm:$0xff]
      %v3682 = vld [vmem:[#allocation3 + $0x180] sm:$0xff]
      %v3683 = vld [vmem:[#allocation3 + $0x188] sm:$0xff]
      %v3684 = vld [vmem:[#allocation3 + $0x190] sm:$0xff]
      %v3685 = vld [vmem:[#allocation3 + $0x198] sm:$0xff]
      %v3686 = vld [vmem:[#allocation3 + $0x1a0] sm:$0xff]
      %v3687 = vld [vmem:[#allocation3 + $0x1a8] sm:$0xff]
      %v3688 = vld [vmem:[#allocation3 + $0x1b0] sm:$0xff]
      %v3689 = vld [vmem:[#allocation3 + $0x1b8] sm:$0xff]
      %v3690 = vld [vmem:[#allocation3 + $0x1c0] sm:$0xff]
      %v3691 = vld [vmem:[#allocation3 + $0x1c8] sm:$0xff]
      %v3692 = vld [vmem:[#allocation3 + $0x1d0] sm:$0xff]
      %v3693 = vld [vmem:[#allocation3 + $0x1d8] sm:$0xff]
      %v3694 = vld [vmem:[#allocation3 + $0x1e0] sm:$0xff]
      %v3695 = vld [vmem:[#allocation3 + $0x1e8] sm:$0xff]
      %v3696 = vld [vmem:[#allocation3 + $0x1f0] sm:$0xff]
      %v3697 = vld [vmem:[#allocation3 + $0x1f8] sm:$0xff]
      %v3698 = vld [vmem:[#allocation3 + $0x200] sm:$0xff]
      %v3699 = vld [vmem:[#allocation3 + $0x208] sm:$0xff]
      %v3700 = vld [vmem:[#allocation3 + $0x210] sm:$0xff]
      %v3701 = vld [vmem:[#allocation3 + $0x218] sm:$0xff]
      %v3702 = vld [vmem:[#allocation3 + $0x220] sm:$0xff]
      %v3703 = vld [vmem:[#allocation3 + $0x228] sm:$0xff]
      %v3704 = vld [vmem:[#allocation3 + $0x230] sm:$0xff]
      %v3705 = vld [vmem:[#allocation3 + $0x238] sm:$0xff]
      %v3706 = vld [vmem:[#allocation3 + $0x240] sm:$0xff]
      %v3707 = vld [vmem:[#allocation3 + $0x248] sm:$0xff]
      %v3708 = vld [vmem:[#allocation3 + $0x250] sm:$0xff]
      %v3709 = vld [vmem:[#allocation3 + $0x258] sm:$0xff]
      %v3710 = vld [vmem:[#allocation3 + $0x260] sm:$0xff]
      %v3711 = vld [vmem:[#allocation3 + $0x268] sm:$0xff]
      %v3712 = vld [vmem:[#allocation3 + $0x270] sm:$0xff]
      %v3713 = vld [vmem:[#allocation3 + $0x278] sm:$0xff]
      %v3714 = vld [vmem:[#allocation3 + $0x280] sm:$0xff]
      %v3715 = vld [vmem:[#allocation3 + $0x288] sm:$0xff]
      %v3716 = vld [vmem:[#allocation3 + $0x290] sm:$0xff]
      %v3717 = vld [vmem:[#allocation3 + $0x298] sm:$0xff]
      %v3718 = vld [vmem:[#allocation3 + $0x2a0] sm:$0xff]
      %v3719 = vld [vmem:[#allocation3 + $0x2a8] sm:$0xff]
      %v3720 = vld [vmem:[#allocation3 + $0x2b0] sm:$0xff]
      %v3721 = vld [vmem:[#allocation3 + $0x2b8] sm:$0xff]
      %v3722 = vld [vmem:[#allocation3 + $0x2c0] sm:$0xff]
      %v3723 = vld [vmem:[#allocation3 + $0x2c8] sm:$0xff]
      %v3724 = vld [vmem:[%s6] sm:$0xff]
      %v3725 = vld [vmem:[%s6 + $0x8] sm:$0xff]
      %3727 = vset.pattern.permute.xlu0 0
      %3728 = vperm.xlu0 %3727, %v3724
      %v3729 = vpop.permute.xlu0 %3728
      %3732 = vset.pattern.permute.xlu0 0
      %3733 = vperm.xlu0 %3732, %v3725
      %v3734 = vpop.permute.xlu0 %3733
      %v3737 = vsel %vm2534, %v3632, 0
      %v3740 = vsel %vm2534, %v3633, 0
      %3742 = vmatprep.subr.mxu0 0.0
      %3743 = vmatpush1.msra.mxu0 0.0
      %3744 = vmatprep.subr.mxu0 0.0
      %3745 = vmatpush1.msra.mxu0 0.0
      %3746 = vmatprep.subr.mxu0 0.0
      %3747 = vmatpush1.msra.mxu0 0.0
      %3748 = vmatprep.subr.mxu0 0.0
      %3749 = vmatpush1.msra.mxu0 0.0
      %3750 = vmatprep.subr.mxu0 0.0
      %3751 = vmatpush1.msra.mxu0 0.0
      %3752 = vmatprep.subr.mxu0 0.0
      %3753 = vmatpush1.msra.mxu0 0.0
      %3754 = vmatprep.subr.mxu0 0.0
      %3755 = vmatpush1.msra.mxu0 0.0
      %3756 = vmatprep.subr.mxu0 %v3715
      %3757 = vmatpush1.msra.mxu0 %v3714
      %3758 = vmatprep.subr.mxu0 %v3705
      %3759 = vmatpush1.msra.mxu0 %v3704
      %3760 = vmatprep.subr.mxu0 %v3695
      %3761 = vmatpush1.msra.mxu0 %v3694
      %3762 = vmatprep.subr.mxu0 %v3685
      %3763 = vmatpush1.msra.mxu0 %v3684
      %3764 = vmatprep.subr.mxu0 %v3675
      %3765 = vmatpush1.msra.mxu0 %v3674
      %3766 = vmatprep.subr.mxu0 %v3665
      %3767 = vmatpush1.msra.mxu0 %v3664
      %3768 = vmatprep.subr.mxu0 %v3655
      %3769 = vmatpush1.msra.mxu0 %v3654
      %3770 = vmatprep.subr.mxu0 %v3645
      %3771 = vmatpush1.msra.mxu0 %v3644
      %3772 = vmatprep.subr.mxu0 %v3635
      %3773 = vmatpush1.msra.mxu0 %v3634
      %3774 = vmatprep.subr.mxu0 0.0
      %3775 = vmatpush2.msra.mxu0 0.0
      %3776 = vmatprep.subr.mxu0 0.0
      %3777 = vmatpush2.msra.mxu0 0.0
      %3778 = vmatprep.subr.mxu0 0.0
      %3779 = vmatpush2.msra.mxu0 0.0
      %3780 = vmatprep.subr.mxu0 0.0
      %3781 = vmatpush2.msra.mxu0 0.0
      %3782 = vmatprep.subr.mxu0 0.0
      %3783 = vmatpush2.msra.mxu0 0.0
      %3784 = vmatprep.subr.mxu0 0.0
      %3785 = vmatpush2.msra.mxu0 0.0
      %3786 = vmatprep.subr.mxu0 0.0
      %3787 = vmatpush2.msra.mxu0 0.0
      %3788 = vmatprep.subr.mxu0 0.0
      %3789 = vmatpush2.msra.mxu0 0.0
      %3790 = vmatprep.subr.mxu0 0.0
      %3791 = vmatpush2.msra.mxu0 0.0
      %3792 = vmatprep.subr.mxu0 0.0
      %3793 = vmatpush2.msra.mxu0 0.0
      %3794 = vmatprep.subr.mxu0 0.0
      %3795 = vmatpush2.msra.mxu0 0.0
      %3796 = vmatprep.subr.mxu0 0.0
      %3797 = vmatpush2.msra.mxu0 0.0
      %3798 = vmatprep.subr.mxu0 0.0
      %3799 = vmatpush2.msra.mxu0 0.0
      %3800 = vmatprep.subr.mxu0 0.0
      %3801 = vmatpush2.msra.mxu0 0.0
      %3802 = vmatprep.subr.mxu0 0.0
      %3803 = vmatpush2.msra.mxu0 0.0
      %3804 = vmatprep.subr.mxu0 0.0
      %3805 = vmatpush2.msra.mxu0 0.0
      %3806 = vmatprep.mubr.f32.mxu0 0.0
      %3807 = vmatmul.mubr.f32.gmra.mxu0 %v3737
      %v3808 = vpop.f32.mrf.mxu0
      %v3809 = vadd.f32 %v3729, %v3808
      %v3810 = vpop.f32.mrf.mxu0
      %v3811 = vadd.f32 %v3729, %v3810
      %3812 = vmatprep.mubr.f32.mxu0 0.0
      %3813 = vmatmul.mubr.f32.gmra.mxu0 %v3740
      %v3814 = vpop.f32.mrf.mxu0
      %v3815 = vadd.f32 %v3734, %v3814
      %v3816 = vpop.f32.mrf.mxu0
      %v3817 = vadd.f32 %v3734, %v3816
      %3818 = vdwg.mxu0
      %3819 = vmatprep.subr.mxu0 0.0
      %3820 = vmatpush1.msra.mxu0 0.0
      %3821 = vmatprep.subr.mxu0 0.0
      %3822 = vmatpush1.msra.mxu0 0.0
      %3823 = vmatprep.subr.mxu0 0.0
      %3824 = vmatpush1.msra.mxu0 0.0
      %3825 = vmatprep.subr.mxu0 0.0
      %3826 = vmatpush1.msra.mxu0 0.0
      %3827 = vmatprep.subr.mxu0 0.0
      %3828 = vmatpush1.msra.mxu0 0.0
      %3829 = vmatprep.subr.mxu0 0.0
      %3830 = vmatpush1.msra.mxu0 0.0
      %3831 = vmatprep.subr.mxu0 0.0
      %3832 = vmatpush1.msra.mxu0 0.0
      %3833 = vmatprep.subr.mxu0 %v3717
      %3834 = vmatpush1.msra.mxu0 %v3716
      %3835 = vmatprep.subr.mxu0 %v3707
      %3836 = vmatpush1.msra.mxu0 %v3706
      %3837 = vmatprep.subr.mxu0 %v3697
      %3838 = vmatpush1.msra.mxu0 %v3696
      %3839 = vmatprep.subr.mxu0 %v3687
      %3840 = vmatpush1.msra.mxu0 %v3686
      %3841 = vmatprep.subr.mxu0 %v3677
      %3842 = vmatpush1.msra.mxu0 %v3676
      %3843 = vmatprep.subr.mxu0 %v3667
      %3844 = vmatpush1.msra.mxu0 %v3666
      %3845 = vmatprep.subr.mxu0 %v3657
      %3846 = vmatpush1.msra.mxu0 %v3656
      %3847 = vmatprep.subr.mxu0 %v3647
      %3848 = vmatpush1.msra.mxu0 %v3646
      %3849 = vmatprep.subr.mxu0 %v3637
      %3850 = vmatpush1.msra.mxu0 %v3636
      %3851 = vmatprep.subr.mxu0 0.0
      %3852 = vmatpush2.msra.mxu0 0.0
      %3853 = vmatprep.subr.mxu0 0.0
      %3854 = vmatpush2.msra.mxu0 0.0
      %3855 = vmatprep.subr.mxu0 0.0
      %3856 = vmatpush2.msra.mxu0 0.0
      %3857 = vmatprep.subr.mxu0 0.0
      %3858 = vmatpush2.msra.mxu0 0.0
      %3859 = vmatprep.subr.mxu0 0.0
      %3860 = vmatpush2.msra.mxu0 0.0
      %3861 = vmatprep.subr.mxu0 0.0
      %3862 = vmatpush2.msra.mxu0 0.0
      %3863 = vmatprep.subr.mxu0 0.0
      %3864 = vmatpush2.msra.mxu0 0.0
      %3865 = vmatprep.subr.mxu0 0.0
      %3866 = vmatpush2.msra.mxu0 0.0
      %3867 = vmatprep.subr.mxu0 0.0
      %3868 = vmatpush2.msra.mxu0 0.0
      %3869 = vmatprep.subr.mxu0 0.0
      %3870 = vmatpush2.msra.mxu0 0.0
      %3871 = vmatprep.subr.mxu0 0.0
      %3872 = vmatpush2.msra.mxu0 0.0
      %3873 = vmatprep.subr.mxu0 0.0
      %3874 = vmatpush2.msra.mxu0 0.0
      %3875 = vmatprep.subr.mxu0 0.0
      %3876 = vmatpush2.msra.mxu0 0.0
      %3877 = vmatprep.subr.mxu0 0.0
      %3878 = vmatpush2.msra.mxu0 0.0
      %3879 = vmatprep.subr.mxu0 0.0
      %3880 = vmatpush2.msra.mxu0 0.0
      %3881 = vmatprep.subr.mxu0 0.0
      %3882 = vmatpush2.msra.mxu0 0.0
      %3883 = vmatprep.mubr.f32.mxu0 0.0
      %3884 = vmatmul.mubr.f32.gmra.mxu0 %v3737
      %v3885 = vpop.f32.mrf.mxu0
      %v3886 = vadd.f32 %v3729, %v3885
      %v3887 = vpop.f32.mrf.mxu0
      %v3888 = vadd.f32 %v3729, %v3887
      %3889 = vmatprep.mubr.f32.mxu0 0.0
      %3890 = vmatmul.mubr.f32.gmra.mxu0 %v3740
      %v3891 = vpop.f32.mrf.mxu0
      %v3892 = vadd.f32 %v3734, %v3891
      %v3893 = vpop.f32.mrf.mxu0
      %v3894 = vadd.f32 %v3734, %v3893
      %3895 = vdwg.mxu0
      %3896 = vmatprep.subr.mxu0 0.0
      %3897 = vmatpush1.msra.mxu0 0.0
      %3898 = vmatprep.subr.mxu0 0.0
      %3899 = vmatpush1.msra.mxu0 0.0
      %3900 = vmatprep.subr.mxu0 0.0
      %3901 = vmatpush1.msra.mxu0 0.0
      %3902 = vmatprep.subr.mxu0 0.0
      %3903 = vmatpush1.msra.mxu0 0.0
      %3904 = vmatprep.subr.mxu0 0.0
      %3905 = vmatpush1.msra.mxu0 0.0
      %3906 = vmatprep.subr.mxu0 0.0
      %3907 = vmatpush1.msra.mxu0 0.0
      %3908 = vmatprep.subr.mxu0 0.0
      %3909 = vmatpush1.msra.mxu0 0.0
      %3910 = vmatprep.subr.mxu0 %v3719
      %3911 = vmatpush1.msra.mxu0 %v3718
      %3912 = vmatprep.subr.mxu0 %v3709
      %3913 = vmatpush1.msra.mxu0 %v3708
      %3914 = vmatprep.subr.mxu0 %v3699
      %3915 = vmatpush1.msra.mxu0 %v3698
      %3916 = vmatprep.subr.mxu0 %v3689
      %3917 = vmatpush1.msra.mxu0 %v3688
      %3918 = vmatprep.subr.mxu0 %v3679
      %3919 = vmatpush1.msra.mxu0 %v3678
      %3920 = vmatprep.subr.mxu0 %v3669
      %3921 = vmatpush1.msra.mxu0 %v3668
      %3922 = vmatprep.subr.mxu0 %v3659
      %3923 = vmatpush1.msra.mxu0 %v3658
      %3924 = vmatprep.subr.mxu0 %v3649
      %3925 = vmatpush1.msra.mxu0 %v3648
      %3926 = vmatprep.subr.mxu0 %v3639
      %3927 = vmatpush1.msra.mxu0 %v3638
      %3928 = vmatprep.subr.mxu0 0.0
      %3929 = vmatpush2.msra.mxu0 0.0
      %3930 = vmatprep.subr.mxu0 0.0
      %3931 = vmatpush2.msra.mxu0 0.0
      %3932 = vmatprep.subr.mxu0 0.0
      %3933 = vmatpush2.msra.mxu0 0.0
      %3934 = vmatprep.subr.mxu0 0.0
      %3935 = vmatpush2.msra.mxu0 0.0
      %3936 = vmatprep.subr.mxu0 0.0
      %3937 = vmatpush2.msra.mxu0 0.0
      %3938 = vmatprep.subr.mxu0 0.0
      %3939 = vmatpush2.msra.mxu0 0.0
      %3940 = vmatprep.subr.mxu0 0.0
      %3941 = vmatpush2.msra.mxu0 0.0
      %3942 = vmatprep.subr.mxu0 0.0
      %3943 = vmatpush2.msra.mxu0 0.0
      %3944 = vmatprep.subr.mxu0 0.0
      %3945 = vmatpush2.msra.mxu0 0.0
      %3946 = vmatprep.subr.mxu0 0.0
      %3947 = vmatpush2.msra.mxu0 0.0
      %3948 = vmatprep.subr.mxu0 0.0
      %3949 = vmatpush2.msra.mxu0 0.0
      %3950 = vmatprep.subr.mxu0 0.0
      %3951 = vmatpush2.msra.mxu0 0.0
      %3952 = vmatprep.subr.mxu0 0.0
      %3953 = vmatpush2.msra.mxu0 0.0
      %3954 = vmatprep.subr.mxu0 0.0
      %3955 = vmatpush2.msra.mxu0 0.0
      %3956 = vmatprep.subr.mxu0 0.0
      %3957 = vmatpush2.msra.mxu0 0.0
      %3958 = vmatprep.subr.mxu0 0.0
      %3959 = vmatpush2.msra.mxu0 0.0
      %3960 = vmatprep.mubr.f32.mxu0 0.0
      %3961 = vmatmul.mubr.f32.gmra.mxu0 %v3737
      %v3962 = vpop.f32.mrf.mxu0
      %v3963 = vadd.f32 %v3729, %v3962
      %v3964 = vpop.f32.mrf.mxu0
      %v3965 = vadd.f32 %v3729, %v3964
      %3966 = vmatprep.mubr.f32.mxu0 0.0
      %3967 = vmatmul.mubr.f32.gmra.mxu0 %v3740
      %v3968 = vpop.f32.mrf.mxu0
      %v3969 = vadd.f32 %v3734, %v3968
      %v3970 = vpop.f32.mrf.mxu0
      %v3971 = vadd.f32 %v3734, %v3970
      %3972 = vdwg.mxu0
      %3973 = vmatprep.subr.mxu0 0.0
      %3974 = vmatpush1.msra.mxu0 0.0
      %3975 = vmatprep.subr.mxu0 0.0
      %3976 = vmatpush1.msra.mxu0 0.0
      %3977 = vmatprep.subr.mxu0 0.0
      %3978 = vmatpush1.msra.mxu0 0.0
      %3979 = vmatprep.subr.mxu0 0.0
      %3980 = vmatpush1.msra.mxu0 0.0
      %3981 = vmatprep.subr.mxu0 0.0
      %3982 = vmatpush1.msra.mxu0 0.0
      %3983 = vmatprep.subr.mxu0 0.0
      %3984 = vmatpush1.msra.mxu0 0.0
      %3985 = vmatprep.subr.mxu0 0.0
      %3986 = vmatpush1.msra.mxu0 0.0
      %3987 = vmatprep.subr.mxu0 %v3721
      %3988 = vmatpush1.msra.mxu0 %v3720
      %3989 = vmatprep.subr.mxu0 %v3711
      %3990 = vmatpush1.msra.mxu0 %v3710
      %3991 = vmatprep.subr.mxu0 %v3701
      %3992 = vmatpush1.msra.mxu0 %v3700
      %3993 = vmatprep.subr.mxu0 %v3691
      %3994 = vmatpush1.msra.mxu0 %v3690
      %3995 = vmatprep.subr.mxu0 %v3681
      %3996 = vmatpush1.msra.mxu0 %v3680
      %3997 = vmatprep.subr.mxu0 %v3671
      %3998 = vmatpush1.msra.mxu0 %v3670
      %3999 = vmatprep.subr.mxu0 %v3661
      %4000 = vmatpush1.msra.mxu0 %v3660
      %4001 = vmatprep.subr.mxu0 %v3651
      %4002 = vmatpush1.msra.mxu0 %v3650
      %4003 = vmatprep.subr.mxu0 %v3641
      %4004 = vmatpush1.msra.mxu0 %v3640
      %4005 = vmatprep.subr.mxu0 0.0
      %4006 = vmatpush2.msra.mxu0 0.0
      %4007 = vmatprep.subr.mxu0 0.0
      %4008 = vmatpush2.msra.mxu0 0.0
      %4009 = vmatprep.subr.mxu0 0.0
      %4010 = vmatpush2.msra.mxu0 0.0
      %4011 = vmatprep.subr.mxu0 0.0
      %4012 = vmatpush2.msra.mxu0 0.0
      %4013 = vmatprep.subr.mxu0 0.0
      %4014 = vmatpush2.msra.mxu0 0.0
      %4015 = vmatprep.subr.mxu0 0.0
      %4016 = vmatpush2.msra.mxu0 0.0
      %4017 = vmatprep.subr.mxu0 0.0
      %4018 = vmatpush2.msra.mxu0 0.0
      %4019 = vmatprep.subr.mxu0 0.0
      %4020 = vmatpush2.msra.mxu0 0.0
      %4021 = vmatprep.subr.mxu0 0.0
      %4022 = vmatpush2.msra.mxu0 0.0
      %4023 = vmatprep.subr.mxu0 0.0
      %4024 = vmatpush2.msra.mxu0 0.0
      %4025 = vmatprep.subr.mxu0 0.0
      %4026 = vmatpush2.msra.mxu0 0.0
      %4027 = vmatprep.subr.mxu0 0.0
      %4028 = vmatpush2.msra.mxu0 0.0
      %4029 = vmatprep.subr.mxu0 0.0
      %4030 = vmatpush2.msra.mxu0 0.0
      %4031 = vmatprep.subr.mxu0 0.0
      %4032 = vmatpush2.msra.mxu0 0.0
      %4033 = vmatprep.subr.mxu0 0.0
      %4034 = vmatpush2.msra.mxu0 0.0
      %4035 = vmatprep.subr.mxu0 0.0
      %4036 = vmatpush2.msra.mxu0 0.0
      %4037 = vmatprep.mubr.f32.mxu0 0.0
      %4038 = vmatmul.mubr.f32.gmra.mxu0 %v3737
      %v4039 = vpop.f32.mrf.mxu0
      %v4040 = vadd.f32 %v3729, %v4039
      %v4041 = vpop.f32.mrf.mxu0
      %v4042 = vadd.f32 %v3729, %v4041
      %4043 = vmatprep.mubr.f32.mxu0 0.0
      %4044 = vmatmul.mubr.f32.gmra.mxu0 %v3740
      %v4045 = vpop.f32.mrf.mxu0
      %v4046 = vadd.f32 %v3734, %v4045
      %v4047 = vpop.f32.mrf.mxu0
      %v4048 = vadd.f32 %v3734, %v4047
      %4049 = vdwg.mxu0
      %4050 = vmatprep.subr.mxu0 0.0
      %4051 = vmatpush1.msra.mxu0 0.0
      %4052 = vmatprep.subr.mxu0 0.0
      %4053 = vmatpush1.msra.mxu0 0.0
      %4054 = vmatprep.subr.mxu0 0.0
      %4055 = vmatpush1.msra.mxu0 0.0
      %4056 = vmatprep.subr.mxu0 0.0
      %4057 = vmatpush1.msra.mxu0 0.0
      %4058 = vmatprep.subr.mxu0 0.0
      %4059 = vmatpush1.msra.mxu0 0.0
      %4060 = vmatprep.subr.mxu0 0.0
      %4061 = vmatpush1.msra.mxu0 0.0
      %4062 = vmatprep.subr.mxu0 0.0
      %4063 = vmatpush1.msra.mxu0 0.0
      %4064 = vmatprep.subr.mxu0 %v3723
      %4065 = vmatpush1.msra.mxu0 %v3722
      %4066 = vmatprep.subr.mxu0 %v3713
      %4067 = vmatpush1.msra.mxu0 %v3712
      %4068 = vmatprep.subr.mxu0 %v3703
      %4069 = vmatpush1.msra.mxu0 %v3702
      %4070 = vmatprep.subr.mxu0 %v3693
      %4071 = vmatpush1.msra.mxu0 %v3692
      %4072 = vmatprep.subr.mxu0 %v3683
      %4073 = vmatpush1.msra.mxu0 %v3682
      %4074 = vmatprep.subr.mxu0 %v3673
      %4075 = vmatpush1.msra.mxu0 %v3672
      %4076 = vmatprep.subr.mxu0 %v3663
      %4077 = vmatpush1.msra.mxu0 %v3662
      %4078 = vmatprep.subr.mxu0 %v3653
      %4079 = vmatpush1.msra.mxu0 %v3652
      %4080 = vmatprep.subr.mxu0 %v3643
      %4081 = vmatpush1.msra.mxu0 %v3642
      %4082 = vmatprep.subr.mxu0 0.0
      %4083 = vmatpush2.msra.mxu0 0.0
      %4084 = vmatprep.subr.mxu0 0.0
      %4085 = vmatpush2.msra.mxu0 0.0
      %4086 = vmatprep.subr.mxu0 0.0
      %4087 = vmatpush2.msra.mxu0 0.0
      %4088 = vmatprep.subr.mxu0 0.0
      %4089 = vmatpush2.msra.mxu0 0.0
      %4090 = vmatprep.subr.mxu0 0.0
      %4091 = vmatpush2.msra.mxu0 0.0
      %4092 = vmatprep.subr.mxu0 0.0
      %4093 = vmatpush2.msra.mxu0 0.0
      %4094 = vmatprep.subr.mxu0 0.0
      %4095 = vmatpush2.msra.mxu0 0.0
      %4096 = vmatprep.subr.mxu0 0.0
      %4097 = vmatpush2.msra.mxu0 0.0
      %4098 = vmatprep.subr.mxu0 0.0
      %4099 = vmatpush2.msra.mxu0 0.0
      %4100 = vmatprep.subr.mxu0 0.0
      %4101 = vmatpush2.msra.mxu0 0.0
      %4102 = vmatprep.subr.mxu0 0.0
      %4103 = vmatpush2.msra.mxu0 0.0
      %4104 = vmatprep.subr.mxu0 0.0
      %4105 = vmatpush2.msra.mxu0 0.0
      %4106 = vmatprep.subr.mxu0 0.0
      %4107 = vmatpush2.msra.mxu0 0.0
      %4108 = vmatprep.subr.mxu0 0.0
      %4109 = vmatpush2.msra.mxu0 0.0
      %4110 = vmatprep.subr.mxu0 0.0
      %4111 = vmatpush2.msra.mxu0 0.0
      %4112 = vmatprep.subr.mxu0 0.0
      %4113 = vmatpush2.msra.mxu0 0.0
      %4114 = vmatprep.mubr.f32.mxu0 0.0
      %4115 = vmatmul.mubr.f32.gmra.mxu0 %v3737
      %v4116 = vpop.f32.mrf.mxu0
      %v4117 = vadd.f32 %v3729, %v4116
      %v4118 = vpop.f32.mrf.mxu0
      %v4119 = vadd.f32 %v3729, %v4118
      %4120 = vmatprep.mubr.f32.mxu0 0.0
      %4121 = vmatmul.mubr.f32.gmra.mxu0 %v3740
      %v4122 = vpop.f32.mrf.mxu0
      %v4123 = vadd.f32 %v3734, %v4122
      %v4124 = vpop.f32.mrf.mxu0
      %v4125 = vadd.f32 %v3734, %v4124
      %4126 = vdwg.mxu0
      %v4127 = vxor.u32 %v3815, 2147483648
      %v4128 = vxor.u32 %v3817, 2147483648
      %v4129 = vxor.u32 %v3892, 2147483648
      %v4130 = vxor.u32 %v3894, 2147483648
      %v4131 = vxor.u32 %v3969, 2147483648
      %v4132 = vxor.u32 %v3971, 2147483648
      %v4133 = vxor.u32 %v4046, 2147483648
      %v4134 = vxor.u32 %v4048, 2147483648
      %v4135 = vxor.u32 %v4123, 2147483648
      %v4136 = vxor.u32 %v4125, 2147483648
      %v4137 = vmul.f32 %v4127, 1.442695
      %v4138 = vpow.pop %v4137
      %v4139 = vmul.f32 %v4128, 1.442695
      %v4140 = vpow.pop %v4139
      %v4141 = vmul.f32 %v4129, 1.442695
      %v4142 = vpow.pop %v4141
      %v4143 = vmul.f32 %v4130, 1.442695
      %v4144 = vpow.pop %v4143
      %v4145 = vmul.f32 %v4131, 1.442695
      %v4146 = vpow.pop %v4145
      %v4147 = vmul.f32 %v4132, 1.442695
      %v4148 = vpow.pop %v4147
      %v4149 = vmul.f32 %v4133, 1.442695
      %v4150 = vpow.pop %v4149
      %v4151 = vmul.f32 %v4134, 1.442695
      %v4152 = vpow.pop %v4151
      %v4153 = vmul.f32 %v4135, 1.442695
      %v4154 = vpow.pop %v4153
      %v4155 = vmul.f32 %v4136, 1.442695
      %v4156 = vpow.pop %v4155
      %v4157 = vadd.f32 %v4138, 1.0
      %v4158 = vadd.f32 %v4140, 1.0
      %v4159 = vadd.f32 %v4142, 1.0
      %v4160 = vadd.f32 %v4144, 1.0
      %v4161 = vadd.f32 %v4146, 1.0
      %v4162 = vadd.f32 %v4148, 1.0
      %v4163 = vadd.f32 %v4150, 1.0
      %v4164 = vadd.f32 %v4152, 1.0
      %v4165 = vadd.f32 %v4154, 1.0
      %v4166 = vadd.f32 %v4156, 1.0
      %v4167 = vrcp.pop %v4157
      %v4168 = vmul.f32 1.0, %v4167
      %v4169 = vrcp.pop %v4158
      %v4170 = vmul.f32 1.0, %v4169
      %v4171 = vrcp.pop %v4159
      %v4172 = vmul.f32 1.0, %v4171
      %v4173 = vrcp.pop %v4160
      %v4174 = vmul.f32 1.0, %v4173
      %v4175 = vrcp.pop %v4161
      %v4176 = vmul.f32 1.0, %v4175
      %v4177 = vrcp.pop %v4162
      %v4178 = vmul.f32 1.0, %v4177
      %v4179 = vrcp.pop %v4163
      %v4180 = vmul.f32 1.0, %v4179
      %v4181 = vrcp.pop %v4164
      %v4182 = vmul.f32 1.0, %v4181
      %v4183 = vrcp.pop %v4165
      %v4184 = vmul.f32 1.0, %v4183
      %v4185 = vrcp.pop %v4166
      %v4186 = vmul.f32 1.0, %v4185
      %v4187 = vmul.f32 %v3809, %v4168
      %v4188 = vmul.f32 %v3811, %v4170
      %v4189 = vmul.f32 %v3886, %v4172
      %v4190 = vmul.f32 %v3888, %v4174
      %v4191 = vmul.f32 %v3963, %v4176
      %v4192 = vmul.f32 %v3965, %v4178
      %v4193 = vmul.f32 %v4040, %v4180
      %v4194 = vmul.f32 %v4042, %v4182
      %v4195 = vmul.f32 %v4117, %v4184
      %v4196 = vmul.f32 %v4119, %v4186
      %v4197 = vadd.f32 %v4187, %v2614
      %v4198 = vadd.f32 %v4188, %v2616
      %v4199 = vadd.f32 %v4189, %v2691
      %v4200 = vadd.f32 %v4190, %v2693
      %v4201 = vadd.f32 %v4191, %v2768
      %v4202 = vadd.f32 %v4192, %v2770
      %v4203 = vadd.f32 %v4193, %v2845
      %v4204 = vadd.f32 %v4194, %v2847
      %v4205 = vadd.f32 %v4195, %v2922
      %v4206 = vadd.f32 %v4196, %v2924
      %v4207 = vmax.f32 %v4197, 0.0
      %v4208 = vmax.f32 %v4198, 0.0
      %v4209 = vmax.f32 %v4199, 0.0
      %v4210 = vmax.f32 %v4200, 0.0
      %v4211 = vmax.f32 %v4201, 0.0
      %v4212 = vmax.f32 %v4202, 0.0
      %v4213 = vmax.f32 %v4203, 0.0
      %v4214 = vmax.f32 %v4204, 0.0
      %v4215 = vmax.f32 %v4205, 0.0
      %v4216 = vmax.f32 %v4206, 0.0
      %v4217 = vxor.u32 %v4207, 2147483648
      %v4218 = vxor.u32 %v4208, 2147483648
      %v4219 = vxor.u32 %v4209, 2147483648
      %v4220 = vxor.u32 %v4210, 2147483648
      %v4221 = vxor.u32 %v4211, 2147483648
      %v4222 = vxor.u32 %v4212, 2147483648
      %v4223 = vxor.u32 %v4213, 2147483648
      %v4224 = vxor.u32 %v4214, 2147483648
      %v4225 = vxor.u32 %v4215, 2147483648
      %v4226 = vxor.u32 %v4216, 2147483648
      %v4227 = vmul.f32 %v4217, 1.442695
      %v4228 = vpow.pop %v4227
      %v4229 = vmul.f32 %v4218, 1.442695
      %v4230 = vpow.pop %v4229
      %v4231 = vmul.f32 %v4219, 1.442695
      %v4232 = vpow.pop %v4231
      %v4233 = vmul.f32 %v4220, 1.442695
      %v4234 = vpow.pop %v4233
      %v4235 = vmul.f32 %v4221, 1.442695
      %v4236 = vpow.pop %v4235
      %v4237 = vmul.f32 %v4222, 1.442695
      %v4238 = vpow.pop %v4237
      %v4239 = vmul.f32 %v4223, 1.442695
      %v4240 = vpow.pop %v4239
      %v4241 = vmul.f32 %v4224, 1.442695
      %v4242 = vpow.pop %v4241
      %v4243 = vmul.f32 %v4225, 1.442695
      %v4244 = vpow.pop %v4243
      %v4245 = vmul.f32 %v4226, 1.442695
      %v4246 = vpow.pop %v4245
      %v4247 = vadd.f32 %v4228, 1.0
      %v4248 = vadd.f32 %v4230, 1.0
      %v4249 = vadd.f32 %v4232, 1.0
      %v4250 = vadd.f32 %v4234, 1.0
      %v4251 = vadd.f32 %v4236, 1.0
      %v4252 = vadd.f32 %v4238, 1.0
      %v4253 = vadd.f32 %v4240, 1.0
      %v4254 = vadd.f32 %v4242, 1.0
      %v4255 = vadd.f32 %v4244, 1.0
      %v4256 = vadd.f32 %v4246, 1.0
      %v4257 = vrcp.pop %v4247
      %v4258 = vmul.f32 1.0, %v4257
      %v4259 = vrcp.pop %v4248
      %v4260 = vmul.f32 1.0, %v4259
      %v4261 = vrcp.pop %v4249
      %v4262 = vmul.f32 1.0, %v4261
      %v4263 = vrcp.pop %v4250
      %v4264 = vmul.f32 1.0, %v4263
      %v4265 = vrcp.pop %v4251
      %v4266 = vmul.f32 1.0, %v4265
      %v4267 = vrcp.pop %v4252
      %v4268 = vmul.f32 1.0, %v4267
      %v4269 = vrcp.pop %v4253
      %v4270 = vmul.f32 1.0, %v4269
      %v4271 = vrcp.pop %v4254
      %v4272 = vmul.f32 1.0, %v4271
      %v4273 = vrcp.pop %v4255
      %v4274 = vmul.f32 1.0, %v4273
      %v4275 = vrcp.pop %v4256
      %v4276 = vmul.f32 1.0, %v4275
      %v4287 = vrot.slane %v4207, 4
      %v4288 = vrot.slane %v4208, 4
      %v4289 = vrot.slane %v4209, 4
      %v4290 = vrot.slane %v4210, 4
      %v4291 = vrot.slane %v4211, 4
      %v4292 = vrot.slane %v4212, 4
      %v4293 = vrot.slane %v4213, 4
      %v4294 = vrot.slane %v4214, 4
      %v4295 = vrot.slane %v4215, 4
      %v4296 = vrot.slane %v4216, 4
      %v4307 = vmul.f32 %v4258, %v4287
      %v4308 = vmul.f32 %v4260, %v4288
      %v4309 = vmul.f32 %v4262, %v4289
      %v4310 = vmul.f32 %v4264, %v4290
      %v4311 = vmul.f32 %v4266, %v4291
      %v4312 = vmul.f32 %v4268, %v4292
      %v4313 = vmul.f32 %v4270, %v4293
      %v4314 = vmul.f32 %v4272, %v4294
      %v4315 = vmul.f32 %v4274, %v4295
      %v4316 = vmul.f32 %v4276, %v4296
      %v4317 = vadd.f32 %v4307, %v4287
      %v4318 = vadd.f32 %v4308, %v4288
      %v4319 = vadd.f32 %v4309, %v4289
      %v4320 = vadd.f32 %v4310, %v4290
      %v4321 = vadd.f32 %v4311, %v4291
      %v4322 = vadd.f32 %v4312, %v4292
      %v4323 = vadd.f32 %v4313, %v4293
      %v4324 = vadd.f32 %v4314, %v4294
      %v4325 = vadd.f32 %v4315, %v4295
      %v4326 = vadd.f32 %v4316, %v4296
      %v4337 = vcombine.high %v4317, %v4318
      %v4338 = vcombine.high %v4319, %v4320
      %v4339 = vcombine.high %v4321, %v4322
      %v4340 = vcombine.high %v4323, %v4324
      %v4341 = vcombine.high %v4325, %v4326
      %4347 = vst [vmem:[%s313] sm:$0xff] %v4337
      %4348 = vst [vmem:[%s313 + $0x8] sm:$0xff] %v4338
      %4349 = vst [vmem:[%s313 + $0x10] sm:$0xff] %v4339
      %4350 = vst [vmem:[%s313 + $0x18] sm:$0xff] %v4340
      %vm4351 = vcmask 1043456
      %vm4352 = vcmask 31748
      %vm4353 = vmor %vm4352, %vm4351
      %4354 = vst.msk [vmem:[%s313 + $0x20] sm:$0xff] %vm4353, %v4341
      %v4355 = vcombine.high %v4207, %v4208
      %v4356 = vcombine.high %v4209, %v4210
      %v4357 = vcombine.high %v4211, %v4212
      %v4358 = vcombine.high %v4213, %v4214
      %v4359 = vcombine.high %v4215, %v4216
      %4365 = vst [vmem:[%s318] sm:$0xff] %v4355
      %4366 = vst [vmem:[%s318 + $0x8] sm:$0xff] %v4356
      %4367 = vst [vmem:[%s318 + $0x10] sm:$0xff] %v4357
      %4368 = vst [vmem:[%s318 + $0x18] sm:$0xff] %v4358
      %4369 = vst.msk [vmem:[%s318 + $0x20] sm:$0xff] %vm4353, %v4359
      %p4370 = scmp.lt.s32.totalorder %s20, 1
      %s4371 = scalar_select %p4370, %s20, 1
      %s4372 = smul.addr %s4371, 10
      %s4373 = smul.addr %s4372, 4
      %s4374 = scalar_lea.vmem %s7, %s4373
      %p4375 = scmp.lt.s32.totalorder %s20, 1
      %s4376 = scalar_select %p4375, %s20, 1
      %s4377 = smul.addr %s4376, 10
      %s4378 = smul.addr %s4377, 4
      %s4379 = scalar_lea.vmem %s8, %s4378
      // Predicated region
      $region49: #{edge_attention_forward.3} parent=47 // pred_check
        %p4380 = pneg %p190
      $region50: #{edge_attention_forward.3} parent=47 // pred_check_branch
        %4382 = sbr.rel (%p4380) target = $region52
      $region51: #{edge_attention_forward.3} parent=47 // pred_region
        _
      $region52: #{edge_attention_forward.3} parent=47 // pred_fallthru
        _
      // Predicated region
      $region53: #{edge_attention_forward.3} parent=47 // pred_check
        %p4383 = pneg %p216
      $region54: #{edge_attention_forward.3} parent=47 // pred_check_branch
        %4385 = sbr.rel (%p4383) target = $region56
      $region55: #{edge_attention_forward.3} parent=47 // pred_region
        _
      $region56: #{edge_attention_forward.3} parent=47 // pred_fallthru
        _
    $region48: #{edge_attention_forward.3} parent=5 // pred_fallthru
      _
    %p4386 = scmp.le.s32.totalorder 2, %s15
    // Predicated region
    $region57: #{edge_attention_forward.3} parent=5 // pred_check
      %p4387 = pneg %p4386
    $region58: #{edge_attention_forward.3} parent=5 // pred_check_branch
      %4389 = sbr.rel (%p4387) target = $region60
    $region59: #{edge_attention_forward.3} parent=5 // pred_region
      %s4390 = ssub.s32 %s15, 2
      // Predicated region
      $region61: #{edge_attention_forward.3} parent=59 // pred_check
        %p4391 = pneg %p196
      $region62: #{edge_attention_forward.3} parent=59 // pred_check_branch
        %4393 = sbr.rel (%p4391) target = $region64
      $region63: #{edge_attention_forward.3} parent=59 // pred_region
        %p4394 = scmp.lt.s32.totalorder %s21, 1
        %s4395 = scalar_select %p4394, %s21, 1
        %s4396 = smul.addr %s4395, 10
        %s4397 = smul.addr %s4396, 4
        %s4398 = scalar_lea.vmem %s7, %s4397
      $region64: #{edge_attention_forward.3} parent=59 // pred_fallthru
        _
      // Predicated region
      $region65: #{edge_attention_forward.3} parent=59 // pred_check
        %p4399 = pneg %p222
      $region66: #{edge_attention_forward.3} parent=59 // pred_check_branch
        %4401 = sbr.rel (%p4399) target = $region68
      $region67: #{edge_attention_forward.3} parent=59 // pred_region
        %p4402 = scmp.lt.s32.totalorder %s21, 1
        %s4403 = scalar_select %p4402, %s21, 1
        %s4404 = smul.addr %s4403, 10
        %s4405 = smul.addr %s4404, 4
        %s4406 = scalar_lea.vmem %s8, %s4405
      $region68: #{edge_attention_forward.3} parent=59 // pred_fallthru
        _
    $region60: #{edge_attention_forward.3} parent=5 // pred_fallthru
      _
  $region6: #{edge_attention_forward.3} parent=0 // loop_footer
    %s19 = sadd.s32 1, %s15
  $region7: #{edge_attention_forward.3} parent=0 // loop_footer_branch
    %14 = sbr.rel target = $region3
  $region8: #{edge_attention_forward.3} parent=0 // loop_exit
    _

</llo_original>
